<compile_context>
chip_gen: v7x
topology: tpu7x:2x2x1
jax: 0.10.0
libtpu: 0.0.40
codegen_flags: <defaults>
</compile_context>

<pallas_src>
from functools import partial

import jax
import jax.numpy as jnp
from jax.experimental import pallas as pl
from jax.experimental.pallas import tpu as pltpu


# MXU input dtype (f32 accumulation is kept everywhere).
_MXU_DTYPE = jnp.bfloat16
# Scoped VMEM limit: > default 32 MiB, < v7x physical 64 MiB.
_VMEM_LIMIT_BYTES = 48 * 1024 * 1024
# Rough per-kernel working-set budget used when deciding to fully fuse the MLP.
_FUSED_MLP_BUDGET_BYTES = 24 * 1024 * 1024


def _cparams(*dims):
    return pltpu.CompilerParams(dimension_semantics=dims,
                                vmem_limit_bytes=_VMEM_LIMIT_BYTES)


def _pick_tile(dim, desired, base):
    """Largest multiple of `base` that divides `dim` and is <= desired, else full dim.

    A block dim equal to the full array dim is always legal, so the fallback is safe.
    """
    if dim <= desired:
        return dim
    t = (desired // base) * base
    while t >= base:
        if dim % t == 0:
            return t
        t -= base
    return dim


# ----------------------------------------------------------------------------
# In-kernel elementwise helpers (all f32 math)
# ----------------------------------------------------------------------------

def _erf(x):
    # Abramowitz & Stegun 7.1.26 rational approximation, |err| < 1.5e-7
    # (effectively exact in f32); built from exp + VPU ops only so it is
    # guaranteed to lower in Mosaic.
    a1, a2, a3, a4, a5 = (0.254829592, -0.284496736, 1.421413741,
                          -1.453152027, 1.061405429)
    p = 0.3275911
    s = jnp.where(x >= 0.0, 1.0, -1.0)
    ax = jnp.abs(x)
    t = 1.0 / (1.0 + p * ax)
    poly = ((((a5 * t + a4) * t + a3) * t + a2) * t + a1) * t
    return s * (1.0 - poly * jnp.exp(-ax * ax))


def _gelu(x):
    # exact (erf-based) GELU, matching nn.GELU() defaults
    return 0.5 * x * (1.0 + _erf(x * 0.7071067811865476))


def _softshrink(x, lam):
    return jnp.where(x > lam, x - lam, jnp.where(x < -lam, x + lam, 0.0))


# ----------------------------------------------------------------------------
# LayerNorm over the (h, w) plane, tiled over rows
# ----------------------------------------------------------------------------

def _layernorm_kernel(x_ref, g_ref, b_ref, o_ref, *, eps):
    x = x_ref[...].astype(jnp.float32)
    mean = jnp.mean(x, axis=-1, keepdims=True)
    xc = x - mean
    var = jnp.mean(xc * xc, axis=-1, keepdims=True)
    inv = jax.lax.rsqrt(var + eps)
    o_ref[...] = (xc * inv * g_ref[...] + b_ref[...]).astype(o_ref.dtype)


def layer_norm_hw(x, gamma, beta, eps=1e-6):
    """nn.LayerNorm((h, w), eps) applied to an NCHW tensor."""
    B, C, H, W = x.shape
    D = H * W
    R = B * C
    x2 = x.reshape(R, D)
    g = gamma.reshape(1, D).astype(jnp.float32)
    b = beta.reshape(1, D).astype(jnp.float32)
    tr = _pick_tile(R, 512, 8)
    y = pl.pallas_call(
        partial(_layernorm_kernel, eps=eps),
        grid=(R // tr,),
        in_specs=[pl.BlockSpec((tr, D), lambda i: (i, 0)),
                  pl.BlockSpec((1, D), lambda i: (0, 0)),
                  pl.BlockSpec((1, D), lambda i: (0, 0))],
        out_specs=pl.BlockSpec((tr, D), lambda i: (i, 0)),
        out_shape=jax.ShapeDtypeStruct((R, D), x.dtype),
        compiler_params=_cparams("parallel"),
    )(x2, g, b)
    return y.reshape(B, C, H, W)


# ----------------------------------------------------------------------------
# General tiled matmul with fused epilogue (bias / GELU / residual)
# ----------------------------------------------------------------------------

def _make_matmul_kernel(has_bias, has_residual, activation):
    def kernel(*refs):
        x_ref, w_ref = refs[0], refs[1]
        i = 2
        b_ref = None
        r_ref = None
        if has_bias:
            b_ref = refs[i]
            i += 1
        if has_residual:
            r_ref = refs[i]
            i += 1
        o_ref, acc_ref = refs[i], refs[i + 1]

        @pl.when(pl.program_id(2) == 0)
        def _init():
            acc_ref[...] = jnp.zeros_like(acc_ref)

        acc_ref[...] += jnp.dot(x_ref[...].astype(_MXU_DTYPE), w_ref[...],
                                preferred_element_type=jnp.float32)

        @pl.when(pl.program_id(2) == pl.num_programs(2) - 1)
        def _finalize():
            y = acc_ref[...]
            if has_bias:
                y = y + b_ref[...].astype(jnp.float32)
            if activation == "gelu":
                y = _gelu(y)
            if has_residual:
                y = y + r_ref[...].astype(jnp.float32)
            o_ref[...] = y.astype(o_ref.dtype)

    return kernel


def fused_matmul(x, w, bias=None, residual=None, activation=None,
                 out_dtype=None, tm=256, tn=512, tk=512):
    """y = epilogue(x @ w [+ bias]) [+ residual], tiled over (M, N, K)."""
    M, K = x.shape
    _, N = w.shape
    out_dtype = out_dtype or x.dtype
    btm = _pick_tile(M, tm, 8)
    btn = _pick_tile(N, tn, 128)
    btk = _pick_tile(K, tk, 128)

    in_specs = [pl.BlockSpec((btm, btk), lambda i, j, k: (i, k)),
                pl.BlockSpec((btk, btn), lambda i, j, k: (k, j))]
    args = [x, w.astype(_MXU_DTYPE)]
    if bias is not None:
        in_specs.append(pl.BlockSpec((1, btn), lambda i, j, k: (0, j)))
        args.append(bias.reshape(1, N).astype(jnp.float32))
    if residual is not None:
        in_specs.append(pl.BlockSpec((btm, btn), lambda i, j, k: (i, j)))
        args.append(residual)

    return pl.pallas_call(
        _make_matmul_kernel(bias is not None, residual is not None, activation),
        grid=(M // btm, N // btn, K // btk),
        in_specs=in_specs,
        out_specs=pl.BlockSpec((btm, btn), lambda i, j, k: (i, j)),
        out_shape=jax.ShapeDtypeStruct((M, N), out_dtype),
        scratch_shapes=[pltpu.VMEM((btm, btn), jnp.float32)],
        compiler_params=_cparams("parallel", "parallel", "arbitrary"),
    )(*args)


# ----------------------------------------------------------------------------
# Patch embedding: Conv2d(k=stride=patch) + flatten(2) + pos_embed, fused.
# Output is written directly in (B, C, P) layout (no post-kernel transpose).
# ----------------------------------------------------------------------------

def _patch_embed_kernel(x_ref, w_ref, b_ref, pos_ref, o_ref):
    x = x_ref[0].astype(_MXU_DTYPE)                       # (K, tm)
    acc = jnp.dot(w_ref[...], x, preferred_element_type=jnp.float32)  # (C, tm)
    o_ref[0] = (acc + b_ref[...] + pos_ref[...]).astype(o_ref.dtype)


def patch_embed(x, w, b, pos, patch_size):
    """DistributedPatchEmbed + pos_embed.

    x:   (B, Cin, H, W)
    w:   (C, Cin*p0*p1)   conv weight reshaped (out, in*kh*kw)
    b:   (C, 1)
    pos: (C, P)
    returns (B, C, P)
    """
    B, Cin, H, W = x.shape
    p0, p1 = patch_size
    hg, wg = H // p0, W // p1
    P, K, C = hg * wg, Cin * p0 * p1, w.shape[0]

    # patchify (im2col glue): (B, K, P); k = (ci, kh, kw), p = i*wg + j
    xp = x.reshape(B, Cin, hg, p0, wg, p1)
    xp = jnp.transpose(xp, (0, 1, 3, 5, 2, 4)).reshape(B, K, P)

    tm = _pick_tile(P, 512, 128)
    y = pl.pallas_call(
        _patch_embed_kernel,
        grid=(B, P // tm),
        in_specs=[
            pl.BlockSpec((1, K, tm), lambda bi, j: (bi, 0, j)),
            pl.BlockSpec((C, K), lambda bi, j: (0, 0)),
            pl.BlockSpec((C, 1), lambda bi, j: (0, 0)),
            pl.BlockSpec((C, tm), lambda bi, j: (0, j)),
        ],
        out_specs=pl.BlockSpec((1, C, tm), lambda bi, j: (bi, 0, j)),
        out_shape=jax.ShapeDtypeStruct((B, C, P), x.dtype),
        compiler_params=_cparams("parallel", "parallel"),
    )(xp, w.astype(_MXU_DTYPE), b.astype(jnp.float32), pos.astype(jnp.float32))
    return y


# ----------------------------------------------------------------------------
# AFNO2D frequency-domain filter: lane-dense, N-tiled, Gauss 3-mult complex MLP
# ----------------------------------------------------------------------------

def _afno_kernel(xr_ref, xi_ref,
                 w1r_ref, w1d_ref, w1s_ref, b1r_ref, b1i_ref,
                 w2r_ref, w2d_ref, w2s_ref, b2r_ref, b2i_ref,
                 or_ref, oi_ref, *, lam):
    xr = xr_ref[0].astype(jnp.float32)                    # (bs, tn)
    xi = xi_ref[0].astype(jnp.float32)

    def dot(a, b):
        return jnp.dot(a, b, preferred_element_type=jnp.float32)

    # --- layer 1: complex matmul (Gauss / 3 multiplications) + bias + ReLU ---
    k1 = dot(w1r_ref[0], (xr + xi).astype(_MXU_DTYPE))    # wr @ (xr + xi)
    k2 = dot(w1d_ref[0], xr.astype(_MXU_DTYPE))           # (wi - wr) @ xr
    k3 = dot(w1s_ref[0], xi.astype(_MXU_DTYPE))           # (wi + wr) @ xi
    o1r = jnp.maximum(k1 - k3 + b1r_ref[0], 0.0)          # (hid, tn)
    o1i = jnp.maximum(k1 + k2 + b1i_ref[0], 0.0)

    # --- layer 2: complex matmul + bias ---
    k1 = dot(w2r_ref[0], (o1r + o1i).astype(_MXU_DTYPE))
    k2 = dot(w2d_ref[0], o1r.astype(_MXU_DTYPE))
    k3 = dot(w2s_ref[0], o1i.astype(_MXU_DTYPE))
    o2r = k1 - k3 + b2r_ref[0]                            # (bs, tn)
    o2i = k1 + k2 + b2i_ref[0]

    # softshrink applied independently to the real / imaginary parts
    or_ref[0] = _softshrink(o2r, lam).astype(or_ref.dtype)
    oi_ref[0] = _softshrink(o2i, lam).astype(oi_ref.dtype)


def afno2d_filter(x, fp, num_blocks, sparsity_threshold,
                  hard_thresholding_fraction=1.0):
    """DistributedAFNO2D forward (model-parallel size 1).

    NOTE: returns only the filtered signal; the caller adds the filter bias
    (= the filter's own input) together with the block residual in one fused
    XLA add (saves an extra full-tensor HBM round trip).
    Only hard_thresholding_fraction == 1.0 (full spectrum, module default).
    """
    # TODO(synk): rfft2 / irfft2 have no Pallas primitive; computed with jnp.fft.
    assert hard_thresholding_fraction == 1.0
    B, C, H, W = x.shape
    nb = num_blocks
    bs = C // nb
    Wf = W // 2 + 1
    N = B * H * Wf

    xf = jnp.fft.rfft2(x.astype(jnp.float32), axes=(-2, -1), norm="ortho")
    xr, xi = jnp.real(xf), jnp.imag(xf)

    def to_blocks(a):          # (B, C, H, Wf) -> (nb, bs, N)   (N on lanes)
        a = a.reshape(B, nb, bs, H, Wf)
        return jnp.transpose(a, (1, 2, 0, 3, 4)).reshape(nb, bs, N)

    def from_blocks(a):        # (nb, bs, N) -> (B, C, H, Wf)
        a = a.reshape(nb, bs, B, H, Wf)
        return jnp.transpose(a, (2, 0, 1, 3, 4)).reshape(B, C, H, Wf)

    hid = fp["w1_re"].shape[-1]

    # Transposed weights (so the kernel computes W @ X with lane-dense outputs)
    # plus the Gauss-trick weight sums, precomputed at trace time (weights are tiny).
    w1r = jnp.transpose(fp["w1_re"], (0, 2, 1))           # (nb, hid, bs)
    w1i = jnp.transpose(fp["w1_im"], (0, 2, 1))
    w1d = (w1i - w1r).astype(_MXU_DTYPE)
    w1s = (w1i + w1r).astype(_MXU_DTYPE)
    w1r = w1r.astype(_MXU_DTYPE)
    w2r = jnp.transpose(fp["w2_re"], (0, 2, 1))           # (nb, bs, hid)
    w2i = jnp.transpose(fp["w2_im"], (0, 2, 1))
    w2d = (w2i - w2r).astype(_MXU_DTYPE)
    w2s = (w2i + w2r).astype(_MXU_DTYPE)
    w2r = w2r.astype(_MXU_DTYPE)
    b1r = jnp.transpose(fp["b1_re"], (0, 2, 1))           # (nb, hid, 1)
    b1i = jnp.transpose(fp["b1_im"], (0, 2, 1))
    b2r = jnp.transpose(fp["b2_re"], (0, 2, 1))           # (nb, bs, 1)
    b2i = jnp.transpose(fp["b2_im"], (0, 2, 1))

    tn = _pick_tile(N, 1024, 128)
    spec_x = pl.BlockSpec((1, bs, tn), lambda k, j: (k, 0, j))
    spec_w1 = pl.BlockSpec((1, hid, bs), lambda k, j: (k, 0, 0))
    spec_b1 = pl.BlockSpec((1, hid, 1), lambda k, j: (k, 0, 0))
    spec_w2 = pl.BlockSpec((1, bs, hid), lambda k, j: (k, 0, 0))
    spec_b2 = pl.BlockSpec((1, bs, 1), lambda k, j: (k, 0, 0))

    o_r, o_i = pl.pallas_call(
        partial(_afno_kernel, lam=sparsity_threshold),
        grid=(nb, N // tn),
        in_specs=[spec_x, spec_x,
                  spec_w1, spec_w1, spec_w1, spec_b1, spec_b1,
                  spec_w2, spec_w2, spec_w2, spec_b2, spec_b2],
        out_specs=(spec_x, spec_x),
        out_shape=(jax.ShapeDtypeStruct((nb, bs, N), jnp.float32),
                   jax.ShapeDtypeStruct((nb, bs, N), jnp.float32)),
        compiler_params=_cparams("parallel", "parallel"),
    )(to_blocks(xr), to_blocks(xi),
      w1r, w1d, w1s, b1r, b1i, w2r, w2d, w2s, b2r, b2i)

    of = from_blocks(o_r) + 1j * from_blocks(o_i)
    out = jnp.fft.irfft2(of, s=(H, W), axes=(-2, -1), norm="ortho")
    return out.astype(x.dtype)


# ----------------------------------------------------------------------------
# MLP: fully fused matmul -> exact GELU -> matmul -> +residual in one kernel
# (weights resident in VMEM); falls back to two epilogue-fused matmuls if the
# weights would not fit the VMEM budget (v7x safe).
# ----------------------------------------------------------------------------

def _mlp_fused_kernel(x_ref, w1_ref, b1_ref, w2_ref, b2_ref, r_ref, o_ref):
    x = x_ref[...].astype(_MXU_DTYPE)                                  # (tm, C)
    h = jnp.dot(x, w1_ref[...], preferred_element_type=jnp.float32)
    h = _gelu(h + b1_ref[...])                                         # (tm, Ch), f32
    o = jnp.dot(h.astype(_MXU_DTYPE), w2_ref[...],
                preferred_element_type=jnp.float32) + b2_ref[...]
    o_ref[...] = (o + r_ref[...].astype(jnp.float32)).astype(o_ref.dtype)


def mlp_forward(x, residual, mp):
    """DistributedMLP (1x1 conv -> GELU -> 1x1 conv) with the trailing block
    residual add fused into the kernel epilogue."""
    B, C, H, W = x.shape
    M = B * H * W
    Ch = mp["w1"].shape[1]

    x2 = jnp.transpose(x, (0, 2, 3, 1)).reshape(M, C)
    r2 = jnp.transpose(residual, (0, 2, 3, 1)).reshape(M, C)
    w1 = mp["w1"].astype(_MXU_DTYPE)
    w2 = mp["w2"].astype(_MXU_DTYPE)
    b1 = mp["b1"].astype(jnp.float32)
    b2 = mp["b2"].astype(jnp.float32)

    tm = _pick_tile(M, 256, 8)
    # rough working-set estimate: bf16 weights (x2 for buffering) + row tiles
    est = (w1.size + w2.size) * 2 * 2 + tm * (3 * 2 * C + Ch) * 4
    if est <= _FUSED_MLP_BUDGET_BYTES:
        out2 = pl.pallas_call(
            _mlp_fused_kernel,
            grid=(M // tm,),
            in_specs=[
                pl.BlockSpec((tm, C), lambda i: (i, 0)),
                pl.BlockSpec((C, Ch), lambda i: (0, 0)),
                pl.BlockSpec((1, Ch), lambda i: (0, 0)),
                pl.BlockSpec((Ch, C), lambda i: (0, 0)),
                pl.BlockSpec((1, C), lambda i: (0, 0)),
                pl.BlockSpec((tm, C), lambda i: (i, 0)),
            ],
            out_specs=pl.BlockSpec((tm, C), lambda i: (i, 0)),
            out_shape=jax.ShapeDtypeStruct((M, C), x.dtype),
            compiler_params=_cparams("parallel"),
        )(x2, w1, b1, w2, b2, r2)
    else:
        # fallback: two tiled matmuls, GELU fused into the first epilogue and
        # the residual into the second (hidden still avoids extra HBM passes
        # for GELU / residual, just not the hidden write/read itself)
        h = fused_matmul(x2, w1, bias=b1, activation="gelu",
                         out_dtype=jnp.float32)
        out2 = fused_matmul(h, w2, bias=b2, residual=r2, out_dtype=x.dtype)

    return jnp.transpose(out2.reshape(B, H, W, C), (0, 3, 1, 2))


# ----------------------------------------------------------------------------
# Block / network forward (glue around the Pallas kernels)
# ----------------------------------------------------------------------------

def block_forward(x, bp, num_blocks, sparsity_threshold):
    """DistributedBlock (double_skip=True, drop_path=Identity)."""
    residual = x
    xn = layer_norm_hw(x, bp["norm1_w"], bp["norm1_b"], eps=1e-6)
    xf = afno2d_filter(xn, bp["filter"], num_blocks, sparsity_threshold)
    # filter bias (= its own input xn) + first skip, one fused elementwise add
    x = xf + xn + residual
    residual = x
    xn2 = layer_norm_hw(x, bp["norm2_w"], bp["norm2_b"], eps=1e-6)
    # mlp(...) + residual fused in the kernel epilogue
    return mlp_forward(xn2, residual, bp["mlp"])


def afnonet_forward(x, params, cfg):
    B = x.shape[0]
    p0, p1 = cfg["patch_size"]
    h = cfg["inp_shape"][0] // p0
    w = cfg["inp_shape"][1] // p1
    C = cfg["embed_dim"]

    # patch embed (+ conv bias + pos_embed fused); pos_drop = Identity
    xe = patch_embed(x, params["patch_w"], params["patch_b"],
                     params["pos_embed"], cfg["patch_size"])       # (B, C, P)
    xe = xe.reshape(B, C, h, w)

    for bp in params["blocks"]:
        xe = block_forward(xe, bp, cfg["num_blocks"], cfg["sparsity_threshold"])

    # head: Conv2d(embed_dim, out_chans*p0*p1, 1, bias=False) -- no-bias matmul
    x2 = jnp.transpose(xe, (0, 2, 3, 1)).reshape(B * h * w, C)
    y = fused_matmul(x2, params["head_w"])
    M = params["head_w"].shape[1]
    y = jnp.transpose(y.reshape(B, h, w, M), (0, 3, 1, 2))         # (B, M, h, w)

    # un-patchify: same view / permute / view as the reference
    out_chans = cfg["out_chans"]
    yv = y.reshape(B, p0, p1, out_chans, h, w)
    yvt = jnp.transpose(yv, (0, 3, 4, 1, 5, 2))
    return yvt.reshape(B, out_chans, h * p0, w * p1)


# ----------------------------------------------------------------------------
# Deterministic parameter initialization (shapes from the module __init__)
# ----------------------------------------------------------------------------

def init_params(key, cfg):
    p0, p1 = cfg["patch_size"]
    H, W = cfg["inp_shape"]
    h, w = H // p0, W // p1
    P = h * w
    C = cfg["embed_dim"]
    Cin = cfg["in_chans"]
    nb = cfg["num_blocks"]
    bs = C // nb
    hid_blk = bs * 1                         # hidden_size_factor = 1
    mlp_hidden = int(C * cfg["mlp_ratio"])
    out_head = cfg["out_chans"] * p0 * p1
    std, scale = 0.02, 0.02

    keys = jax.random.split(key, 4 + cfg["depth"])
    kpe, kpos, khead = keys[0], keys[1], keys[2]

    params = {
        # Conv2d(Cin, C, kernel=patch, stride=patch): stored (C, Cin*p0*p1)
        "patch_w": std * jax.random.normal(kpe, (C, Cin * p0 * p1), jnp.float32),
        "patch_b": jnp.zeros((C, 1), jnp.float32),
        # pos_embed (1, C, P) stored as (C, P)
        "pos_embed": std * jax.random.normal(kpos, (C, P), jnp.float32),
        # head Conv2d(C, out_chans*p0*p1, 1, bias=False): stored (C, out)
        "head_w": std * jax.random.normal(khead, (C, out_head), jnp.float32),
        "blocks": [],
    }

    for d in range(cfg["depth"]):
        bk = jax.random.split(keys[4 + d], 10)
        params["blocks"].append({
            "norm1_w": jnp.ones((h, w), jnp.float32),
            "norm1_b": jnp.zeros((h, w), jnp.float32),
            "norm2_w": jnp.ones((h, w), jnp.float32),
            "norm2_b": jnp.zeros((h, w), jnp.float32),
            "filter": {   # complex block-diagonal weights, scale 0.02
                "w1_re": scale * jax.random.normal(bk[0], (nb, bs, hid_blk), jnp.float32),
                "w1_im": scale * jax.random.normal(bk[1], (nb, bs, hid_blk), jnp.float32),
                "b1_re": scale * jax.random.normal(bk[2], (nb, 1, hid_blk), jnp.float32),
                "b1_im": scale * jax.random.normal(bk[3], (nb, 1, hid_blk), jnp.float32),
                "w2_re": scale * jax.random.normal(bk[4], (nb, hid_blk, bs), jnp.float32),
                "w2_im": scale * jax.random.normal(bk[5], (nb, hid_blk, bs), jnp.float32),
                "b2_re": scale * jax.random.normal(bk[6], (nb, 1, bs), jnp.float32),
                "b2_im": scale * jax.random.normal(bk[7], (nb, 1, bs), jnp.float32),
            },
            "mlp": {      # 1x1 conv weights stored transposed (in, out)
                "w1": std * jax.random.normal(bk[8], (C, mlp_hidden), jnp.float32),
                "b1": jnp.zeros((1, mlp_hidden), jnp.float32),
                "w2": std * jax.random.normal(bk[9], (mlp_hidden, C), jnp.float32),
                "b2": jnp.zeros((1, C), jnp.float32),
            },
        })
    return params


if __name__ == "__main__":
    cfg = dict(
        inp_shape=(32, 32),
        patch_size=(4, 4),
        in_chans=2,
        out_chans=2,
        embed_dim=32,
        depth=2,
        mlp_ratio=4.0,
        num_blocks=4,
        sparsity_threshold=0.01,
        hard_thresholding_fraction=1.0,
    )
    key = jax.random.PRNGKey(0)
    kparam, kx = jax.random.split(key)
    params = init_params(kparam, cfg)
    x = jax.random.normal(kx, (2, cfg["in_chans"], *cfg["inp_shape"]), jnp.float32)

    fwd = jax.jit(partial(afnonet_forward, cfg=cfg))
    y = fwd(x, params)
    jax.block_until_ready(y)
    assert y.shape == (2, cfg["out_chans"], cfg["inp_shape"][0], cfg["inp_shape"][1]), y.shape
    assert jnp.all(jnp.isfinite(y))
    print("KERNEL_OK")
</pallas_src>

<mosaic_0001>
module attributes {stable_mosaic.version = 11 : i64} {
  func.func @_layernorm_kernel(%arg0: i32, %arg1: memref<64x64xf32, #tpu.memory_space<vmem>>, %arg2: memref<1x64xf32, #tpu.memory_space<vmem>>, %arg3: memref<1x64xf32, #tpu.memory_space<vmem>>, %arg4: memref<64x64xf32, #tpu.memory_space<vmem>>) attributes {dimension_semantics = [#tpu.dimension_semantics<parallel>], iteration_bounds = array<i64: 1>, scalar_prefetch = 0 : i64, scratch_operands = 0 : i64, tpu.core_type = #tpu.core_type<tc>, window_params = [{transform_indices = @transform_0, window_bounds = array<i64: 64, 64>}, {pipeline_mode = #tpu.pipeline_mode<synchronous>, transform_indices = @transform_1, window_bounds = array<i64: 1, 64>}, {pipeline_mode = #tpu.pipeline_mode<synchronous>, transform_indices = @transform_2, window_bounds = array<i64: 1, 64>}, {transform_indices = @transform_3, window_bounds = array<i64: 64, 64>}]} {
    %c0 = arith.constant 0 : index
    %c0_0 = arith.constant 0 : index
    %0 = vector.load %arg1[%c0, %c0_0] : memref<64x64xf32, #tpu.memory_space<vmem>>, vector<64x64xf32>
    %cst = arith.constant dense<0.000000e+00> : vector<64xf32>
    %1 = vector.multi_reduction <add>, %0, %cst [1] : vector<64x64xf32> to vector<64xf32>
    %2 = vector.shape_cast %1 : vector<64xf32> to vector<64x1xf32>
    %cst_1 = arith.constant 6.400000e+01 : f32
    %3 = vector.broadcast %cst_1 : f32 to vector<64x1xf32>
    %4 = arith.divf %2, %3 : vector<64x1xf32>
    %5 = vector.broadcast %4 : vector<64x1xf32> to vector<64x64xf32>
    %6 = arith.subf %0, %5 : vector<64x64xf32>
    %7 = arith.mulf %6, %6 : vector<64x64xf32>
    %cst_2 = arith.constant dense<0.000000e+00> : vector<64xf32>
    %8 = vector.multi_reduction <add>, %7, %cst_2 [1] : vector<64x64xf32> to vector<64xf32>
    %9 = vector.shape_cast %8 : vector<64xf32> to vector<64x1xf32>
    %cst_3 = arith.constant 6.400000e+01 : f32
    %10 = vector.broadcast %cst_3 : f32 to vector<64x1xf32>
    %11 = arith.divf %9, %10 : vector<64x1xf32>
    %cst_4 = arith.constant 9.99999997E-7 : f32
    %12 = vector.broadcast %cst_4 : f32 to vector<64x1xf32>
    %13 = arith.addf %11, %12 : vector<64x1xf32>
    %14 = math.rsqrt %13 : vector<64x1xf32>
    %15 = vector.broadcast %14 : vector<64x1xf32> to vector<64x64xf32>
    %16 = arith.mulf %6, %15 : vector<64x64xf32>
    %c0_5 = arith.constant 0 : index
    %c0_6 = arith.constant 0 : index
    %17 = vector.load %arg2[%c0_5, %c0_6] : memref<1x64xf32, #tpu.memory_space<vmem>>, vector<1x64xf32>
    %18 = vector.broadcast %17 : vector<1x64xf32> to vector<64x64xf32>
    %19 = arith.mulf %16, %18 : vector<64x64xf32>
    %c0_7 = arith.constant 0 : index
    %c0_8 = arith.constant 0 : index
    %20 = vector.load %arg3[%c0_7, %c0_8] : memref<1x64xf32, #tpu.memory_space<vmem>>, vector<1x64xf32>
    %21 = vector.broadcast %20 : vector<1x64xf32> to vector<64x64xf32>
    %22 = arith.addf %19, %21 : vector<64x64xf32>
    %c0_9 = arith.constant 0 : index
    %c0_10 = arith.constant 0 : index
    %23 = vector.load %arg4[%c0_9, %c0_10] : memref<64x64xf32, #tpu.memory_space<vmem>>, vector<64x64xf32>
    tpu.vector_store %arg4[%c0_9, %c0_10], %22 {strides = array<i32>} : memref<64x64xf32, #tpu.memory_space<vmem>>, vector<64x64xf32>,
    return
  }
  func.func @transform_0(%arg0: i32) -> (i32, i32) {
    %c0_i32 = arith.constant 0 : i32
    %c0_i32_0 = arith.constant 0 : i32
    return %arg0, %c0_i32 : i32, i32
  }
  func.func @transform_1(%arg0: i32) -> (i32, i32) {
    %c0_i32 = arith.constant 0 : i32
    %c0_i32_0 = arith.constant 0 : i32
    %c0_i32_1 = arith.constant 0 : i32
    return %c0_i32, %c0_i32_0 : i32, i32
  }
  func.func @transform_2(%arg0: i32) -> (i32, i32) {
    %c0_i32 = arith.constant 0 : i32
    %c0_i32_0 = arith.constant 0 : i32
    %c0_i32_1 = arith.constant 0 : i32
    return %c0_i32, %c0_i32_0 : i32, i32
  }
  func.func @transform_3(%arg0: i32) -> (i32, i32) {
    %c0_i32 = arith.constant 0 : i32
    %c0_i32_0 = arith.constant 0 : i32
    return %arg0, %c0_i32 : i32, i32
  }
}

module attributes {stable_mosaic.version = 11 : i64} {
  func.func @_patch_embed_kernel(%arg0: i32, %arg1: i32, %arg2: memref<1x32x64xf32, #tpu.memory_space<vmem>>, %arg3: memref<32x32xbf16, #tpu.memory_space<vmem>>, %arg4: memref<32x1xf32, #tpu.memory_space<vmem>>, %arg5: memref<32x64xf32, #tpu.memory_space<vmem>>, %arg6: memref<1x32x64xf32, #tpu.memory_space<vmem>>) attributes {dimension_semantics = [#tpu.dimension_semantics<parallel>, #tpu.dimension_semantics<parallel>], iteration_bounds = array<i64: 2, 1>, scalar_prefetch = 0 : i64, scratch_operands = 0 : i64, tpu.core_type = #tpu.core_type<tc>, window_params = [{transform_indices = @transform_0, window_bounds = array<i64: 1, 32, 64>}, {pipeline_mode = #tpu.pipeline_mode<synchronous>, transform_indices = @transform_1, window_bounds = array<i64: 32, 32>}, {pipeline_mode = #tpu.pipeline_mode<synchronous>, transform_indices = @transform_2, window_bounds = array<i64: 32, 1>}, {transform_indices = @transform_3, window_bounds = array<i64: 32, 64>}, {transform_indices = @transform_4, window_bounds = array<i64: 1, 32, 64>}]} {
    %c0 = arith.constant 0 : index
    %c0_0 = arith.constant 0 : index
    %c0_1 = arith.constant 0 : index
    %0 = vector.load %arg2[%c0, %c0_0, %c0_1] : memref<1x32x64xf32, #tpu.memory_space<vmem>>, vector<1x32x64xf32>
    %1 = vector.shape_cast %0 : vector<1x32x64xf32> to vector<32x64xf32>
    %2 = arith.truncf %1 : vector<32x64xf32> to vector<32x64xbf16>
    %c0_2 = arith.constant 0 : index
    %c0_3 = arith.constant 0 : index
    %3 = vector.load %arg3[%c0_2, %c0_3] : memref<32x32xbf16, #tpu.memory_space<vmem>>, vector<32x32xbf16>
    %cst = arith.constant dense<0.000000e+00> : vector<32x64xf32>
    %4 = tpu.matmul %3, %2, %cst {dimension_numbers = #tpu.dot_dimension_numbers<[1], [0], [0], [1], [0, 0, 1, 1], [], []>} : vector<32x32xbf16>, vector<32x64xbf16>, vector<32x64xf32> -> vector<32x64xf32>
    %c0_4 = arith.constant 0 : index
    %c0_5 = arith.constant 0 : index
    %5 = vector.load %arg4[%c0_4, %c0_5] : memref<32x1xf32, #tpu.memory_space<vmem>>, vector<32x1xf32>
    %6 = vector.broadcast %5 : vector<32x1xf32> to vector<32x64xf32>
    %7 = arith.addf %4, %6 : vector<32x64xf32>
    %c0_6 = arith.constant 0 : index
    %c0_7 = arith.constant 0 : index
    %8 = vector.load %arg5[%c0_6, %c0_7] : memref<32x64xf32, #tpu.memory_space<vmem>>, vector<32x64xf32>
    %9 = arith.addf %7, %8 : vector<32x64xf32>
    %c0_8 = arith.constant 0 : index
    %c0_9 = arith.constant 0 : index
    %c0_10 = arith.constant 0 : index
    %10 = vector.load %arg6[%c0_8, %c0_9, %c0_10] : memref<1x32x64xf32, #tpu.memory_space<vmem>>, vector<1x32x64xf32>
    %11 = vector.shape_cast %10 : vector<1x32x64xf32> to vector<32x64xf32>
    %12 = vector.shape_cast %9 : vector<32x64xf32> to vector<1x32x64xf32>
    tpu.vector_store %arg6[%c0_8, %c0_9, %c0_10], %12 {strides = array<i32>} : memref<1x32x64xf32, #tpu.memory_space<vmem>>, vector<1x32x64xf32>,
    return
  }
  func.func @transform_0(%arg0: i32, %arg1: i32) -> (i32, i32, i32) {
    %c0_i32 = arith.constant 0 : i32
    %c0_i32_0 = arith.constant 0 : i32
    return %arg0, %c0_i32, %arg1 : i32, i32, i32
  }
  func.func @transform_1(%arg0: i32, %arg1: i32) -> (i32, i32) {
    %c0_i32 = arith.constant 0 : i32
    %c0_i32_0 = arith.constant 0 : i32
    %c0_i32_1 = arith.constant 0 : i32
    return %c0_i32, %c0_i32_0 : i32, i32
  }
  func.func @transform_2(%arg0: i32, %arg1: i32) -> (i32, i32) {
    %c0_i32 = arith.constant 0 : i32
    %c0_i32_0 = arith.constant 0 : i32
    %c0_i32_1 = arith.constant 0 : i32
    return %c0_i32, %c0_i32_0 : i32, i32
  }
  func.func @transform_3(%arg0: i32, %arg1: i32) -> (i32, i32) {
    %c0_i32 = arith.constant 0 : i32
    %c0_i32_0 = arith.constant 0 : i32
    return %c0_i32, %arg1 : i32, i32
  }
  func.func @transform_4(%arg0: i32, %arg1: i32) -> (i32, i32, i32) {
    %c0_i32 = arith.constant 0 : i32
    %c0_i32_0 = arith.constant 0 : i32
    return %arg0, %c0_i32, %arg1 : i32, i32, i32
  }
}

module attributes {stable_mosaic.version = 11 : i64} {
  func.func @_afno_kernel(%arg0: i32, %arg1: i32, %arg2: memref<1x8x80xf32, #tpu.memory_space<vmem>>, %arg3: memref<1x8x80xf32, #tpu.memory_space<vmem>>, %arg4: memref<1x8x8xbf16, #tpu.memory_space<vmem>>, %arg5: memref<1x8x8xbf16, #tpu.memory_space<vmem>>, %arg6: memref<1x8x8xbf16, #tpu.memory_space<vmem>>, %arg7: memref<1x8x1xf32, #tpu.memory_space<vmem>>, %arg8: memref<1x8x1xf32, #tpu.memory_space<vmem>>, %arg9: memref<1x8x8xbf16, #tpu.memory_space<vmem>>, %arg10: memref<1x8x8xbf16, #tpu.memory_space<vmem>>, %arg11: memref<1x8x8xbf16, #tpu.memory_space<vmem>>, %arg12: memref<1x8x1xf32, #tpu.memory_space<vmem>>, %arg13: memref<1x8x1xf32, #tpu.memory_space<vmem>>, %arg14: memref<1x8x80xf32, #tpu.memory_space<vmem>>, %arg15: memref<1x8x80xf32, #tpu.memory_space<vmem>>) attributes {dimension_semantics = [#tpu.dimension_semantics<parallel>, #tpu.dimension_semantics<parallel>], iteration_bounds = array<i64: 4, 1>, scalar_prefetch = 0 : i64, scratch_operands = 0 : i64, tpu.core_type = #tpu.core_type<tc>, window_params = [{transform_indices = @transform_0, window_bounds = array<i64: 1, 8, 80>}, {transform_indices = @transform_1, window_bounds = array<i64: 1, 8, 80>}, {transform_indices = @transform_2, window_bounds = array<i64: 1, 8, 8>}, {transform_indices = @transform_3, window_bounds = array<i64: 1, 8, 8>}, {transform_indices = @transform_4, window_bounds = array<i64: 1, 8, 8>}, {transform_indices = @transform_5, window_bounds = array<i64: 1, 8, 1>}, {transform_indices = @transform_6, window_bounds = array<i64: 1, 8, 1>}, {transform_indices = @transform_7, window_bounds = array<i64: 1, 8, 8>}, {transform_indices = @transform_8, window_bounds = array<i64: 1, 8, 8>}, {transform_indices = @transform_9, window_bounds = array<i64: 1, 8, 8>}, {transform_indices = @transform_10, window_bounds = array<i64: 1, 8, 1>}, {transform_indices = @transform_11, window_bounds = array<i64: 1, 8, 1>}, {transform_indices = @transform_12, window_bounds = array<i64: 1, 8, 80>}, {transform_indices = @transform_13, window_bounds = array<i64: 1, 8, 80>}]} {
    %c0 = arith.constant 0 : index
    %c0_0 = arith.constant 0 : index
    %c0_1 = arith.constant 0 : index
    %0 = vector.load %arg2[%c0, %c0_0, %c0_1] : memref<1x8x80xf32, #tpu.memory_space<vmem>>, vector<1x8x80xf32>
    %1 = vector.shape_cast %0 : vector<1x8x80xf32> to vector<8x80xf32>
    %c0_2 = arith.constant 0 : index
    %c0_3 = arith.constant 0 : index
    %c0_4 = arith.constant 0 : index
    %2 = vector.load %arg3[%c0_2, %c0_3, %c0_4] : memref<1x8x80xf32, #tpu.memory_space<vmem>>, vector<1x8x80xf32>
    %3 = vector.shape_cast %2 : vector<1x8x80xf32> to vector<8x80xf32>
    %c0_5 = arith.constant 0 : index
    %c0_6 = arith.constant 0 : index
    %c0_7 = arith.constant 0 : index
    %4 = vector.load %arg4[%c0_5, %c0_6, %c0_7] : memref<1x8x8xbf16, #tpu.memory_space<vmem>>, vector<1x8x8xbf16>
    %5 = vector.shape_cast %4 : vector<1x8x8xbf16> to vector<8x8xbf16>
    %6 = arith.addf %1, %3 : vector<8x80xf32>
    %7 = arith.truncf %6 : vector<8x80xf32> to vector<8x80xbf16>
    %cst = arith.constant dense<0.000000e+00> : vector<8x80xf32>
    %8 = tpu.matmul %5, %7, %cst {dimension_numbers = #tpu.dot_dimension_numbers<[1], [0], [0], [1], [0, 0, 1, 1], [], []>} : vector<8x8xbf16>, vector<8x80xbf16>, vector<8x80xf32> -> vector<8x80xf32>
    %c0_8 = arith.constant 0 : index
    %c0_9 = arith.constant 0 : index
    %c0_10 = arith.constant 0 : index
    %9 = vector.load %arg5[%c0_8, %c0_9, %c0_10] : memref<1x8x8xbf16, #tpu.memory_space<vmem>>, vector<1x8x8xbf16>
    %10 = vector.shape_cast %9 : vector<1x8x8xbf16> to vector<8x8xbf16>
    %11 = arith.truncf %1 : vector<8x80xf32> to vector<8x80xbf16>
    %cst_11 = arith.constant dense<0.000000e+00> : vector<8x80xf32>
    %12 = tpu.matmul %10, %11, %cst_11 {dimension_numbers = #tpu.dot_dimension_numbers<[1], [0], [0], [1], [0, 0, 1, 1], [], []>} : vector<8x8xbf16>, vector<8x80xbf16>, vector<8x80xf32> -> vector<8x80xf32>
    %c0_12 = arith.constant 0 : index
    %c0_13 = arith.constant 0 : index
    %c0_14 = arith.constant 0 : index
    %13 = vector.load %arg6[%c0_12, %c0_13, %c0_14] : memref<1x8x8xbf16, #tpu.memory_space<vmem>>, vector<1x8x8xbf16>
    %14 = vector.shape_cast %13 : vector<1x8x8xbf16> to vector<8x8xbf16>
    %15 = arith.truncf %3 : vector<8x80xf32> to vector<8x80xbf16>
    %cst_15 = arith.constant dense<0.000000e+00> : vector<8x80xf32>
    %16 = tpu.matmul %14, %15, %cst_15 {dimension_numbers = #tpu.dot_dimension_numbers<[1], [0], [0], [1], [0, 0, 1, 1], [], []>} : vector<8x8xbf16>, vector<8x80xbf16>, vector<8x80xf32> -> vector<8x80xf32>
    %17 = arith.subf %8, %16 : vector<8x80xf32>
    %c0_16 = arith.constant 0 : index
    %c0_17 = arith.constant 0 : index
    %c0_18 = arith.constant 0 : index
    %18 = vector.load %arg7[%c0_16, %c0_17, %c0_18] : memref<1x8x1xf32, #tpu.memory_space<vmem>>, vector<1x8x1xf32>
    %19 = vector.shape_cast %18 : vector<1x8x1xf32> to vector<8x1xf32>
    %20 = vector.broadcast %19 : vector<8x1xf32> to vector<8x80xf32>
    %21 = arith.addf %17, %20 : vector<8x80xf32>
    %cst_19 = arith.constant 0.000000e+00 : f32
    %22 = vector.broadcast %cst_19 : f32 to vector<8x80xf32>
    %23 = arith.maximumf %21, %22 : vector<8x80xf32>
    %24 = arith.addf %8, %12 : vector<8x80xf32>
    %c0_20 = arith.constant 0 : index
    %c0_21 = arith.constant 0 : index
    %c0_22 = arith.constant 0 : index
    %25 = vector.load %arg8[%c0_20, %c0_21, %c0_22] : memref<1x8x1xf32, #tpu.memory_space<vmem>>, vector<1x8x1xf32>
    %26 = vector.shape_cast %25 : vector<1x8x1xf32> to vector<8x1xf32>
    %27 = vector.broadcast %26 : vector<8x1xf32> to vector<8x80xf32>
    %28 = arith.addf %24, %27 : vector<8x80xf32>
    %cst_23 = arith.constant 0.000000e+00 : f32
    %29 = vector.broadcast %cst_23 : f32 to vector<8x80xf32>
    %30 = arith.maximumf %28, %29 : vector<8x80xf32>
    %c0_24 = arith.constant 0 : index
    %c0_25 = arith.constant 0 : index
    %c0_26 = arith.constant 0 : index
    %31 = vector.load %arg9[%c0_24, %c0_25, %c0_26] : memref<1x8x8xbf16, #tpu.memory_space<vmem>>, vector<1x8x8xbf16>
    %32 = vector.shape_cast %31 : vector<1x8x8xbf16> to vector<8x8xbf16>
    %33 = arith.addf %23, %30 : vector<8x80xf32>
    %34 = arith.truncf %33 : vector<8x80xf32> to vector<8x80xbf16>
    %cst_27 = arith.constant dense<0.000000e+00> : vector<8x80xf32>
    %35 = tpu.matmul %32, %34, %cst_27 {dimension_numbers = #tpu.dot_dimension_numbers<[1], [0], [0], [1], [0, 0, 1, 1], [], []>} : vector<8x8xbf16>, vector<8x80xbf16>, vector<8x80xf32> -> vector<8x80xf32>
    %c0_28 = arith.constant 0 : index
    %c0_29 = arith.constant 0 : index
    %c0_30 = arith.constant 0 : index
    %36 = vector.load %arg10[%c0_28, %c0_29, %c0_30] : memref<1x8x8xbf16, #tpu.memory_space<vmem>>, vector<1x8x8xbf16>
    %37 = vector.shape_cast %36 : vector<1x8x8xbf16> to vector<8x8xbf16>
    %38 = arith.truncf %23 : vector<8x80xf32> to vector<8x80xbf16>
    %cst_31 = arith.constant dense<0.000000e+00> : vector<8x80xf32>
    %39 = tpu.matmul %37, %38, %cst_31 {dimension_numbers = #tpu.dot_dimension_numbers<[1], [0], [0], [1], [0, 0, 1, 1], [], []>} : vector<8x8xbf16>, vector<8x80xbf16>, vector<8x80xf32> -> vector<8x80xf32>
    %c0_32 = arith.constant 0 : index
    %c0_33 = arith.constant 0 : index
    %c0_34 = arith.constant 0 : index
    %40 = vector.load %arg11[%c0_32, %c0_33, %c0_34] : memref<1x8x8xbf16, #tpu.memory_space<vmem>>, vector<1x8x8xbf16>
    %41 = vector.shape_cast %40 : vector<1x8x8xbf16> to vector<8x8xbf16>
    %42 = arith.truncf %30 : vector<8x80xf32> to vector<8x80xbf16>
    %cst_35 = arith.constant dense<0.000000e+00> : vector<8x80xf32>
    %43 = tpu.matmul %41, %42, %cst_35 {dimension_numbers = #tpu.dot_dimension_numbers<[1], [0], [0], [1], [0, 0, 1, 1], [], []>} : vector<8x8xbf16>, vector<8x80xbf16>, vector<8x80xf32> -> vector<8x80xf32>
    %44 = arith.subf %35, %43 : vector<8x80xf32>
    %c0_36 = arith.constant 0 : index
    %c0_37 = arith.constant 0 : index
    %c0_38 = arith.constant 0 : index
    %45 = vector.load %arg12[%c0_36, %c0_37, %c0_38] : memref<1x8x1xf32, #tpu.memory_space<vmem>>, vector<1x8x1xf32>
    %46 = vector.shape_cast %45 : vector<1x8x1xf32> to vector<8x1xf32>
    %47 = vector.broadcast %46 : vector<8x1xf32> to vector<8x80xf32>
    %48 = arith.addf %44, %47 : vector<8x80xf32>
    %49 = arith.addf %35, %39 : vector<8x80xf32>
    %c0_39 = arith.constant 0 : index
    %c0_40 = arith.constant 0 : index
    %c0_41 = arith.constant 0 : index
    %50 = vector.load %arg13[%c0_39, %c0_40, %c0_41] : memref<1x8x1xf32, #tpu.memory_space<vmem>>, vector<1x8x1xf32>
    %51 = vector.shape_cast %50 : vector<1x8x1xf32> to vector<8x1xf32>
    %52 = vector.broadcast %51 : vector<8x1xf32> to vector<8x80xf32>
    %53 = arith.addf %49, %52 : vector<8x80xf32>
    %cst_42 = arith.constant 0.00999999977 : f32
    %54 = vector.broadcast %cst_42 : f32 to vector<8x80xf32>
    %55 = arith.cmpf ogt, %48, %54 : vector<8x80xf32>
    %cst_43 = arith.constant 0.00999999977 : f32
    %56 = vector.broadcast %cst_43 : f32 to vector<8x80xf32>
    %57 = arith.subf %48, %56 : vector<8x80xf32>
    %cst_44 = arith.constant -0.00999999977 : f32
    %58 = vector.broadcast %cst_44 : f32 to vector<8x80xf32>
    %59 = arith.cmpf olt, %48, %58 : vector<8x80xf32>
    %cst_45 = arith.constant 0.00999999977 : f32
    %60 = vector.broadcast %cst_45 : f32 to vector<8x80xf32>
    %61 = arith.addf %48, %60 : vector<8x80xf32>
    %cst_46 = arith.constant 0.000000e+00 : f32
    %62 = vector.broadcast %cst_46 : f32 to vector<8x80xf32>
    %63 = arith.select %59, %61, %62 : vector<8x80xi1>, vector<8x80xf32>
    %64 = arith.select %55, %57, %63 : vector<8x80xi1>, vector<8x80xf32>
    %c0_47 = arith.constant 0 : index
    %c0_48 = arith.constant 0 : index
    %c0_49 = arith.constant 0 : index
    %65 = vector.load %arg14[%c0_47, %c0_48, %c0_49] : memref<1x8x80xf32, #tpu.memory_space<vmem>>, vector<1x8x80xf32>
    %66 = vector.shape_cast %65 : vector<1x8x80xf32> to vector<8x80xf32>
    %67 = vector.shape_cast %64 : vector<8x80xf32> to vector<1x8x80xf32>
    tpu.vector_store %arg14[%c0_47, %c0_48, %c0_49], %67 {strides = array<i32>} : memref<1x8x80xf32, #tpu.memory_space<vmem>>, vector<1x8x80xf32>,
    %cst_50 = arith.constant 0.00999999977 : f32
    %68 = vector.broadcast %cst_50 : f32 to vector<8x80xf32>
    %69 = arith.cmpf ogt, %53, %68 : vector<8x80xf32>
    %cst_51 = arith.constant 0.00999999977 : f32
    %70 = vector.broadcast %cst_51 : f32 to vector<8x80xf32>
    %71 = arith.subf %53, %70 : vector<8x80xf32>
    %cst_52 = arith.constant -0.00999999977 : f32
    %72 = vector.broadcast %cst_52 : f32 to vector<8x80xf32>
    %73 = arith.cmpf olt, %53, %72 : vector<8x80xf32>
    %cst_53 = arith.constant 0.00999999977 : f32
    %74 = vector.broadcast %cst_53 : f32 to vector<8x80xf32>
    %75 = arith.addf %53, %74 : vector<8x80xf32>
    %cst_54 = arith.constant 0.000000e+00 : f32
    %76 = vector.broadcast %cst_54 : f32 to vector<8x80xf32>
    %77 = arith.select %73, %75, %76 : vector<8x80xi1>, vector<8x80xf32>
    %78 = arith.select %69, %71, %77 : vector<8x80xi1>, vector<8x80xf32>
    %c0_55 = arith.constant 0 : index
    %c0_56 = arith.constant 0 : index
    %c0_57 = arith.constant 0 : index
    %79 = vector.load %arg15[%c0_55, %c0_56, %c0_57] : memref<1x8x80xf32, #tpu.memory_space<vmem>>, vector<1x8x80xf32>
    %80 = vector.shape_cast %79 : vector<1x8x80xf32> to vector<8x80xf32>
    %81 = vector.shape_cast %78 : vector<8x80xf32> to vector<1x8x80xf32>
    tpu.vector_store %arg15[%c0_55, %c0_56, %c0_57], %81 {strides = array<i32>} : memref<1x8x80xf32, #tpu.memory_space<vmem>>, vector<1x8x80xf32>,
    return
  }
  func.func @transform_0(%arg0: i32, %arg1: i32) -> (i32, i32, i32) {
    %c0_i32 = arith.constant 0 : i32
    %c0_i32_0 = arith.constant 0 : i32
    return %arg0, %c0_i32, %arg1 : i32, i32, i32
  }
  func.func @transform_1(%arg0: i32, %arg1: i32) -> (i32, i32, i32) {
    %c0_i32 = arith.constant 0 : i32
    %c0_i32_0 = arith.constant 0 : i32
    return %arg0, %c0_i32, %arg1 : i32, i32, i32
  }
  func.func @transform_2(%arg0: i32, %arg1: i32) -> (i32, i32, i32) {
    %c0_i32 = arith.constant 0 : i32
    %c0_i32_0 = arith.constant 0 : i32
    %c0_i32_1 = arith.constant 0 : i32
    return %arg0, %c0_i32, %c0_i32_0 : i32, i32, i32
  }
  func.func @transform_3(%arg0: i32, %arg1: i32) -> (i32, i32, i32) {
    %c0_i32 = arith.constant 0 : i32
    %c0_i32_0 = arith.constant 0 : i32
    %c0_i32_1 = arith.constant 0 : i32
    return %arg0, %c0_i32, %c0_i32_0 : i32, i32, i32
  }
  func.func @transform_4(%arg0: i32, %arg1: i32) -> (i32, i32, i32) {
    %c0_i32 = arith.constant 0 : i32
    %c0_i32_0 = arith.constant 0 : i32
    %c0_i32_1 = arith.constant 0 : i32
    return %arg0, %c0_i32, %c0_i32_0 : i32, i32, i32
  }
  func.func @transform_5(%arg0: i32, %arg1: i32) -> (i32, i32, i32) {
    %c0_i32 = arith.constant 0 : i32
    %c0_i32_0 = arith.constant 0 : i32
    %c0_i32_1 = arith.constant 0 : i32
    return %arg0, %c0_i32, %c0_i32_0 : i32, i32, i32
  }
  func.func @transform_6(%arg0: i32, %arg1: i32) -> (i32, i32, i32) {
    %c0_i32 = arith.constant 0 : i32
    %c0_i32_0 = arith.constant 0 : i32
    %c0_i32_1 = arith.constant 0 : i32
    return %arg0, %c0_i32, %c0_i32_0 : i32, i32, i32
  }
  func.func @transform_7(%arg0: i32, %arg1: i32) -> (i32, i32, i32) {
    %c0_i32 = arith.constant 0 : i32
    %c0_i32_0 = arith.constant 0 : i32
    %c0_i32_1 = arith.constant 0 : i32
    return %arg0, %c0_i32, %c0_i32_0 : i32, i32, i32
  }
  func.func @transform_8(%arg0: i32, %arg1: i32) -> (i32, i32, i32) {
    %c0_i32 = arith.constant 0 : i32
    %c0_i32_0 = arith.constant 0 : i32
    %c0_i32_1 = arith.constant 0 : i32
    return %arg0, %c0_i32, %c0_i32_0 : i32, i32, i32
  }
  func.func @transform_9(%arg0: i32, %arg1: i32) -> (i32, i32, i32) {
    %c0_i32 = arith.constant 0 : i32
    %c0_i32_0 = arith.constant 0 : i32
    %c0_i32_1 = arith.constant 0 : i32
    return %arg0, %c0_i32, %c0_i32_0 : i32, i32, i32
  }
  func.func @transform_10(%arg0: i32, %arg1: i32) -> (i32, i32, i32) {
    %c0_i32 = arith.constant 0 : i32
    %c0_i32_0 = arith.constant 0 : i32
    %c0_i32_1 = arith.constant 0 : i32
    return %arg0, %c0_i32, %c0_i32_0 : i32, i32, i32
  }
  func.func @transform_11(%arg0: i32, %arg1: i32) -> (i32, i32, i32) {
    %c0_i32 = arith.constant 0 : i32
    %c0_i32_0 = arith.constant 0 : i32
    %c0_i32_1 = arith.constant 0 : i32
    return %arg0, %c0_i32, %c0_i32_0 : i32, i32, i32
  }
  func.func @transform_12(%arg0: i32, %arg1: i32) -> (i32, i32, i32) {
    %c0_i32 = arith.constant 0 : i32
    %c0_i32_0 = arith.constant 0 : i32
    return %arg0, %c0_i32, %arg1 : i32, i32, i32
  }
  func.func @transform_13(%arg0: i32, %arg1: i32) -> (i32, i32, i32) {
    %c0_i32 = arith.constant 0 : i32
    %c0_i32_0 = arith.constant 0 : i32
    return %arg0, %c0_i32, %arg1 : i32, i32, i32
  }
}

module attributes {stable_mosaic.version = 11 : i64} {
  func.func @kernel(%arg0: i32, %arg1: i32, %arg2: i32, %arg3: memref<128x32xf32, #tpu.memory_space<vmem>>, %arg4: memref<32x32xbf16, #tpu.memory_space<vmem>>, %arg5: memref<128x32xf32, #tpu.memory_space<vmem>>, %arg6: memref<128x32xf32, #tpu.memory_space<vmem>>) attributes {dimension_semantics = [#tpu.dimension_semantics<parallel>, #tpu.dimension_semantics<parallel>, #tpu.dimension_semantics<arbitrary>], iteration_bounds = array<i64: 1, 1, 1>, scalar_prefetch = 0 : i64, scratch_operands = 1 : i64, tpu.core_type = #tpu.core_type<tc>, window_params = [{transform_indices = @transform_0, window_bounds = array<i64: 128, 32>}, {transform_indices = @transform_1, window_bounds = array<i64: 32, 32>}, {transform_indices = @transform_2, window_bounds = array<i64: 128, 32>}]} {
    %c0_i32 = arith.constant 0 : i32
    %0 = arith.cmpi eq, %arg2, %c0_i32 : i32
    %1 = arith.extui %0 : i1 to i32
    %c0_i32_0 = arith.constant 0 : i32
    %2 = arith.cmpi ne, %1, %c0_i32_0 : i32
    scf.if %2 {
      %cst_10 = arith.constant 0.000000e+00 : f32
      %13 = vector.broadcast %cst_10 : f32 to vector<128x32xf32>
      %c0_11 = arith.constant 0 : index
      %c0_12 = arith.constant 0 : index
      %14 = vector.load %arg6[%c0_11, %c0_12] : memref<128x32xf32, #tpu.memory_space<vmem>>, vector<128x32xf32>
      tpu.vector_store %arg6[%c0_11, %c0_12], %13 {strides = array<i32>} : memref<128x32xf32, #tpu.memory_space<vmem>>, vector<128x32xf32>,
    } else {
    }
    %c0 = arith.constant 0 : index
    %c0_1 = arith.constant 0 : index
    %3 = vector.load %arg6[%c0, %c0_1] : memref<128x32xf32, #tpu.memory_space<vmem>>, vector<128x32xf32>
    %c0_2 = arith.constant 0 : index
    %c0_3 = arith.constant 0 : index
    %4 = vector.load %arg3[%c0_2, %c0_3] : memref<128x32xf32, #tpu.memory_space<vmem>>, vector<128x32xf32>
    %5 = arith.truncf %4 : vector<128x32xf32> to vector<128x32xbf16>
    %c0_4 = arith.constant 0 : index
    %c0_5 = arith.constant 0 : index
    %6 = vector.load %arg4[%c0_4, %c0_5] : memref<32x32xbf16, #tpu.memory_space<vmem>>, vector<32x32xbf16>
    %cst = arith.constant dense<0.000000e+00> : vector<128x32xf32>
    %7 = tpu.matmul %5, %6, %cst {dimension_numbers = #tpu.dot_dimension_numbers<[1], [0], [0], [1], [0, 0, 1, 1], [], []>} : vector<128x32xbf16>, vector<32x32xbf16>, vector<128x32xf32> -> vector<128x32xf32>
    %8 = arith.addf %3, %7 : vector<128x32xf32>
    %c0_6 = arith.constant 0 : index
    %c0_7 = arith.constant 0 : index
    %9 = vector.load %arg6[%c0_6, %c0_7] : memref<128x32xf32, #tpu.memory_space<vmem>>, vector<128x32xf32>
    tpu.vector_store %arg6[%c0_6, %c0_7], %8 {strides = array<i32>} : memref<128x32xf32, #tpu.memory_space<vmem>>, vector<128x32xf32>,
    %c0_i32_8 = arith.constant 0 : i32
    %10 = arith.cmpi eq, %arg2, %c0_i32_8 : i32
    %11 = arith.extui %10 : i1 to i32
    %c0_i32_9 = arith.constant 0 : i32
    %12 = arith.cmpi ne, %11, %c0_i32_9 : i32
    scf.if %12 {
      %c0_10 = arith.constant 0 : index
      %c0_11 = arith.constant 0 : index
      %13 = vector.load %arg6[%c0_10, %c0_11] : memref<128x32xf32, #tpu.memory_space<vmem>>, vector<128x32xf32>
      %c0_12 = arith.constant 0 : index
      %c0_13 = arith.constant 0 : index
      %14 = vector.load %arg5[%c0_12, %c0_13] : memref<128x32xf32, #tpu.memory_space<vmem>>, vector<128x32xf32>
      tpu.vector_store %arg5[%c0_12, %c0_13], %13 {strides = array<i32>} : memref<128x32xf32, #tpu.memory_space<vmem>>, vector<128x32xf32>,
    } else {
    }
    return
  }
  func.func @transform_0(%arg0: i32, %arg1: i32, %arg2: i32) -> (i32, i32) {
    %c0_i32 = arith.constant 0 : i32
    return %arg0, %arg2 : i32, i32
  }
  func.func @transform_1(%arg0: i32, %arg1: i32, %arg2: i32) -> (i32, i32) {
    %c0_i32 = arith.constant 0 : i32
    return %arg2, %arg1 : i32, i32
  }
  func.func @transform_2(%arg0: i32, %arg1: i32, %arg2: i32) -> (i32, i32) {
    %c0_i32 = arith.constant 0 : i32
    return %arg0, %arg1 : i32, i32
  }
}

module attributes {stable_mosaic.version = 11 : i64} {
  func.func @_mlp_fused_kernel(%arg0: i32, %arg1: memref<128x32xf32, #tpu.memory_space<vmem>>, %arg2: memref<32x128xbf16, #tpu.memory_space<vmem>>, %arg3: memref<1x128xf32, #tpu.memory_space<vmem>>, %arg4: memref<128x32xbf16, #tpu.memory_space<vmem>>, %arg5: memref<1x32xf32, #tpu.memory_space<vmem>>, %arg6: memref<128x32xf32, #tpu.memory_space<vmem>>, %arg7: memref<128x32xf32, #tpu.memory_space<vmem>>) attributes {dimension_semantics = [#tpu.dimension_semantics<parallel>], iteration_bounds = array<i64: 1>, scalar_prefetch = 0 : i64, scratch_operands = 0 : i64, tpu.core_type = #tpu.core_type<tc>, window_params = [{transform_indices = @transform_0, window_bounds = array<i64: 128, 32>}, {pipeline_mode = #tpu.pipeline_mode<synchronous>, transform_indices = @transform_1, window_bounds = array<i64: 32, 128>}, {pipeline_mode = #tpu.pipeline_mode<synchronous>, transform_indices = @transform_2, window_bounds = array<i64: 1, 128>}, {pipeline_mode = #tpu.pipeline_mode<synchronous>, transform_indices = @transform_3, window_bounds = array<i64: 128, 32>}, {pipeline_mode = #tpu.pipeline_mode<synchronous>, transform_indices = @transform_4, window_bounds = array<i64: 1, 32>}, {transform_indices = @transform_5, window_bounds = array<i64: 128, 32>}, {transform_indices = @transform_6, window_bounds = array<i64: 128, 32>}]} {
    %c0 = arith.constant 0 : index
    %c0_0 = arith.constant 0 : index
    %0 = vector.load %arg1[%c0, %c0_0] : memref<128x32xf32, #tpu.memory_space<vmem>>, vector<128x32xf32>
    %1 = arith.truncf %0 : vector<128x32xf32> to vector<128x32xbf16>
    %c0_1 = arith.constant 0 : index
    %c0_2 = arith.constant 0 : index
    %2 = vector.load %arg2[%c0_1, %c0_2] : memref<32x128xbf16, #tpu.memory_space<vmem>>, vector<32x128xbf16>
    %cst = arith.constant dense<0.000000e+00> : vector<128x128xf32>
    %3 = tpu.matmul %1, %2, %cst {dimension_numbers = #tpu.dot_dimension_numbers<[1], [0], [0], [1], [0, 0, 1, 1], [], []>} : vector<128x32xbf16>, vector<32x128xbf16>, vector<128x128xf32> -> vector<128x128xf32>
    %c0_3 = arith.constant 0 : index
    %c0_4 = arith.constant 0 : index
    %4 = vector.load %arg3[%c0_3, %c0_4] : memref<1x128xf32, #tpu.memory_space<vmem>>, vector<1x128xf32>
    %5 = vector.broadcast %4 : vector<1x128xf32> to vector<128x128xf32>
    %6 = arith.addf %3, %5 : vector<128x128xf32>
    %cst_5 = arith.constant 5.000000e-01 : f32
    %7 = vector.broadcast %cst_5 : f32 to vector<128x128xf32>
    %8 = arith.mulf %7, %6 : vector<128x128xf32>
    %cst_6 = arith.constant 0.707106769 : f32
    %9 = vector.broadcast %cst_6 : f32 to vector<128x128xf32>
    %10 = arith.mulf %6, %9 : vector<128x128xf32>
    %cst_7 = arith.constant 0.000000e+00 : f32
    %11 = vector.broadcast %cst_7 : f32 to vector<128x128xf32>
    %12 = arith.cmpf oge, %10, %11 : vector<128x128xf32>
    %cst_8 = arith.constant 1.000000e+00 : f32
    %cst_9 = arith.constant -1.000000e+00 : f32
    %13 = vector.broadcast %cst_8 : f32 to vector<128x128xf32>
    %14 = vector.broadcast %cst_9 : f32 to vector<128x128xf32>
    %15 = arith.select %12, %13, %14 : vector<128x128xi1>, vector<128x128xf32>
    %16 = math.absf %10 : vector<128x128xf32>
    %cst_10 = arith.constant 0.327591091 : f32
    %17 = vector.broadcast %cst_10 : f32 to vector<128x128xf32>
    %18 = arith.mulf %17, %16 : vector<128x128xf32>
    %cst_11 = arith.constant 1.000000e+00 : f32
    %19 = vector.broadcast %cst_11 : f32 to vector<128x128xf32>
    %20 = arith.addf %19, %18 : vector<128x128xf32>
    %cst_12 = arith.constant 1.000000e+00 : f32
    %21 = vector.broadcast %cst_12 : f32 to vector<128x128xf32>
    %22 = arith.divf %21, %20 : vector<128x128xf32>
    %cst_13 = arith.constant 1.06140542 : f32
    %23 = vector.broadcast %cst_13 : f32 to vector<128x128xf32>
    %24 = arith.mulf %23, %22 : vector<128x128xf32>
    %cst_14 = arith.constant -1.45315206 : f32
    %25 = vector.broadcast %cst_14 : f32 to vector<128x128xf32>
    %26 = arith.addf %24, %25 : vector<128x128xf32>
    %27 = arith.mulf %26, %22 : vector<128x128xf32>
    %cst_15 = arith.constant 1.42141378 : f32
    %28 = vector.broadcast %cst_15 : f32 to vector<128x128xf32>
    %29 = arith.addf %27, %28 : vector<128x128xf32>
    %30 = arith.mulf %29, %22 : vector<128x128xf32>
    %cst_16 = arith.constant -0.284496725 : f32
    %31 = vector.broadcast %cst_16 : f32 to vector<128x128xf32>
    %32 = arith.addf %30, %31 : vector<128x128xf32>
    %33 = arith.mulf %32, %22 : vector<128x128xf32>
    %cst_17 = arith.constant 0.254829586 : f32
    %34 = vector.broadcast %cst_17 : f32 to vector<128x128xf32>
    %35 = arith.addf %33, %34 : vector<128x128xf32>
    %36 = arith.mulf %35, %22 : vector<128x128xf32>
    %cst_18 = arith.constant 0.000000e+00 : f32
    %37 = vector.broadcast %cst_18 : f32 to vector<128x128xf32>
    %38 = arith.subf %37, %16 : vector<128x128xf32>
    %39 = arith.mulf %38, %16 : vector<128x128xf32>
    %40 = math.exp %39 : vector<128x128xf32>
    %41 = arith.mulf %36, %40 : vector<128x128xf32>
    %cst_19 = arith.constant 1.000000e+00 : f32
    %42 = vector.broadcast %cst_19 : f32 to vector<128x128xf32>
    %43 = arith.subf %42, %41 : vector<128x128xf32>
    %44 = arith.mulf %15, %43 : vector<128x128xf32>
    %cst_20 = arith.constant 1.000000e+00 : f32
    %45 = vector.broadcast %cst_20 : f32 to vector<128x128xf32>
    %46 = arith.addf %45, %44 : vector<128x128xf32>
    %47 = arith.mulf %8, %46 : vector<128x128xf32>
    %48 = arith.truncf %47 : vector<128x128xf32> to vector<128x128xbf16>
    %c0_21 = arith.constant 0 : index
    %c0_22 = arith.constant 0 : index
    %49 = vector.load %arg4[%c0_21, %c0_22] : memref<128x32xbf16, #tpu.memory_space<vmem>>, vector<128x32xbf16>
    %cst_23 = arith.constant dense<0.000000e+00> : vector<128x32xf32>
    %50 = tpu.matmul %48, %49, %cst_23 {dimension_numbers = #tpu.dot_dimension_numbers<[1], [0], [0], [1], [0, 0, 1, 1], [], []>} : vector<128x128xbf16>, vector<128x32xbf16>, vector<128x32xf32> -> vector<128x32xf32>
    %c0_24 = arith.constant 0 : index
    %c0_25 = arith.constant 0 : index
    %51 = vector.load %arg5[%c0_24, %c0_25] : memref<1x32xf32, #tpu.memory_space<vmem>>, vector<1x32xf32>
    %52 = vector.broadcast %51 : vector<1x32xf32> to vector<128x32xf32>
    %53 = arith.addf %50, %52 : vector<128x32xf32>
    %c0_26 = arith.constant 0 : index
    %c0_27 = arith.constant 0 : index
    %54 = vector.load %arg6[%c0_26, %c0_27] : memref<128x32xf32, #tpu.memory_space<vmem>>, vector<128x32xf32>
    %55 = arith.addf %53, %54 : vector<128x32xf32>
    %c0_28 = arith.constant 0 : index
    %c0_29 = arith.constant 0 : index
    %56 = vector.load %arg7[%c0_28, %c0_29] : memref<128x32xf32, #tpu.memory_space<vmem>>, vector<128x32xf32>
    tpu.vector_store %arg7[%c0_28, %c0_29], %55 {strides = array<i32>} : memref<128x32xf32, #tpu.memory_space<vmem>>, vector<128x32xf32>,
    return
  }
  func.func @transform_0(%arg0: i32) -> (i32, i32) {
    %c0_i32 = arith.constant 0 : i32
    %c0_i32_0 = arith.constant 0 : i32
    return %arg0, %c0_i32 : i32, i32
  }
  func.func @transform_1(%arg0: i32) -> (i32, i32) {
    %c0_i32 = arith.constant 0 : i32
    %c0_i32_0 = arith.constant 0 : i32
    %c0_i32_1 = arith.constant 0 : i32
    return %c0_i32, %c0_i32_0 : i32, i32
  }
  func.func @transform_2(%arg0: i32) -> (i32, i32) {
    %c0_i32 = arith.constant 0 : i32
    %c0_i32_0 = arith.constant 0 : i32
    %c0_i32_1 = arith.constant 0 : i32
    return %c0_i32, %c0_i32_0 : i32, i32
  }
  func.func @transform_3(%arg0: i32) -> (i32, i32) {
    %c0_i32 = arith.constant 0 : i32
    %c0_i32_0 = arith.constant 0 : i32
    %c0_i32_1 = arith.constant 0 : i32
    return %c0_i32, %c0_i32_0 : i32, i32
  }
  func.func @transform_4(%arg0: i32) -> (i32, i32) {
    %c0_i32 = arith.constant 0 : i32
    %c0_i32_0 = arith.constant 0 : i32
    %c0_i32_1 = arith.constant 0 : i32
    return %c0_i32, %c0_i32_0 : i32, i32
  }
  func.func @transform_5(%arg0: i32) -> (i32, i32) {
    %c0_i32 = arith.constant 0 : i32
    %c0_i32_0 = arith.constant 0 : i32
    return %arg0, %c0_i32 : i32, i32
  }
  func.func @transform_6(%arg0: i32) -> (i32, i32) {
    %c0_i32 = arith.constant 0 : i32
    %c0_i32_0 = arith.constant 0 : i32
    return %arg0, %c0_i32 : i32, i32
  }
}

</mosaic_0001>

<llo_original>
// kernel: afnonet_forward.10
$region0: #{afnonet_forward.10}
  #allocation0 [shape = 'u32[]', space=smem, size = 0x4, offset = 0x4, fixed_abs, tag = 'smem constant byte address 0x4 - core index']
  #allocation1 [shape = 'u32[144,128]{1,0:T(1,128)}', space=vmem, size = 0x12000, scoped, tag = 'internal scratch']
  %s0 = inlined_call_operand.vmem [shape: f32[2,32,64], index: 0, kind: input, shape index: {}]
  %s1 = inlined_call_operand.vmem [shape: bf16[32,32], index: 1, kind: input, shape index: {}]
  %s2 = inlined_call_operand.vmem [shape: f32[32,1], index: 2, kind: input, shape index: {}]
  %s3 = inlined_call_operand.vmem [shape: f32[32,64], index: 3, kind: input, shape index: {}]
  %s4 = inlined_call_operand.vmem [shape: f32[2,32,64], index: 4, kind: output, shape index: {}]
  %s5 = sld [smem:[#allocation0]]
  $region49: #{afnonet_forward.10} parent=0
    _
  %s7 = ssub.s32 1, %s5
  %s8 = scalar_select 0, %s7, %s5
  loop: start=0, step=1, limit=4
  $region2: #{afnonet_forward.10} parent=0 // loop_pre_header
    _
  $region3: #{afnonet_forward.10} parent=0 // loop_header
    %s10 = sphi 0, %s14
    %p11 = scmp.ge.s32.totalorder %s10, 4
    %s17 = sphi 0, %s29
    %s18 = sphi 0, %s25
    %s19 = sphi 0, %s17
    %s20 = sphi 0, %s18
    %s21 = sphi 0, %s19
    %s22 = sphi 0, %s20
    %s34 = sphi 0, %s36
    %s37 = sphi 0, %s34
    %s38 = sphi 0, %s37
    %s54 = sphi 0, %s38
    %s58 = sphi 0, %s58
    %s60 = sphi 0, %s58
    %s61 = sphi 0, %s60
    %s75 = sphi 0, %s61
    %s79 = sphi 0, %s79
    %s81 = sphi 0, %s79
    %s82 = sphi 0, %s81
    %s96 = sphi 0, %s82
    %s102 = sphi 0, %s104
    %s105 = sphi 0, %s102
    %s106 = sphi 0, %s105
    %s122 = sphi 0, %s106
    %s130 = sphi 0, %s132
    %s133 = sphi 0, %s130
    %s134 = sphi 0, %s133
    %s150 = sphi 0, %s134
  $region4: #{afnonet_forward.10} parent=0 // loop_header_branch
    %13 = sbr.rel (%p11) target = $region8
  $region5: #{afnonet_forward.10} parent=0 // loop_body
    %s15 = ssub.s32 %s10, 1
    %s16 = ssub.s32 %s10, 2
    %s23 = sadd.s32 1, %s18
    %p24 = scmp.ge.s32.totalorder %s23, 1
    %s25 = scalar_select %p24, 0, %s23
    %s26 = sadd.s32 1, %s17
    %s27 = scalar_select %p24, %s26, %s17
    %p28 = scmp.ge.s32.totalorder %s27, 2
    %s29 = scalar_select %p28, 0, %s27
    %s30 = ssub.s32 %s17, %s29
    %s31 = ssub.s32 %s18, %s25
    %s32 = sor.u32 %s30, %s31
    %p33 = scmp.eq.s32.totalorder %s32, 0
    %s35 = sadd.s32 %s34, 1
    %s36 = scalar_select %p33, %s34, %s35
    %p39 = pneg %p33
    %p40 = scmp.eq.s32.totalorder %s10, 1
    %p41 = por %p39, %p40
    %p42 = scmp.ne.s32.totalorder %s34, %s37
    %p43 = scmp.eq.s32.totalorder %s10, 0
    %p44 = por %p42, %p43
    %p45 = scmp.ne.s32.totalorder %s34, %s37
    %p46 = scmp.eq.s32.totalorder %s15, 1
    %p47 = por %p45, %p46
    %p48 = scmp.ne.s32.totalorder %s37, %s38
    %p49 = scmp.eq.s32.totalorder %s15, 0
    %p50 = por %p48, %p49
    %p51 = scmp.ne.s32.totalorder %s37, %s38
    %p52 = scmp.eq.s32.totalorder %s16, 1
    %p53 = por %p51, %p52
    %p55 = scmp.ne.s32.totalorder %s38, %s54
    %p56 = scmp.eq.s32.totalorder %s16, 0
    %p57 = por %p55, %p56
    %s59 = sadd.s32 %s58, 1
    %p62 = scmp.eq.s32.totalorder %s10, 1
    %p63 = scmp.ne.s32.totalorder %s58, %s60
    %p64 = scmp.eq.s32.totalorder %s10, 0
    %p65 = por %p63, %p64
    %p66 = scmp.ne.s32.totalorder %s58, %s60
    %p67 = scmp.eq.s32.totalorder %s15, 1
    %p68 = por %p66, %p67
    %p69 = scmp.ne.s32.totalorder %s60, %s61
    %p70 = scmp.eq.s32.totalorder %s15, 0
    %p71 = por %p69, %p70
    %p72 = scmp.ne.s32.totalorder %s60, %s61
    %p73 = scmp.eq.s32.totalorder %s16, 1
    %p74 = por %p72, %p73
    %p76 = scmp.ne.s32.totalorder %s61, %s75
    %p77 = scmp.eq.s32.totalorder %s16, 0
    %p78 = por %p76, %p77
    %s80 = sadd.s32 %s79, 1
    %p83 = scmp.eq.s32.totalorder %s10, 1
    %p84 = scmp.ne.s32.totalorder %s79, %s81
    %p85 = scmp.eq.s32.totalorder %s10, 0
    %p86 = por %p84, %p85
    %p87 = scmp.ne.s32.totalorder %s79, %s81
    %p88 = scmp.eq.s32.totalorder %s15, 1
    %p89 = por %p87, %p88
    %p90 = scmp.ne.s32.totalorder %s81, %s82
    %p91 = scmp.eq.s32.totalorder %s15, 0
    %p92 = por %p90, %p91
    %p93 = scmp.ne.s32.totalorder %s81, %s82
    %p94 = scmp.eq.s32.totalorder %s16, 1
    %p95 = por %p93, %p94
    %p97 = scmp.ne.s32.totalorder %s82, %s96
    %p98 = scmp.eq.s32.totalorder %s16, 0
    %p99 = por %p97, %p98
    %s100 = ssub.s32 %s18, %s25
    %p101 = scmp.eq.s32.totalorder %s100, 0
    %s103 = sadd.s32 %s102, 1
    %s104 = scalar_select %p101, %s102, %s103
    %p107 = pneg %p101
    %p108 = scmp.eq.s32.totalorder %s10, 1
    %p109 = por %p107, %p108
    %p110 = scmp.ne.s32.totalorder %s102, %s105
    %p111 = scmp.eq.s32.totalorder %s10, 0
    %p112 = por %p110, %p111
    %p113 = scmp.ne.s32.totalorder %s102, %s105
    %p114 = scmp.eq.s32.totalorder %s15, 1
    %p115 = por %p113, %p114
    %p116 = scmp.ne.s32.totalorder %s105, %s106
    %p117 = scmp.eq.s32.totalorder %s15, 0
    %p118 = por %p116, %p117
    %p119 = scmp.ne.s32.totalorder %s105, %s106
    %p120 = scmp.eq.s32.totalorder %s16, 1
    %p121 = por %p119, %p120
    %p123 = scmp.ne.s32.totalorder %s106, %s122
    %p124 = scmp.eq.s32.totalorder %s16, 0
    %p125 = por %p123, %p124
    %s126 = ssub.s32 %s17, %s29
    %s127 = ssub.s32 %s18, %s25
    %s128 = sor.u32 %s126, %s127
    %p129 = scmp.eq.s32.totalorder %s128, 0
    %s131 = sadd.s32 %s130, 1
    %s132 = scalar_select %p129, %s130, %s131
    %p135 = pneg %p129
    %p136 = scmp.eq.s32.totalorder %s10, 1
    %p137 = por %p135, %p136
    %p138 = scmp.ne.s32.totalorder %s130, %s133
    %p139 = scmp.eq.s32.totalorder %s10, 0
    %p140 = por %p138, %p139
    %p141 = scmp.ne.s32.totalorder %s130, %s133
    %p142 = scmp.eq.s32.totalorder %s15, 1
    %p143 = por %p141, %p142
    %p144 = scmp.ne.s32.totalorder %s133, %s134
    %p145 = scmp.eq.s32.totalorder %s15, 0
    %p146 = por %p144, %p145
    %p147 = scmp.ne.s32.totalorder %s133, %s134
    %p148 = scmp.eq.s32.totalorder %s16, 1
    %p149 = por %p147, %p148
    %p151 = scmp.ne.s32.totalorder %s134, %s150
    %p152 = scmp.eq.s32.totalorder %s16, 0
    %p153 = por %p151, %p152
    %p154 = scmp.le.s32.totalorder 1, %s10
    %p155 = scmp.lt.s32.totalorder %s10, 3
    %p156 = pnand %p154, %p155
    %p157 = pneg %p156
    // Predicated region
    $region9: #{afnonet_forward.10} parent=5 // pred_check
      _
    $region10: #{afnonet_forward.10} parent=5 // pred_check_branch
      %159 = sbr.rel (%p156) target = $region12
    $region11: #{afnonet_forward.10} parent=5 // pred_region
      %s160 = ssub.s32 %s10, 1
      // Predicated region
      $region13: #{afnonet_forward.10} parent=11 // pred_check
        %p161 = pneg %p71
      $region14: #{afnonet_forward.10} parent=11 // pred_check_branch
        %163 = sbr.rel (%p161) target = $region16
      $region15: #{afnonet_forward.10} parent=11 // pred_region
        _
      $region16: #{afnonet_forward.10} parent=11 // pred_fallthru
        _
      // Predicated region
      $region17: #{afnonet_forward.10} parent=11 // pred_check
        %p164 = pneg %p92
      $region18: #{afnonet_forward.10} parent=11 // pred_check_branch
        %166 = sbr.rel (%p164) target = $region20
      $region19: #{afnonet_forward.10} parent=11 // pred_region
        _
      $region20: #{afnonet_forward.10} parent=11 // pred_fallthru
        _
      // Predicated region
      $region21: #{afnonet_forward.10} parent=11 // pred_check
        %p167 = pneg %p118
      $region22: #{afnonet_forward.10} parent=11 // pred_check_branch
        %169 = sbr.rel (%p167) target = $region24
      $region23: #{afnonet_forward.10} parent=11 // pred_region
        %p170 = scmp.lt.s32.totalorder %s20, 0
        %s171 = scalar_select %p170, %s20, 0
        %s172 = smul.addr %s171, 8
        %s173 = scalar_lea.vmem %s3, %s172
      $region24: #{afnonet_forward.10} parent=11 // pred_fallthru
        _
    $region12: #{afnonet_forward.10} parent=5 // pred_fallthru
      _
    %p174 = scmp.lt.s32.totalorder %s10, 2
    // Predicated region
    $region25: #{afnonet_forward.10} parent=5 // pred_check
      %p175 = pneg %p174
    $region26: #{afnonet_forward.10} parent=5 // pred_check_branch
      %177 = sbr.rel (%p175) target = $region28
    $region27: #{afnonet_forward.10} parent=5 // pred_region
      // Predicated region
      $region29: #{afnonet_forward.10} parent=27 // pred_check
        %p178 = pneg %p44
      $region30: #{afnonet_forward.10} parent=27 // pred_check_branch
        %180 = sbr.rel (%p178) target = $region32
      $region31: #{afnonet_forward.10} parent=27 // pred_region
        %p181 = scmp.lt.s32.totalorder %s17, 1
        %s182 = scalar_select %p181, %s17, 1
        %p183 = scmp.lt.s32.totalorder %s18, 0
        %s184 = scalar_select %p183, %s18, 0
        %s185 = smul.addr %s182, 4
        %s186 = sadd.s32 %s184, %s185
        %s187 = smul.addr %s186, 8
        %s188 = scalar_lea.vmem %s0, %s187
      $region32: #{afnonet_forward.10} parent=27 // pred_fallthru
        _
    $region28: #{afnonet_forward.10} parent=5 // pred_fallthru
      _
    %p189 = scmp.le.s32.totalorder 1, %s10
    %p190 = scmp.lt.s32.totalorder %s10, 3
    %p191 = pnand %p189, %p190
    %p192 = pneg %p191
    // Predicated region
    $region33: #{afnonet_forward.10} parent=5 // pred_check
      _
    $region34: #{afnonet_forward.10} parent=5 // pred_check_branch
      %194 = sbr.rel (%p191) target = $region36
    $region35: #{afnonet_forward.10} parent=5 // pred_region
      %s195 = ssub.s32 %s10, 1
      %p196 = scmp.lt.s32.totalorder %s19, 1
      %s197 = scalar_select %p196, %s19, 1
      %p198 = scmp.lt.s32.totalorder %s20, 0
      %s199 = scalar_select %p198, %s20, 0
      %s200 = smul.addr %s197, 4
      %s201 = sadd.s32 %s199, %s200
      %s202 = smul.addr %s201, 8
      %s203 = scalar_lea.vmem %s0, %s202
      %p204 = pneg %p50
      %p205 = pneg %p47
      %p206 = pneg %p71
      %p207 = pneg %p68
      %p208 = pneg %p92
      %p209 = pneg %p89
      %p210 = scmp.lt.s32.totalorder %s20, 0
      %s211 = scalar_select %p210, %s20, 0
      %s212 = smul.addr %s211, 8
      %s213 = scalar_lea.vmem %s3, %s212
      %p214 = pneg %p118
      %p215 = pneg %p115
      %p216 = pneg %p146
      %p217 = pneg %p143
      %p218 = scmp.lt.s32.totalorder %s19, 1
      %s219 = scalar_select %p218, %s19, 1
      %p220 = scmp.lt.s32.totalorder %s20, 0
      %s221 = scalar_select %p220, %s20, 0
      %s222 = smul.addr %s219, 4
      %s223 = sadd.s32 %s221, %s222
      %s224 = smul.addr %s223, 8
      %s225 = scalar_lea.vmem %s4, %s224
      %p226 = scmp.lt.s32.totalorder %s19, 1
      %s227 = scalar_select %p226, %s19, 1
      %p228 = scmp.lt.s32.totalorder %s20, 0
      %s229 = scalar_select %p228, %s20, 0
      %s230 = smul.addr %s227, 4
      %s231 = sadd.s32 %s229, %s230
      %s232 = smul.addr %s231, 8
      %s233 = scalar_lea.vmem %s0, %s232
      %p234 = scmp.lt.s32.totalorder %s20, 0
      %s235 = scalar_select %p234, %s20, 0
      %s236 = smul.addr %s235, 8
      %s237 = scalar_lea.vmem %s3, %s236
      %p238 = scmp.lt.s32.totalorder %s19, 1
      %s239 = scalar_select %p238, %s19, 1
      %p240 = scmp.lt.s32.totalorder %s20, 0
      %s241 = scalar_select %p240, %s20, 0
      %s242 = smul.addr %s239, 4
      %s243 = sadd.s32 %s241, %s242
      %s244 = smul.addr %s243, 8
      %s245 = scalar_lea.vmem %s4, %s244
      %v247 = vld [vmem:[%s233] sm:$0xff]
      %v248 = vld [vmem:[%s233 + $0x8] sm:$0xff]
      %v249 = vld [vmem:[%s233 + $0x10] sm:$0xff]
      %v250 = vld [vmem:[%s233 + $0x18] sm:$0xff]
      %v251 = vpack.c.bf16 %v248, %v247
      %v252 = vpack.c.bf16 %v250, %v249
      %v253 = vld [vmem:[%s1] sm:$0xf]
      %v254 = vld [vmem:[%s1 + $0x4] sm:$0xf]
      %v255 = vld [vmem:[%s1 + $0x8] sm:$0xf]
      %v256 = vld [vmem:[%s1 + $0xc] sm:$0xf]
      %v257 = vld [vmem:[%s2] sm:$0xff]
      %v258 = vld [vmem:[%s2 + $0x8] sm:$0xff]
      %v259 = vld [vmem:[%s2 + $0x10] sm:$0xff]
      %v260 = vld [vmem:[%s2 + $0x18] sm:$0xff]
      %262 = vset.pattern.permute.xlu0 0
      %263 = vperm.xlu0 %262, %v257
      %v264 = vpop.permute.xlu0 %263
      %267 = vset.pattern.permute.xlu0 0
      %268 = vperm.xlu0 %267, %v258
      %v269 = vpop.permute.xlu0 %268
      %272 = vset.pattern.permute.xlu0 0
      %273 = vperm.xlu0 %272, %v259
      %v274 = vpop.permute.xlu0 %273
      %277 = vset.pattern.permute.xlu0 0
      %278 = vperm.xlu0 %277, %v260
      %v279 = vpop.permute.xlu0 %278
      %v285 = vunpack.c.l.b16 %v253
      %v286 = vunpack.c.l.b16 %v254
      %v287 = vunpack.c.l.b16 %v255
      %v288 = vunpack.c.l.b16 %v256
      %v289 = vpack.c.b16 %v286, %v285
      %v290 = vpack.c.b16 %v288, %v287
      %vm291 = vcmask 261120
      %v293 = vsel %vm291, %v289, 0
      %v296 = vsel %vm291, %v290, 0
      %298 = vmatprep.subr.bf16.mxu0 0
      %299 = vmatpush1.bf16.msra.mxu0 %v251
      %300 = vmatprep.subr.bf16.mxu0 0
      %301 = vmatpush1.bf16.msra.mxu0 %v252
      %302 = vmatprep.subr.bf16.mxu0 0
      %303 = vmatpush1.bf16.msra.mxu0 0
      %304 = vmatprep.subr.bf16.mxu0 0
      %305 = vmatpush1.bf16.msra.mxu0 0
      %306 = vmatprep.subr.bf16.mxu0 0
      %307 = vmatpush1.bf16.msra.mxu0 0
      %308 = vmatprep.subr.bf16.mxu0 0
      %309 = vmatpush1.bf16.msra.mxu0 0
      %310 = vmatprep.subr.bf16.mxu0 0
      %311 = vmatpush1.bf16.msra.mxu0 0
      %312 = vmatprep.subr.bf16.mxu0 0
      %313 = vmatpush1.bf16.msra.mxu0 0
      %314 = vmatprep.subr.bf16.mxu0 0
      %315 = vmatpush1.bf16.msra.mxu0 0
      %316 = vmatprep.subr.bf16.mxu0 0
      %317 = vmatpush1.bf16.msra.mxu0 0
      %318 = vmatprep.subr.bf16.mxu0 0
      %319 = vmatpush1.bf16.msra.mxu0 0
      %320 = vmatprep.subr.bf16.mxu0 0
      %321 = vmatpush1.bf16.msra.mxu0 0
      %322 = vmatprep.subr.bf16.mxu0 0
      %323 = vmatpush1.bf16.msra.mxu0 0
      %324 = vmatprep.subr.bf16.mxu0 0
      %325 = vmatpush1.bf16.msra.mxu0 0
      %326 = vmatprep.subr.bf16.mxu0 0
      %327 = vmatpush1.bf16.msra.mxu0 0
      %328 = vmatprep.subr.bf16.mxu0 0
      %329 = vmatpush1.bf16.msra.mxu0 0
      %330 = vmatprep.mubr.bf16.mxu0 0
      %331 = vmatmul.mubr.bf16.gmra.mrb[0].mxu0 %v293
      %v332 = vpop.f32.mrb[0].mxu0
      %v333 = vadd.f32 %v264, %v332
      %v334 = vpop.f32.mrb[0].mxu0
      %v335 = vpop.f32.mrb[0].mxu0
      %v336 = vadd.f32 %v269, %v335
      %v337 = vpop.f32.mrb[0].mxu0
      %338 = vmatprep.mubr.bf16.mxu0 0
      %339 = vmatmul.mubr.bf16.gmra.mrb[0].mxu0 %v296
      %v340 = vpop.f32.mrb[0].mxu0
      %v341 = vadd.f32 %v274, %v340
      %v342 = vpop.f32.mrb[0].mxu0
      %v343 = vpop.f32.mrb[0].mxu0
      %v344 = vadd.f32 %v279, %v343
      %v345 = vpop.f32.mrb[0].mxu0
      %346 = vdwg.mxu0
      %v347 = vld [vmem:[%s237] sm:$0xff]
      %v348 = vld [vmem:[%s237 + $0x8] sm:$0xff]
      %v349 = vld [vmem:[%s237 + $0x10] sm:$0xff]
      %v350 = vld [vmem:[%s237 + $0x18] sm:$0xff]
      %v351 = vadd.f32 %v333, %v347
      %v352 = vadd.f32 %v336, %v348
      %v353 = vadd.f32 %v341, %v349
      %v354 = vadd.f32 %v344, %v350
      %vm355 = vcmask 523264
      %356 = vst.msk [vmem:[%s245] sm:$0xff] %vm355, %v351
      %357 = vst.msk [vmem:[%s245 + $0x8] sm:$0xff] %vm355, %v352
      %358 = vst.msk [vmem:[%s245 + $0x10] sm:$0xff] %vm355, %v353
      %359 = vst.msk [vmem:[%s245 + $0x18] sm:$0xff] %vm355, %v354
      %p360 = scmp.lt.s32.totalorder %s19, 1
      %s361 = scalar_select %p360, %s19, 1
      %p362 = scmp.lt.s32.totalorder %s20, 0
      %s363 = scalar_select %p362, %s20, 0
      %s364 = smul.addr %s361, 4
      %s365 = sadd.s32 %s363, %s364
      %s366 = smul.addr %s365, 8
      %s367 = scalar_lea.vmem %s4, %s366
      // Predicated region
      $region37: #{afnonet_forward.10} parent=35 // pred_check
        %p368 = pneg %p143
      $region38: #{afnonet_forward.10} parent=35 // pred_check_branch
        %370 = sbr.rel (%p368) target = $region40
      $region39: #{afnonet_forward.10} parent=35 // pred_region
        _
      $region40: #{afnonet_forward.10} parent=35 // pred_fallthru
        _
    $region36: #{afnonet_forward.10} parent=5 // pred_fallthru
      _
    %p371 = scmp.le.s32.totalorder 2, %s10
    // Predicated region
    $region41: #{afnonet_forward.10} parent=5 // pred_check
      %p372 = pneg %p371
    $region42: #{afnonet_forward.10} parent=5 // pred_check_branch
      %374 = sbr.rel (%p372) target = $region44
    $region43: #{afnonet_forward.10} parent=5 // pred_region
      %s375 = ssub.s32 %s10, 2
      // Predicated region
      $region45: #{afnonet_forward.10} parent=43 // pred_check
        %p376 = pneg %p149
      $region46: #{afnonet_forward.10} parent=43 // pred_check_branch
        %378 = sbr.rel (%p376) target = $region48
      $region47: #{afnonet_forward.10} parent=43 // pred_region
        %p379 = scmp.lt.s32.totalorder %s21, 1
        %s380 = scalar_select %p379, %s21, 1
        %p381 = scmp.lt.s32.totalorder %s22, 0
        %s382 = scalar_select %p381, %s22, 0
        %s383 = smul.addr %s380, 4
        %s384 = sadd.s32 %s382, %s383
        %s385 = smul.addr %s384, 8
        %s386 = scalar_lea.vmem %s4, %s385
      $region48: #{afnonet_forward.10} parent=43 // pred_fallthru
        _
    $region44: #{afnonet_forward.10} parent=5 // pred_fallthru
      _
  $region6: #{afnonet_forward.10} parent=0 // loop_footer
    %s14 = sadd.s32 1, %s10
  $region7: #{afnonet_forward.10} parent=0 // loop_footer_branch
    %9 = sbr.rel target = $region3
  $region8: #{afnonet_forward.10} parent=0 // loop_exit
    _

// kernel: afnonet_forward.11
$region0: #{afnonet_forward.11}
  #allocation0 [shape = 'u32[]', space=smem, size = 0x4, offset = 0x4, fixed_abs, tag = 'smem constant byte address 0x4 - core index']
  #allocation1 [shape = 'u32[144,128]{1,0:T(1,128)}', space=vmem, size = 0x12000, scoped, tag = 'internal scratch']
  %s0 = inlined_call_operand.vmem [shape: f32[64,64], index: 0, kind: input, shape index: {}]
  %s1 = inlined_call_operand.vmem [shape: f32[1,64], index: 1, kind: input, shape index: {}]
  %s2 = inlined_call_operand.vmem [shape: f32[1,64], index: 2, kind: input, shape index: {}]
  %s3 = inlined_call_operand.vmem [shape: f32[64,64], index: 3, kind: output, shape index: {}]
  %s4 = sld [smem:[#allocation0]]
  $region22: #{afnonet_forward.11} parent=0
    _
  %s6 = ssub.s32 1, %s4
  %s7 = scalar_select 0, %s6, %s4
  // Predicated region
  $region2: #{afnonet_forward.11} parent=0 // pred_check
    _
  $region3: #{afnonet_forward.11} parent=0 // pred_check_branch
    %9 = sbr.rel (0) target = $region5
  $region4: #{afnonet_forward.11} parent=0 // pred_region
    _
  $region5: #{afnonet_forward.11} parent=0 // pred_fallthru
    _
  // Predicated region
  $region6: #{afnonet_forward.11} parent=0 // pred_check
    _
  $region7: #{afnonet_forward.11} parent=0 // pred_check_branch
    %11 = sbr.rel (0) target = $region9
  $region8: #{afnonet_forward.11} parent=0 // pred_region
    _
  $region9: #{afnonet_forward.11} parent=0 // pred_fallthru
    _
  // Predicated region
  $region10: #{afnonet_forward.11} parent=0 // pred_check
    _
  $region11: #{afnonet_forward.11} parent=0 // pred_check_branch
    %13 = sbr.rel (0) target = $region13
  $region12: #{afnonet_forward.11} parent=0 // pred_region
    _
  $region13: #{afnonet_forward.11} parent=0 // pred_fallthru
    _
  %v14 = vld [vmem:[%s0] sm:$0xff]
  %v15 = vld [vmem:[%s0 + $0x8] sm:$0xff]
  %v16 = vld [vmem:[%s0 + $0x10] sm:$0xff]
  %v17 = vld [vmem:[%s0 + $0x18] sm:$0xff]
  %v18 = vld [vmem:[%s0 + $0x20] sm:$0xff]
  %v19 = vld [vmem:[%s0 + $0x28] sm:$0xff]
  %v20 = vld [vmem:[%s0 + $0x30] sm:$0xff]
  %v21 = vld [vmem:[%s0 + $0x38] sm:$0xff]
  %vm22 = vcmask 523264
  %v23 = vsel %vm22, %v14, 0.0
  %24 = vadd.xlane.f32.xlu0 %v23
  %v25 = vpop.xlane.xlu0 %24
  %v26 = vsel %vm22, %v15, 0.0
  %27 = vadd.xlane.f32.xlu0 %v26
  %v28 = vpop.xlane.xlu0 %27
  %v29 = vsel %vm22, %v16, 0.0
  %30 = vadd.xlane.f32.xlu0 %v29
  %v31 = vpop.xlane.xlu0 %30
  %v32 = vsel %vm22, %v17, 0.0
  %33 = vadd.xlane.f32.xlu0 %v32
  %v34 = vpop.xlane.xlu0 %33
  %v35 = vsel %vm22, %v18, 0.0
  %36 = vadd.xlane.f32.xlu0 %v35
  %v37 = vpop.xlane.xlu0 %36
  %v38 = vsel %vm22, %v19, 0.0
  %39 = vadd.xlane.f32.xlu0 %v38
  %v40 = vpop.xlane.xlu0 %39
  %v41 = vsel %vm22, %v20, 0.0
  %42 = vadd.xlane.f32.xlu0 %v41
  %v43 = vpop.xlane.xlu0 %42
  %v44 = vsel %vm22, %v21, 0.0
  %45 = vadd.xlane.f32.xlu0 %v44
  %v46 = vpop.xlane.xlu0 %45
  %v47 = vrcp.pop 64.0
  %v48 = vmul.f32 %v25, %v47
  %v49 = vmul.f32 %v28, %v47
  %v50 = vmul.f32 %v31, %v47
  %v51 = vmul.f32 %v34, %v47
  %v52 = vmul.f32 %v37, %v47
  %v53 = vmul.f32 %v40, %v47
  %v54 = vmul.f32 %v43, %v47
  %v55 = vmul.f32 %v46, %v47
  %v56 = vsub.f32 %v14, %v48
  %v57 = vsub.f32 %v15, %v49
  %v58 = vsub.f32 %v16, %v50
  %v59 = vsub.f32 %v17, %v51
  %v60 = vsub.f32 %v18, %v52
  %v61 = vsub.f32 %v19, %v53
  %v62 = vsub.f32 %v20, %v54
  %v63 = vsub.f32 %v21, %v55
  %v64 = vmul.f32 %v56, %v56
  %v65 = vmul.f32 %v57, %v57
  %v66 = vmul.f32 %v58, %v58
  %v67 = vmul.f32 %v59, %v59
  %v68 = vmul.f32 %v60, %v60
  %v69 = vmul.f32 %v61, %v61
  %v70 = vmul.f32 %v62, %v62
  %v71 = vmul.f32 %v63, %v63
  %v72 = vsel %vm22, %v64, 0.0
  %73 = vadd.xlane.f32.xlu0 %v72
  %v74 = vpop.xlane.xlu0 %73
  %v75 = vsel %vm22, %v65, 0.0
  %76 = vadd.xlane.f32.xlu0 %v75
  %v77 = vpop.xlane.xlu0 %76
  %v78 = vsel %vm22, %v66, 0.0
  %79 = vadd.xlane.f32.xlu0 %v78
  %v80 = vpop.xlane.xlu0 %79
  %v81 = vsel %vm22, %v67, 0.0
  %82 = vadd.xlane.f32.xlu0 %v81
  %v83 = vpop.xlane.xlu0 %82
  %v84 = vsel %vm22, %v68, 0.0
  %85 = vadd.xlane.f32.xlu0 %v84
  %v86 = vpop.xlane.xlu0 %85
  %v87 = vsel %vm22, %v69, 0.0
  %88 = vadd.xlane.f32.xlu0 %v87
  %v89 = vpop.xlane.xlu0 %88
  %v90 = vsel %vm22, %v70, 0.0
  %91 = vadd.xlane.f32.xlu0 %v90
  %v92 = vpop.xlane.xlu0 %91
  %v93 = vsel %vm22, %v71, 0.0
  %94 = vadd.xlane.f32.xlu0 %v93
  %v95 = vpop.xlane.xlu0 %94
  %v96 = vmul.f32 %v74, %v47
  %v97 = vmul.f32 %v77, %v47
  %v98 = vmul.f32 %v80, %v47
  %v99 = vmul.f32 %v83, %v47
  %v100 = vmul.f32 %v86, %v47
  %v101 = vmul.f32 %v89, %v47
  %v102 = vmul.f32 %v92, %v47
  %v103 = vmul.f32 %v95, %v47
  %v104 = vadd.f32 %v96, 1e-06
  %v105 = vadd.f32 %v97, 1e-06
  %v106 = vadd.f32 %v98, 1e-06
  %v107 = vadd.f32 %v99, 1e-06
  %v108 = vadd.f32 %v100, 1e-06
  %v109 = vadd.f32 %v101, 1e-06
  %v110 = vadd.f32 %v102, 1e-06
  %v111 = vadd.f32 %v103, 1e-06
  %v112 = vrsqrt.pop %v104
  %v113 = vrsqrt.pop %v105
  %v114 = vrsqrt.pop %v106
  %v115 = vrsqrt.pop %v107
  %v116 = vrsqrt.pop %v108
  %v117 = vrsqrt.pop %v109
  %v118 = vrsqrt.pop %v110
  %v119 = vrsqrt.pop %v111
  %v120 = vmul.f32 %v56, %v112
  %v121 = vmul.f32 %v57, %v113
  %v122 = vmul.f32 %v58, %v114
  %v123 = vmul.f32 %v59, %v115
  %v124 = vmul.f32 %v60, %v116
  %v125 = vmul.f32 %v61, %v117
  %v126 = vmul.f32 %v62, %v118
  %v127 = vmul.f32 %v63, %v119
  %v128 = vld [vmem:[%s1] sm:$0x1]
  %v130 = vlaneseq
  %v131 = vshrl.u32 %v130, 7
  %v132 = vsub.s32 0, %v131
  %v133 = vrot.slane %v128, %v132
  %v135 = vmul.f32 %v120, %v133
  %v136 = vmul.f32 %v121, %v133
  %v137 = vmul.f32 %v122, %v133
  %v138 = vmul.f32 %v123, %v133
  %v139 = vmul.f32 %v124, %v133
  %v140 = vmul.f32 %v125, %v133
  %v141 = vmul.f32 %v126, %v133
  %v142 = vmul.f32 %v127, %v133
  %v143 = vld [vmem:[%s2] sm:$0x1]
  %v145 = vlaneseq
  %v146 = vshrl.u32 %v145, 7
  %v147 = vsub.s32 0, %v146
  %v148 = vrot.slane %v143, %v147
  %v150 = vadd.f32 %v135, %v148
  %v151 = vadd.f32 %v136, %v148
  %v152 = vadd.f32 %v137, %v148
  %v153 = vadd.f32 %v138, %v148
  %v154 = vadd.f32 %v139, %v148
  %v155 = vadd.f32 %v140, %v148
  %v156 = vadd.f32 %v141, %v148
  %v157 = vadd.f32 %v142, %v148
  %158 = vst.msk [vmem:[%s3] sm:$0xff] %vm22, %v150
  %159 = vst.msk [vmem:[%s3 + $0x8] sm:$0xff] %vm22, %v151
  %160 = vst.msk [vmem:[%s3 + $0x10] sm:$0xff] %vm22, %v152
  %161 = vst.msk [vmem:[%s3 + $0x18] sm:$0xff] %vm22, %v153
  %162 = vst.msk [vmem:[%s3 + $0x20] sm:$0xff] %vm22, %v154
  %163 = vst.msk [vmem:[%s3 + $0x28] sm:$0xff] %vm22, %v155
  %164 = vst.msk [vmem:[%s3 + $0x30] sm:$0xff] %vm22, %v156
  %165 = vst.msk [vmem:[%s3 + $0x38] sm:$0xff] %vm22, %v157
  // Predicated region
  $region14: #{afnonet_forward.11} parent=0 // pred_check
    _
  $region15: #{afnonet_forward.11} parent=0 // pred_check_branch
    %167 = sbr.rel (0) target = $region17
  $region16: #{afnonet_forward.11} parent=0 // pred_region
    _
  $region17: #{afnonet_forward.11} parent=0 // pred_fallthru
    _
  // Predicated region
  $region18: #{afnonet_forward.11} parent=0 // pred_check
    _
  $region19: #{afnonet_forward.11} parent=0 // pred_check_branch
    %169 = sbr.rel (0) target = $region21
  $region20: #{afnonet_forward.11} parent=0 // pred_region
    _
  $region21: #{afnonet_forward.11} parent=0 // pred_fallthru
    _

// kernel: reverse.4
$region0: #{reverse.4}
  #allocation0 [shape = 's32[1]{0}', space=sflag, size = 0x4, scoped, tag = 'scoped memory for reverse.4']
  %s0 = inlined_call_operand.vmem [shape: f32[2,32,8,3], index: 0, kind: input, shape index: {}]
  %s1 = inlined_call_operand.vmem [shape: f32[2,32,8,3], index: 1, kind: output, shape index: {}]
  %s2 = scalar_lea.vmem %s0, 16
  %v3 = vld [vmem:[%s2] sm:$0xff]
  %4 = vst [vmem:[%s1] sm:$0xff] %v3
  %s5 = scalar_lea.vmem %s0, 40
  %v6 = vld [vmem:[%s5] sm:$0xff]
  %s7 = scalar_lea.vmem %s1, 24
  %8 = vst [vmem:[%s7] sm:$0xff] %v6
  %s9 = scalar_lea.vmem %s0, 8
  %v10 = vld [vmem:[%s9] sm:$0xff]
  %s11 = scalar_lea.vmem %s1, 8
  %12 = vst [vmem:[%s11] sm:$0xff] %v10
  %s13 = scalar_lea.vmem %s0, 32
  %v14 = vld [vmem:[%s13] sm:$0xff]
  %s15 = scalar_lea.vmem %s1, 32
  %16 = vst [vmem:[%s15] sm:$0xff] %v14
  %v17 = vld [vmem:[%s0] sm:$0xff]
  %s18 = scalar_lea.vmem %s1, 16
  %19 = vst [vmem:[%s18] sm:$0xff] %v17
  %s20 = scalar_lea.vmem %s0, 24
  %v21 = vld [vmem:[%s20] sm:$0xff]
  %s22 = scalar_lea.vmem %s1, 40
  %23 = vst [vmem:[%s22] sm:$0xff] %v21

// kernel: afnonet_forward.12
$region0: #{afnonet_forward.12}
  #allocation0 [shape = 'u32[]', space=smem, size = 0x4, offset = 0x4, fixed_abs, tag = 'smem constant byte address 0x4 - core index']
  #allocation1 [shape = 'u32[144,128]{1,0:T(1,128)}', space=vmem, size = 0x12000, scoped, tag = 'internal scratch']
  %s0 = inlined_call_operand.vmem [shape: f32[4,8,80], index: 0, kind: input, shape index: {}]
  %s1 = inlined_call_operand.vmem [shape: f32[4,8,80], index: 1, kind: input, shape index: {}]
  %s2 = inlined_call_operand.vmem [shape: bf16[4,8,8], index: 2, kind: input, shape index: {}]
  %s3 = inlined_call_operand.vmem [shape: bf16[4,8,8], index: 3, kind: input, shape index: {}]
  %s4 = inlined_call_operand.vmem [shape: bf16[4,8,8], index: 4, kind: input, shape index: {}]
  %s5 = inlined_call_operand.vmem [shape: f32[4,8,1], index: 5, kind: input, shape index: {}]
  %s6 = inlined_call_operand.vmem [shape: f32[4,8,1], index: 6, kind: input, shape index: {}]
  %s7 = inlined_call_operand.vmem [shape: bf16[4,8,8], index: 7, kind: input, shape index: {}]
  %s8 = inlined_call_operand.vmem [shape: bf16[4,8,8], index: 8, kind: input, shape index: {}]
  %s9 = inlined_call_operand.vmem [shape: bf16[4,8,8], index: 9, kind: input, shape index: {}]
  %s10 = inlined_call_operand.vmem [shape: f32[4,8,1], index: 10, kind: input, shape index: {}]
  %s11 = inlined_call_operand.vmem [shape: f32[4,8,1], index: 11, kind: input, shape index: {}]
  %s12 = inlined_call_operand.vmem [shape: f32[4,8,80], index: 12, kind: output, shape index: {0}]
  %s13 = inlined_call_operand.vmem [shape: f32[4,8,80], index: 13, kind: output, shape index: {1}]
  %14 = xla_tuple %s12, %s13
  %s15 = sld [smem:[#allocation0]]
  $region89: #{afnonet_forward.12} parent=0
    _
  %s17 = ssub.s32 1, %s15
  %s18 = scalar_select 0, %s17, %s15
  loop: start=0, step=1, limit=6
  $region2: #{afnonet_forward.12} parent=0 // loop_pre_header
    _
  $region3: #{afnonet_forward.12} parent=0 // loop_header
    %s20 = sphi 0, %s24
    %p21 = scmp.ge.s32.totalorder %s20, 6
    %s27 = sphi 0, %s39
    %s28 = sphi 0, %s35
    %s29 = sphi 0, %s27
    %s30 = sphi 0, %s28
    %s31 = sphi 0, %s29
    %s32 = sphi 0, %s30
    %s44 = sphi 0, %s46
    %s47 = sphi 0, %s44
    %s48 = sphi 0, %s47
    %s64 = sphi 0, %s48
    %s72 = sphi 0, %s74
    %s75 = sphi 0, %s72
    %s76 = sphi 0, %s75
    %s92 = sphi 0, %s76
    %s98 = sphi 0, %s100
    %s101 = sphi 0, %s98
    %s102 = sphi 0, %s101
    %s118 = sphi 0, %s102
    %s124 = sphi 0, %s126
    %s127 = sphi 0, %s124
    %s128 = sphi 0, %s127
    %s144 = sphi 0, %s128
    %s150 = sphi 0, %s152
    %s153 = sphi 0, %s150
    %s154 = sphi 0, %s153
    %s170 = sphi 0, %s154
    %s176 = sphi 0, %s178
    %s179 = sphi 0, %s176
    %s180 = sphi 0, %s179
    %s196 = sphi 0, %s180
    %s202 = sphi 0, %s204
    %s205 = sphi 0, %s202
    %s206 = sphi 0, %s205
    %s222 = sphi 0, %s206
    %s228 = sphi 0, %s230
    %s231 = sphi 0, %s228
    %s232 = sphi 0, %s231
    %s248 = sphi 0, %s232
    %s254 = sphi 0, %s256
    %s257 = sphi 0, %s254
    %s258 = sphi 0, %s257
    %s274 = sphi 0, %s258
    %s280 = sphi 0, %s282
    %s283 = sphi 0, %s280
    %s284 = sphi 0, %s283
    %s300 = sphi 0, %s284
    %s306 = sphi 0, %s308
    %s309 = sphi 0, %s306
    %s310 = sphi 0, %s309
    %s326 = sphi 0, %s310
    %s332 = sphi 0, %s334
    %s335 = sphi 0, %s332
    %s336 = sphi 0, %s335
    %s352 = sphi 0, %s336
    %s360 = sphi 0, %s362
    %s363 = sphi 0, %s360
    %s364 = sphi 0, %s363
    %s380 = sphi 0, %s364
    %s388 = sphi 0, %s390
    %s391 = sphi 0, %s388
    %s392 = sphi 0, %s391
    %s408 = sphi 0, %s392
  $region4: #{afnonet_forward.12} parent=0 // loop_header_branch
    %23 = sbr.rel (%p21) target = $region8
  $region5: #{afnonet_forward.12} parent=0 // loop_body
    %s25 = ssub.s32 %s20, 1
    %s26 = ssub.s32 %s20, 2
    %s33 = sadd.s32 1, %s28
    %p34 = scmp.ge.s32.totalorder %s33, 1
    %s35 = scalar_select %p34, 0, %s33
    %s36 = sadd.s32 1, %s27
    %s37 = scalar_select %p34, %s36, %s27
    %p38 = scmp.ge.s32.totalorder %s37, 4
    %s39 = scalar_select %p38, 0, %s37
    %s40 = ssub.s32 %s27, %s39
    %s41 = ssub.s32 %s28, %s35
    %s42 = sor.u32 %s40, %s41
    %p43 = scmp.eq.s32.totalorder %s42, 0
    %s45 = sadd.s32 %s44, 1
    %s46 = scalar_select %p43, %s44, %s45
    %p49 = pneg %p43
    %p50 = scmp.eq.s32.totalorder %s20, 3
    %p51 = por %p49, %p50
    %p52 = scmp.ne.s32.totalorder %s44, %s47
    %p53 = scmp.eq.s32.totalorder %s20, 0
    %p54 = por %p52, %p53
    %p55 = scmp.ne.s32.totalorder %s44, %s47
    %p56 = scmp.eq.s32.totalorder %s25, 3
    %p57 = por %p55, %p56
    %p58 = scmp.ne.s32.totalorder %s47, %s48
    %p59 = scmp.eq.s32.totalorder %s25, 0
    %p60 = por %p58, %p59
    %p61 = scmp.ne.s32.totalorder %s47, %s48
    %p62 = scmp.eq.s32.totalorder %s26, 3
    %p63 = por %p61, %p62
    %p65 = scmp.ne.s32.totalorder %s48, %s64
    %p66 = scmp.eq.s32.totalorder %s26, 0
    %p67 = por %p65, %p66
    %s68 = ssub.s32 %s27, %s39
    %s69 = ssub.s32 %s28, %s35
    %s70 = sor.u32 %s68, %s69
    %p71 = scmp.eq.s32.totalorder %s70, 0
    %s73 = sadd.s32 %s72, 1
    %s74 = scalar_select %p71, %s72, %s73
    %p77 = pneg %p71
    %p78 = scmp.eq.s32.totalorder %s20, 3
    %p79 = por %p77, %p78
    %p80 = scmp.ne.s32.totalorder %s72, %s75
    %p81 = scmp.eq.s32.totalorder %s20, 0
    %p82 = por %p80, %p81
    %p83 = scmp.ne.s32.totalorder %s72, %s75
    %p84 = scmp.eq.s32.totalorder %s25, 3
    %p85 = por %p83, %p84
    %p86 = scmp.ne.s32.totalorder %s75, %s76
    %p87 = scmp.eq.s32.totalorder %s25, 0
    %p88 = por %p86, %p87
    %p89 = scmp.ne.s32.totalorder %s75, %s76
    %p90 = scmp.eq.s32.totalorder %s26, 3
    %p91 = por %p89, %p90
    %p93 = scmp.ne.s32.totalorder %s76, %s92
    %p94 = scmp.eq.s32.totalorder %s26, 0
    %p95 = por %p93, %p94
    %s96 = ssub.s32 %s27, %s39
    %p97 = scmp.eq.s32.totalorder %s96, 0
    %s99 = sadd.s32 %s98, 1
    %s100 = scalar_select %p97, %s98, %s99
    %p103 = pneg %p97
    %p104 = scmp.eq.s32.totalorder %s20, 3
    %p105 = por %p103, %p104
    %p106 = scmp.ne.s32.totalorder %s98, %s101
    %p107 = scmp.eq.s32.totalorder %s20, 0
    %p108 = por %p106, %p107
    %p109 = scmp.ne.s32.totalorder %s98, %s101
    %p110 = scmp.eq.s32.totalorder %s25, 3
    %p111 = por %p109, %p110
    %p112 = scmp.ne.s32.totalorder %s101, %s102
    %p113 = scmp.eq.s32.totalorder %s25, 0
    %p114 = por %p112, %p113
    %p115 = scmp.ne.s32.totalorder %s101, %s102
    %p116 = scmp.eq.s32.totalorder %s26, 3
    %p117 = por %p115, %p116
    %p119 = scmp.ne.s32.totalorder %s102, %s118
    %p120 = scmp.eq.s32.totalorder %s26, 0
    %p121 = por %p119, %p120
    %s122 = ssub.s32 %s27, %s39
    %p123 = scmp.eq.s32.totalorder %s122, 0
    %s125 = sadd.s32 %s124, 1
    %s126 = scalar_select %p123, %s124, %s125
    %p129 = pneg %p123
    %p130 = scmp.eq.s32.totalorder %s20, 3
    %p131 = por %p129, %p130
    %p132 = scmp.ne.s32.totalorder %s124, %s127
    %p133 = scmp.eq.s32.totalorder %s20, 0
    %p134 = por %p132, %p133
    %p135 = scmp.ne.s32.totalorder %s124, %s127
    %p136 = scmp.eq.s32.totalorder %s25, 3
    %p137 = por %p135, %p136
    %p138 = scmp.ne.s32.totalorder %s127, %s128
    %p139 = scmp.eq.s32.totalorder %s25, 0
    %p140 = por %p138, %p139
    %p141 = scmp.ne.s32.totalorder %s127, %s128
    %p142 = scmp.eq.s32.totalorder %s26, 3
    %p143 = por %p141, %p142
    %p145 = scmp.ne.s32.totalorder %s128, %s144
    %p146 = scmp.eq.s32.totalorder %s26, 0
    %p147 = por %p145, %p146
    %s148 = ssub.s32 %s27, %s39
    %p149 = scmp.eq.s32.totalorder %s148, 0
    %s151 = sadd.s32 %s150, 1
    %s152 = scalar_select %p149, %s150, %s151
    %p155 = pneg %p149
    %p156 = scmp.eq.s32.totalorder %s20, 3
    %p157 = por %p155, %p156
    %p158 = scmp.ne.s32.totalorder %s150, %s153
    %p159 = scmp.eq.s32.totalorder %s20, 0
    %p160 = por %p158, %p159
    %p161 = scmp.ne.s32.totalorder %s150, %s153
    %p162 = scmp.eq.s32.totalorder %s25, 3
    %p163 = por %p161, %p162
    %p164 = scmp.ne.s32.totalorder %s153, %s154
    %p165 = scmp.eq.s32.totalorder %s25, 0
    %p166 = por %p164, %p165
    %p167 = scmp.ne.s32.totalorder %s153, %s154
    %p168 = scmp.eq.s32.totalorder %s26, 3
    %p169 = por %p167, %p168
    %p171 = scmp.ne.s32.totalorder %s154, %s170
    %p172 = scmp.eq.s32.totalorder %s26, 0
    %p173 = por %p171, %p172
    %s174 = ssub.s32 %s27, %s39
    %p175 = scmp.eq.s32.totalorder %s174, 0
    %s177 = sadd.s32 %s176, 1
    %s178 = scalar_select %p175, %s176, %s177
    %p181 = pneg %p175
    %p182 = scmp.eq.s32.totalorder %s20, 3
    %p183 = por %p181, %p182
    %p184 = scmp.ne.s32.totalorder %s176, %s179
    %p185 = scmp.eq.s32.totalorder %s20, 0
    %p186 = por %p184, %p185
    %p187 = scmp.ne.s32.totalorder %s176, %s179
    %p188 = scmp.eq.s32.totalorder %s25, 3
    %p189 = por %p187, %p188
    %p190 = scmp.ne.s32.totalorder %s179, %s180
    %p191 = scmp.eq.s32.totalorder %s25, 0
    %p192 = por %p190, %p191
    %p193 = scmp.ne.s32.totalorder %s179, %s180
    %p194 = scmp.eq.s32.totalorder %s26, 3
    %p195 = por %p193, %p194
    %p197 = scmp.ne.s32.totalorder %s180, %s196
    %p198 = scmp.eq.s32.totalorder %s26, 0
    %p199 = por %p197, %p198
    %s200 = ssub.s32 %s27, %s39
    %p201 = scmp.eq.s32.totalorder %s200, 0
    %s203 = sadd.s32 %s202, 1
    %s204 = scalar_select %p201, %s202, %s203
    %p207 = pneg %p201
    %p208 = scmp.eq.s32.totalorder %s20, 3
    %p209 = por %p207, %p208
    %p210 = scmp.ne.s32.totalorder %s202, %s205
    %p211 = scmp.eq.s32.totalorder %s20, 0
    %p212 = por %p210, %p211
    %p213 = scmp.ne.s32.totalorder %s202, %s205
    %p214 = scmp.eq.s32.totalorder %s25, 3
    %p215 = por %p213, %p214
    %p216 = scmp.ne.s32.totalorder %s205, %s206
    %p217 = scmp.eq.s32.totalorder %s25, 0
    %p218 = por %p216, %p217
    %p219 = scmp.ne.s32.totalorder %s205, %s206
    %p220 = scmp.eq.s32.totalorder %s26, 3
    %p221 = por %p219, %p220
    %p223 = scmp.ne.s32.totalorder %s206, %s222
    %p224 = scmp.eq.s32.totalorder %s26, 0
    %p225 = por %p223, %p224
    %s226 = ssub.s32 %s27, %s39
    %p227 = scmp.eq.s32.totalorder %s226, 0
    %s229 = sadd.s32 %s228, 1
    %s230 = scalar_select %p227, %s228, %s229
    %p233 = pneg %p227
    %p234 = scmp.eq.s32.totalorder %s20, 3
    %p235 = por %p233, %p234
    %p236 = scmp.ne.s32.totalorder %s228, %s231
    %p237 = scmp.eq.s32.totalorder %s20, 0
    %p238 = por %p236, %p237
    %p239 = scmp.ne.s32.totalorder %s228, %s231
    %p240 = scmp.eq.s32.totalorder %s25, 3
    %p241 = por %p239, %p240
    %p242 = scmp.ne.s32.totalorder %s231, %s232
    %p243 = scmp.eq.s32.totalorder %s25, 0
    %p244 = por %p242, %p243
    %p245 = scmp.ne.s32.totalorder %s231, %s232
    %p246 = scmp.eq.s32.totalorder %s26, 3
    %p247 = por %p245, %p246
    %p249 = scmp.ne.s32.totalorder %s232, %s248
    %p250 = scmp.eq.s32.totalorder %s26, 0
    %p251 = por %p249, %p250
    %s252 = ssub.s32 %s27, %s39
    %p253 = scmp.eq.s32.totalorder %s252, 0
    %s255 = sadd.s32 %s254, 1
    %s256 = scalar_select %p253, %s254, %s255
    %p259 = pneg %p253
    %p260 = scmp.eq.s32.totalorder %s20, 3
    %p261 = por %p259, %p260
    %p262 = scmp.ne.s32.totalorder %s254, %s257
    %p263 = scmp.eq.s32.totalorder %s20, 0
    %p264 = por %p262, %p263
    %p265 = scmp.ne.s32.totalorder %s254, %s257
    %p266 = scmp.eq.s32.totalorder %s25, 3
    %p267 = por %p265, %p266
    %p268 = scmp.ne.s32.totalorder %s257, %s258
    %p269 = scmp.eq.s32.totalorder %s25, 0
    %p270 = por %p268, %p269
    %p271 = scmp.ne.s32.totalorder %s257, %s258
    %p272 = scmp.eq.s32.totalorder %s26, 3
    %p273 = por %p271, %p272
    %p275 = scmp.ne.s32.totalorder %s258, %s274
    %p276 = scmp.eq.s32.totalorder %s26, 0
    %p277 = por %p275, %p276
    %s278 = ssub.s32 %s27, %s39
    %p279 = scmp.eq.s32.totalorder %s278, 0
    %s281 = sadd.s32 %s280, 1
    %s282 = scalar_select %p279, %s280, %s281
    %p285 = pneg %p279
    %p286 = scmp.eq.s32.totalorder %s20, 3
    %p287 = por %p285, %p286
    %p288 = scmp.ne.s32.totalorder %s280, %s283
    %p289 = scmp.eq.s32.totalorder %s20, 0
    %p290 = por %p288, %p289
    %p291 = scmp.ne.s32.totalorder %s280, %s283
    %p292 = scmp.eq.s32.totalorder %s25, 3
    %p293 = por %p291, %p292
    %p294 = scmp.ne.s32.totalorder %s283, %s284
    %p295 = scmp.eq.s32.totalorder %s25, 0
    %p296 = por %p294, %p295
    %p297 = scmp.ne.s32.totalorder %s283, %s284
    %p298 = scmp.eq.s32.totalorder %s26, 3
    %p299 = por %p297, %p298
    %p301 = scmp.ne.s32.totalorder %s284, %s300
    %p302 = scmp.eq.s32.totalorder %s26, 0
    %p303 = por %p301, %p302
    %s304 = ssub.s32 %s27, %s39
    %p305 = scmp.eq.s32.totalorder %s304, 0
    %s307 = sadd.s32 %s306, 1
    %s308 = scalar_select %p305, %s306, %s307
    %p311 = pneg %p305
    %p312 = scmp.eq.s32.totalorder %s20, 3
    %p313 = por %p311, %p312
    %p314 = scmp.ne.s32.totalorder %s306, %s309
    %p315 = scmp.eq.s32.totalorder %s20, 0
    %p316 = por %p314, %p315
    %p317 = scmp.ne.s32.totalorder %s306, %s309
    %p318 = scmp.eq.s32.totalorder %s25, 3
    %p319 = por %p317, %p318
    %p320 = scmp.ne.s32.totalorder %s309, %s310
    %p321 = scmp.eq.s32.totalorder %s25, 0
    %p322 = por %p320, %p321
    %p323 = scmp.ne.s32.totalorder %s309, %s310
    %p324 = scmp.eq.s32.totalorder %s26, 3
    %p325 = por %p323, %p324
    %p327 = scmp.ne.s32.totalorder %s310, %s326
    %p328 = scmp.eq.s32.totalorder %s26, 0
    %p329 = por %p327, %p328
    %s330 = ssub.s32 %s27, %s39
    %p331 = scmp.eq.s32.totalorder %s330, 0
    %s333 = sadd.s32 %s332, 1
    %s334 = scalar_select %p331, %s332, %s333
    %p337 = pneg %p331
    %p338 = scmp.eq.s32.totalorder %s20, 3
    %p339 = por %p337, %p338
    %p340 = scmp.ne.s32.totalorder %s332, %s335
    %p341 = scmp.eq.s32.totalorder %s20, 0
    %p342 = por %p340, %p341
    %p343 = scmp.ne.s32.totalorder %s332, %s335
    %p344 = scmp.eq.s32.totalorder %s25, 3
    %p345 = por %p343, %p344
    %p346 = scmp.ne.s32.totalorder %s335, %s336
    %p347 = scmp.eq.s32.totalorder %s25, 0
    %p348 = por %p346, %p347
    %p349 = scmp.ne.s32.totalorder %s335, %s336
    %p350 = scmp.eq.s32.totalorder %s26, 3
    %p351 = por %p349, %p350
    %p353 = scmp.ne.s32.totalorder %s336, %s352
    %p354 = scmp.eq.s32.totalorder %s26, 0
    %p355 = por %p353, %p354
    %s356 = ssub.s32 %s27, %s39
    %s357 = ssub.s32 %s28, %s35
    %s358 = sor.u32 %s356, %s357
    %p359 = scmp.eq.s32.totalorder %s358, 0
    %s361 = sadd.s32 %s360, 1
    %s362 = scalar_select %p359, %s360, %s361
    %p365 = pneg %p359
    %p366 = scmp.eq.s32.totalorder %s20, 3
    %p367 = por %p365, %p366
    %p368 = scmp.ne.s32.totalorder %s360, %s363
    %p369 = scmp.eq.s32.totalorder %s20, 0
    %p370 = por %p368, %p369
    %p371 = scmp.ne.s32.totalorder %s360, %s363
    %p372 = scmp.eq.s32.totalorder %s25, 3
    %p373 = por %p371, %p372
    %p374 = scmp.ne.s32.totalorder %s363, %s364
    %p375 = scmp.eq.s32.totalorder %s25, 0
    %p376 = por %p374, %p375
    %p377 = scmp.ne.s32.totalorder %s363, %s364
    %p378 = scmp.eq.s32.totalorder %s26, 3
    %p379 = por %p377, %p378
    %p381 = scmp.ne.s32.totalorder %s364, %s380
    %p382 = scmp.eq.s32.totalorder %s26, 0
    %p383 = por %p381, %p382
    %s384 = ssub.s32 %s27, %s39
    %s385 = ssub.s32 %s28, %s35
    %s386 = sor.u32 %s384, %s385
    %p387 = scmp.eq.s32.totalorder %s386, 0
    %s389 = sadd.s32 %s388, 1
    %s390 = scalar_select %p387, %s388, %s389
    %p393 = pneg %p387
    %p394 = scmp.eq.s32.totalorder %s20, 3
    %p395 = por %p393, %p394
    %p396 = scmp.ne.s32.totalorder %s388, %s391
    %p397 = scmp.eq.s32.totalorder %s20, 0
    %p398 = por %p396, %p397
    %p399 = scmp.ne.s32.totalorder %s388, %s391
    %p400 = scmp.eq.s32.totalorder %s25, 3
    %p401 = por %p399, %p400
    %p402 = scmp.ne.s32.totalorder %s391, %s392
    %p403 = scmp.eq.s32.totalorder %s25, 0
    %p404 = por %p402, %p403
    %p405 = scmp.ne.s32.totalorder %s391, %s392
    %p406 = scmp.eq.s32.totalorder %s26, 3
    %p407 = por %p405, %p406
    %p409 = scmp.ne.s32.totalorder %s392, %s408
    %p410 = scmp.eq.s32.totalorder %s26, 0
    %p411 = por %p409, %p410
    %p412 = scmp.le.s32.totalorder 1, %s20
    %p413 = scmp.lt.s32.totalorder %s20, 5
    %p414 = pnand %p412, %p413
    %p415 = pneg %p414
    // Predicated region
    $region9: #{afnonet_forward.12} parent=5 // pred_check
      _
    $region10: #{afnonet_forward.12} parent=5 // pred_check_branch
      %417 = sbr.rel (%p414) target = $region12
    $region11: #{afnonet_forward.12} parent=5 // pred_region
      %s418 = ssub.s32 %s20, 1
    $region12: #{afnonet_forward.12} parent=5 // pred_fallthru
      _
    %p419 = scmp.lt.s32.totalorder %s20, 4
    // Predicated region
    $region13: #{afnonet_forward.12} parent=5 // pred_check
      %p420 = pneg %p419
    $region14: #{afnonet_forward.12} parent=5 // pred_check_branch
      %422 = sbr.rel (%p420) target = $region16
    $region15: #{afnonet_forward.12} parent=5 // pred_region
      // Predicated region
      $region17: #{afnonet_forward.12} parent=15 // pred_check
        %p423 = pneg %p54
      $region18: #{afnonet_forward.12} parent=15 // pred_check_branch
        %425 = sbr.rel (%p423) target = $region20
      $region19: #{afnonet_forward.12} parent=15 // pred_region
        %p426 = scmp.lt.s32.totalorder %s27, 3
        %s427 = scalar_select %p426, %s27, 3
        %p428 = scmp.lt.s32.totalorder %s28, 0
        %s429 = scalar_select %p428, %s28, 0
        %s430 = sadd.s32 %s429, %s427
        %s431 = smul.addr %s430, 8
        %s432 = scalar_lea.vmem %s0, %s431
      $region20: #{afnonet_forward.12} parent=15 // pred_fallthru
        _
      // Predicated region
      $region21: #{afnonet_forward.12} parent=15 // pred_check
        %p433 = pneg %p82
      $region22: #{afnonet_forward.12} parent=15 // pred_check_branch
        %435 = sbr.rel (%p433) target = $region24
      $region23: #{afnonet_forward.12} parent=15 // pred_region
        %p436 = scmp.lt.s32.totalorder %s27, 3
        %s437 = scalar_select %p436, %s27, 3
        %p438 = scmp.lt.s32.totalorder %s28, 0
        %s439 = scalar_select %p438, %s28, 0
        %s440 = sadd.s32 %s439, %s437
        %s441 = smul.addr %s440, 8
        %s442 = scalar_lea.vmem %s1, %s441
      $region24: #{afnonet_forward.12} parent=15 // pred_fallthru
        _
      // Predicated region
      $region25: #{afnonet_forward.12} parent=15 // pred_check
        %p443 = pneg %p108
      $region26: #{afnonet_forward.12} parent=15 // pred_check_branch
        %445 = sbr.rel (%p443) target = $region28
      $region27: #{afnonet_forward.12} parent=15 // pred_region
        %p446 = scmp.lt.s32.totalorder %s27, 3
        %s447 = scalar_select %p446, %s27, 3
        %s448 = smul.addr %s447, 4
        %s449 = scalar_lea.vmem %s2, %s448
      $region28: #{afnonet_forward.12} parent=15 // pred_fallthru
        _
      // Predicated region
      $region29: #{afnonet_forward.12} parent=15 // pred_check
        %p450 = pneg %p134
      $region30: #{afnonet_forward.12} parent=15 // pred_check_branch
        %452 = sbr.rel (%p450) target = $region32
      $region31: #{afnonet_forward.12} parent=15 // pred_region
        %p453 = scmp.lt.s32.totalorder %s27, 3
        %s454 = scalar_select %p453, %s27, 3
        %s455 = smul.addr %s454, 4
        %s456 = scalar_lea.vmem %s3, %s455
      $region32: #{afnonet_forward.12} parent=15 // pred_fallthru
        _
      // Predicated region
      $region33: #{afnonet_forward.12} parent=15 // pred_check
        %p457 = pneg %p160
      $region34: #{afnonet_forward.12} parent=15 // pred_check_branch
        %459 = sbr.rel (%p457) target = $region36
      $region35: #{afnonet_forward.12} parent=15 // pred_region
        %p460 = scmp.lt.s32.totalorder %s27, 3
        %s461 = scalar_select %p460, %s27, 3
        %s462 = smul.addr %s461, 4
        %s463 = scalar_lea.vmem %s4, %s462
      $region36: #{afnonet_forward.12} parent=15 // pred_fallthru
        _
      // Predicated region
      $region37: #{afnonet_forward.12} parent=15 // pred_check
        %p464 = pneg %p186
      $region38: #{afnonet_forward.12} parent=15 // pred_check_branch
        %466 = sbr.rel (%p464) target = $region40
      $region39: #{afnonet_forward.12} parent=15 // pred_region
        %p467 = scmp.lt.s32.totalorder %s27, 3
        %s468 = scalar_select %p467, %s27, 3
        %s469 = smul.addr %s468, 8
        %s470 = scalar_lea.vmem %s5, %s469
      $region40: #{afnonet_forward.12} parent=15 // pred_fallthru
        _
      // Predicated region
      $region41: #{afnonet_forward.12} parent=15 // pred_check
        %p471 = pneg %p212
      $region42: #{afnonet_forward.12} parent=15 // pred_check_branch
        %473 = sbr.rel (%p471) target = $region44
      $region43: #{afnonet_forward.12} parent=15 // pred_region
        %p474 = scmp.lt.s32.totalorder %s27, 3
        %s475 = scalar_select %p474, %s27, 3
        %s476 = smul.addr %s475, 8
        %s477 = scalar_lea.vmem %s6, %s476
      $region44: #{afnonet_forward.12} parent=15 // pred_fallthru
        _
      // Predicated region
      $region45: #{afnonet_forward.12} parent=15 // pred_check
        %p478 = pneg %p238
      $region46: #{afnonet_forward.12} parent=15 // pred_check_branch
        %480 = sbr.rel (%p478) target = $region48
      $region47: #{afnonet_forward.12} parent=15 // pred_region
        %p481 = scmp.lt.s32.totalorder %s27, 3
        %s482 = scalar_select %p481, %s27, 3
        %s483 = smul.addr %s482, 4
        %s484 = scalar_lea.vmem %s7, %s483
      $region48: #{afnonet_forward.12} parent=15 // pred_fallthru
        _
      // Predicated region
      $region49: #{afnonet_forward.12} parent=15 // pred_check
        %p485 = pneg %p264
      $region50: #{afnonet_forward.12} parent=15 // pred_check_branch
        %487 = sbr.rel (%p485) target = $region52
      $region51: #{afnonet_forward.12} parent=15 // pred_region
        %p488 = scmp.lt.s32.totalorder %s27, 3
        %s489 = scalar_select %p488, %s27, 3
        %s490 = smul.addr %s489, 4
        %s491 = scalar_lea.vmem %s8, %s490
      $region52: #{afnonet_forward.12} parent=15 // pred_fallthru
        _
      // Predicated region
      $region53: #{afnonet_forward.12} parent=15 // pred_check
        %p492 = pneg %p290
      $region54: #{afnonet_forward.12} parent=15 // pred_check_branch
        %494 = sbr.rel (%p492) target = $region56
      $region55: #{afnonet_forward.12} parent=15 // pred_region
        %p495 = scmp.lt.s32.totalorder %s27, 3
        %s496 = scalar_select %p495, %s27, 3
        %s497 = smul.addr %s496, 4
        %s498 = scalar_lea.vmem %s9, %s497
      $region56: #{afnonet_forward.12} parent=15 // pred_fallthru
        _
      // Predicated region
      $region57: #{afnonet_forward.12} parent=15 // pred_check
        %p499 = pneg %p316
      $region58: #{afnonet_forward.12} parent=15 // pred_check_branch
        %501 = sbr.rel (%p499) target = $region60
      $region59: #{afnonet_forward.12} parent=15 // pred_region
        %p502 = scmp.lt.s32.totalorder %s27, 3
        %s503 = scalar_select %p502, %s27, 3
        %s504 = smul.addr %s503, 8
        %s505 = scalar_lea.vmem %s10, %s504
      $region60: #{afnonet_forward.12} parent=15 // pred_fallthru
        _
      // Predicated region
      $region61: #{afnonet_forward.12} parent=15 // pred_check
        %p506 = pneg %p342
      $region62: #{afnonet_forward.12} parent=15 // pred_check_branch
        %508 = sbr.rel (%p506) target = $region64
      $region63: #{afnonet_forward.12} parent=15 // pred_region
        %p509 = scmp.lt.s32.totalorder %s27, 3
        %s510 = scalar_select %p509, %s27, 3
        %s511 = smul.addr %s510, 8
        %s512 = scalar_lea.vmem %s11, %s511
      $region64: #{afnonet_forward.12} parent=15 // pred_fallthru
        _
    $region16: #{afnonet_forward.12} parent=5 // pred_fallthru
      _
    %p513 = scmp.le.s32.totalorder 1, %s20
    %p514 = scmp.lt.s32.totalorder %s20, 5
    %p515 = pnand %p513, %p514
    %p516 = pneg %p515
    // Predicated region
    $region65: #{afnonet_forward.12} parent=5 // pred_check
      _
    $region66: #{afnonet_forward.12} parent=5 // pred_check_branch
      %518 = sbr.rel (%p515) target = $region68
    $region67: #{afnonet_forward.12} parent=5 // pred_region
      %s519 = ssub.s32 %s20, 1
      %p520 = scmp.lt.s32.totalorder %s29, 3
      %s521 = scalar_select %p520, %s29, 3
      %p522 = scmp.lt.s32.totalorder %s30, 0
      %s523 = scalar_select %p522, %s30, 0
      %s524 = sadd.s32 %s523, %s521
      %s525 = smul.addr %s524, 8
      %s526 = scalar_lea.vmem %s0, %s525
      %p527 = pneg %p60
      %p528 = pneg %p57
      %p529 = scmp.lt.s32.totalorder %s29, 3
      %s530 = scalar_select %p529, %s29, 3
      %p531 = scmp.lt.s32.totalorder %s30, 0
      %s532 = scalar_select %p531, %s30, 0
      %s533 = sadd.s32 %s532, %s530
      %s534 = smul.addr %s533, 8
      %s535 = scalar_lea.vmem %s1, %s534
      %p536 = pneg %p88
      %p537 = pneg %p85
      %p538 = scmp.lt.s32.totalorder %s29, 3
      %s539 = scalar_select %p538, %s29, 3
      %s540 = smul.addr %s539, 4
      %s541 = scalar_lea.vmem %s2, %s540
      %p542 = pneg %p114
      %p543 = pneg %p111
      %p544 = scmp.lt.s32.totalorder %s29, 3
      %s545 = scalar_select %p544, %s29, 3
      %s546 = smul.addr %s545, 4
      %s547 = scalar_lea.vmem %s3, %s546
      %p548 = pneg %p140
      %p549 = pneg %p137
      %p550 = scmp.lt.s32.totalorder %s29, 3
      %s551 = scalar_select %p550, %s29, 3
      %s552 = smul.addr %s551, 4
      %s553 = scalar_lea.vmem %s4, %s552
      %p554 = pneg %p166
      %p555 = pneg %p163
      %p556 = scmp.lt.s32.totalorder %s29, 3
      %s557 = scalar_select %p556, %s29, 3
      %s558 = smul.addr %s557, 8
      %s559 = scalar_lea.vmem %s5, %s558
      %p560 = pneg %p192
      %p561 = pneg %p189
      %p562 = scmp.lt.s32.totalorder %s29, 3
      %s563 = scalar_select %p562, %s29, 3
      %s564 = smul.addr %s563, 8
      %s565 = scalar_lea.vmem %s6, %s564
      %p566 = pneg %p218
      %p567 = pneg %p215
      %p568 = scmp.lt.s32.totalorder %s29, 3
      %s569 = scalar_select %p568, %s29, 3
      %s570 = smul.addr %s569, 4
      %s571 = scalar_lea.vmem %s7, %s570
      %p572 = pneg %p244
      %p573 = pneg %p241
      %p574 = scmp.lt.s32.totalorder %s29, 3
      %s575 = scalar_select %p574, %s29, 3
      %s576 = smul.addr %s575, 4
      %s577 = scalar_lea.vmem %s8, %s576
      %p578 = pneg %p270
      %p579 = pneg %p267
      %p580 = scmp.lt.s32.totalorder %s29, 3
      %s581 = scalar_select %p580, %s29, 3
      %s582 = smul.addr %s581, 4
      %s583 = scalar_lea.vmem %s9, %s582
      %p584 = pneg %p296
      %p585 = pneg %p293
      %p586 = scmp.lt.s32.totalorder %s29, 3
      %s587 = scalar_select %p586, %s29, 3
      %s588 = smul.addr %s587, 8
      %s589 = scalar_lea.vmem %s10, %s588
      %p590 = pneg %p322
      %p591 = pneg %p319
      %p592 = scmp.lt.s32.totalorder %s29, 3
      %s593 = scalar_select %p592, %s29, 3
      %s594 = smul.addr %s593, 8
      %s595 = scalar_lea.vmem %s11, %s594
      %p596 = pneg %p348
      %p597 = pneg %p345
      %p598 = pneg %p376
      %p599 = pneg %p373
      %p600 = scmp.lt.s32.totalorder %s29, 3
      %s601 = scalar_select %p600, %s29, 3
      %p602 = scmp.lt.s32.totalorder %s30, 0
      %s603 = scalar_select %p602, %s30, 0
      %s604 = sadd.s32 %s603, %s601
      %s605 = smul.addr %s604, 8
      %s606 = scalar_lea.vmem %s12, %s605
      %p607 = pneg %p404
      %p608 = pneg %p401
      %p609 = scmp.lt.s32.totalorder %s29, 3
      %s610 = scalar_select %p609, %s29, 3
      %p611 = scmp.lt.s32.totalorder %s30, 0
      %s612 = scalar_select %p611, %s30, 0
      %s613 = sadd.s32 %s612, %s610
      %s614 = smul.addr %s613, 8
      %s615 = scalar_lea.vmem %s13, %s614
      %p616 = scmp.lt.s32.totalorder %s29, 3
      %s617 = scalar_select %p616, %s29, 3
      %p618 = scmp.lt.s32.totalorder %s30, 0
      %s619 = scalar_select %p618, %s30, 0
      %s620 = sadd.s32 %s619, %s617
      %s621 = smul.addr %s620, 8
      %s622 = scalar_lea.vmem %s0, %s621
      %p623 = scmp.lt.s32.totalorder %s29, 3
      %s624 = scalar_select %p623, %s29, 3
      %p625 = scmp.lt.s32.totalorder %s30, 0
      %s626 = scalar_select %p625, %s30, 0
      %s627 = sadd.s32 %s626, %s624
      %s628 = smul.addr %s627, 8
      %s629 = scalar_lea.vmem %s1, %s628
      %p630 = scmp.lt.s32.totalorder %s29, 3
      %s631 = scalar_select %p630, %s29, 3
      %s632 = smul.addr %s631, 4
      %s633 = scalar_lea.vmem %s2, %s632
      %p634 = scmp.lt.s32.totalorder %s29, 3
      %s635 = scalar_select %p634, %s29, 3
      %s636 = smul.addr %s635, 4
      %s637 = scalar_lea.vmem %s3, %s636
      %p638 = scmp.lt.s32.totalorder %s29, 3
      %s639 = scalar_select %p638, %s29, 3
      %s640 = smul.addr %s639, 4
      %s641 = scalar_lea.vmem %s4, %s640
      %p642 = scmp.lt.s32.totalorder %s29, 3
      %s643 = scalar_select %p642, %s29, 3
      %s644 = smul.addr %s643, 8
      %s645 = scalar_lea.vmem %s5, %s644
      %p646 = scmp.lt.s32.totalorder %s29, 3
      %s647 = scalar_select %p646, %s29, 3
      %s648 = smul.addr %s647, 8
      %s649 = scalar_lea.vmem %s6, %s648
      %p650 = scmp.lt.s32.totalorder %s29, 3
      %s651 = scalar_select %p650, %s29, 3
      %s652 = smul.addr %s651, 4
      %s653 = scalar_lea.vmem %s7, %s652
      %p654 = scmp.lt.s32.totalorder %s29, 3
      %s655 = scalar_select %p654, %s29, 3
      %s656 = smul.addr %s655, 4
      %s657 = scalar_lea.vmem %s8, %s656
      %p658 = scmp.lt.s32.totalorder %s29, 3
      %s659 = scalar_select %p658, %s29, 3
      %s660 = smul.addr %s659, 4
      %s661 = scalar_lea.vmem %s9, %s660
      %p662 = scmp.lt.s32.totalorder %s29, 3
      %s663 = scalar_select %p662, %s29, 3
      %s664 = smul.addr %s663, 8
      %s665 = scalar_lea.vmem %s10, %s664
      %p666 = scmp.lt.s32.totalorder %s29, 3
      %s667 = scalar_select %p666, %s29, 3
      %s668 = smul.addr %s667, 8
      %s669 = scalar_lea.vmem %s11, %s668
      %p670 = scmp.lt.s32.totalorder %s29, 3
      %s671 = scalar_select %p670, %s29, 3
      %p672 = scmp.lt.s32.totalorder %s30, 0
      %s673 = scalar_select %p672, %s30, 0
      %s674 = sadd.s32 %s673, %s671
      %s675 = smul.addr %s674, 8
      %s676 = scalar_lea.vmem %s12, %s675
      %p677 = scmp.lt.s32.totalorder %s29, 3
      %s678 = scalar_select %p677, %s29, 3
      %p679 = scmp.lt.s32.totalorder %s30, 0
      %s680 = scalar_select %p679, %s30, 0
      %s681 = sadd.s32 %s680, %s678
      %s682 = smul.addr %s681, 8
      %s683 = scalar_lea.vmem %s13, %s682
      %v685 = vld [vmem:[%s622] sm:$0xff]
      %v686 = vld [vmem:[%s629] sm:$0xff]
      %v687 = vld [vmem:[%s633] sm:$0xf]
      %v688 = vadd.f32 %v685, %v686
      %v689 = vpack.c.bf16 %v688, %v688
      %vm690 = vcmask 64512
      %v692 = vsel %vm690, %v687, 0
      %vm694 = vcmask 1043456
      %v696 = vsel %vm694, %v689, 0
      %698 = vmatprep.subr.bf16.mxu0 0
      %699 = vmatpush1.bf16.msra.mxu0 %v696
      %700 = vmatprep.subr.bf16.mxu0 0
      %701 = vmatpush1.bf16.msra.mxu0 0
      %702 = vmatprep.subr.bf16.mxu0 0
      %703 = vmatpush1.bf16.msra.mxu0 0
      %704 = vmatprep.subr.bf16.mxu0 0
      %705 = vmatpush1.bf16.msra.mxu0 0
      %706 = vmatprep.subr.bf16.mxu0 0
      %707 = vmatpush1.bf16.msra.mxu0 0
      %708 = vmatprep.subr.bf16.mxu0 0
      %709 = vmatpush1.bf16.msra.mxu0 0
      %710 = vmatprep.subr.bf16.mxu0 0
      %711 = vmatpush1.bf16.msra.mxu0 0
      %712 = vmatprep.subr.bf16.mxu0 0
      %713 = vmatpush1.bf16.msra.mxu0 0
      %714 = vmatprep.subr.bf16.mxu0 0
      %715 = vmatpush1.bf16.msra.mxu0 0
      %716 = vmatprep.subr.bf16.mxu0 0
      %717 = vmatpush1.bf16.msra.mxu0 0
      %718 = vmatprep.subr.bf16.mxu0 0
      %719 = vmatpush1.bf16.msra.mxu0 0
      %720 = vmatprep.subr.bf16.mxu0 0
      %721 = vmatpush1.bf16.msra.mxu0 0
      %722 = vmatprep.subr.bf16.mxu0 0
      %723 = vmatpush1.bf16.msra.mxu0 0
      %724 = vmatprep.subr.bf16.mxu0 0
      %725 = vmatpush1.bf16.msra.mxu0 0
      %726 = vmatprep.subr.bf16.mxu0 0
      %727 = vmatpush1.bf16.msra.mxu0 0
      %728 = vmatprep.subr.bf16.mxu0 0
      %729 = vmatpush1.bf16.msra.mxu0 0
      %730 = vmatprep.mubr.bf16.mxu0 0
      %731 = vmatmul.mubr.bf16.gmra.mrb[0].mxu0 %v692
      %v732 = vpop.f32.mrb[0].mxu0
      %v733 = vadd.f32 0.0, %v732
      %v734 = vpop.f32.mrb[0].mxu0
      %v735 = vpop.f32.mrb[0].mxu0
      %v736 = vpop.f32.mrb[0].mxu0
      %737 = vdwg.mxu0
      %v738 = vld [vmem:[%s637] sm:$0xf]
      %v739 = vpack.c.bf16 %v685, %v685
      %v741 = vsel %vm690, %v738, 0
      %v744 = vsel %vm694, %v739, 0
      %746 = vmatprep.subr.bf16.mxu0 0
      %747 = vmatpush1.bf16.msra.mxu0 %v744
      %748 = vmatprep.subr.bf16.mxu0 0
      %749 = vmatpush1.bf16.msra.mxu0 0
      %750 = vmatprep.subr.bf16.mxu0 0
      %751 = vmatpush1.bf16.msra.mxu0 0
      %752 = vmatprep.subr.bf16.mxu0 0
      %753 = vmatpush1.bf16.msra.mxu0 0
      %754 = vmatprep.subr.bf16.mxu0 0
      %755 = vmatpush1.bf16.msra.mxu0 0
      %756 = vmatprep.subr.bf16.mxu0 0
      %757 = vmatpush1.bf16.msra.mxu0 0
      %758 = vmatprep.subr.bf16.mxu0 0
      %759 = vmatpush1.bf16.msra.mxu0 0
      %760 = vmatprep.subr.bf16.mxu0 0
      %761 = vmatpush1.bf16.msra.mxu0 0
      %762 = vmatprep.subr.bf16.mxu0 0
      %763 = vmatpush1.bf16.msra.mxu0 0
      %764 = vmatprep.subr.bf16.mxu0 0
      %765 = vmatpush1.bf16.msra.mxu0 0
      %766 = vmatprep.subr.bf16.mxu0 0
      %767 = vmatpush1.bf16.msra.mxu0 0
      %768 = vmatprep.subr.bf16.mxu0 0
      %769 = vmatpush1.bf16.msra.mxu0 0
      %770 = vmatprep.subr.bf16.mxu0 0
      %771 = vmatpush1.bf16.msra.mxu0 0
      %772 = vmatprep.subr.bf16.mxu0 0
      %773 = vmatpush1.bf16.msra.mxu0 0
      %774 = vmatprep.subr.bf16.mxu0 0
      %775 = vmatpush1.bf16.msra.mxu0 0
      %776 = vmatprep.subr.bf16.mxu0 0
      %777 = vmatpush1.bf16.msra.mxu0 0
      %778 = vmatprep.mubr.bf16.mxu0 0
      %779 = vmatmul.mubr.bf16.gmra.mrb[0].mxu0 %v741
      %v780 = vpop.f32.mrb[0].mxu0
      %v781 = vadd.f32 0.0, %v780
      %v782 = vpop.f32.mrb[0].mxu0
      %v783 = vpop.f32.mrb[0].mxu0
      %v784 = vpop.f32.mrb[0].mxu0
      %785 = vdwg.mxu0
      %v786 = vld [vmem:[%s641] sm:$0xf]
      %v787 = vpack.c.bf16 %v686, %v686
      %v789 = vsel %vm690, %v786, 0
      %v792 = vsel %vm694, %v787, 0
      %794 = vmatprep.subr.bf16.mxu0 0
      %795 = vmatpush1.bf16.msra.mxu0 %v792
      %796 = vmatprep.subr.bf16.mxu0 0
      %797 = vmatpush1.bf16.msra.mxu0 0
      %798 = vmatprep.subr.bf16.mxu0 0
      %799 = vmatpush1.bf16.msra.mxu0 0
      %800 = vmatprep.subr.bf16.mxu0 0
      %801 = vmatpush1.bf16.msra.mxu0 0
      %802 = vmatprep.subr.bf16.mxu0 0
      %803 = vmatpush1.bf16.msra.mxu0 0
      %804 = vmatprep.subr.bf16.mxu0 0
      %805 = vmatpush1.bf16.msra.mxu0 0
      %806 = vmatprep.subr.bf16.mxu0 0
      %807 = vmatpush1.bf16.msra.mxu0 0
      %808 = vmatprep.subr.bf16.mxu0 0
      %809 = vmatpush1.bf16.msra.mxu0 0
      %810 = vmatprep.subr.bf16.mxu0 0
      %811 = vmatpush1.bf16.msra.mxu0 0
      %812 = vmatprep.subr.bf16.mxu0 0
      %813 = vmatpush1.bf16.msra.mxu0 0
      %814 = vmatprep.subr.bf16.mxu0 0
      %815 = vmatpush1.bf16.msra.mxu0 0
      %816 = vmatprep.subr.bf16.mxu0 0
      %817 = vmatpush1.bf16.msra.mxu0 0
      %818 = vmatprep.subr.bf16.mxu0 0
      %819 = vmatpush1.bf16.msra.mxu0 0
      %820 = vmatprep.subr.bf16.mxu0 0
      %821 = vmatpush1.bf16.msra.mxu0 0
      %822 = vmatprep.subr.bf16.mxu0 0
      %823 = vmatpush1.bf16.msra.mxu0 0
      %824 = vmatprep.subr.bf16.mxu0 0
      %825 = vmatpush1.bf16.msra.mxu0 0
      %826 = vmatprep.mubr.bf16.mxu0 0
      %827 = vmatmul.mubr.bf16.gmra.mrb[0].mxu0 %v789
      %v828 = vpop.f32.mrb[0].mxu0
      %v829 = vadd.f32 0.0, %v828
      %v830 = vpop.f32.mrb[0].mxu0
      %v831 = vpop.f32.mrb[0].mxu0
      %v832 = vpop.f32.mrb[0].mxu0
      %833 = vdwg.mxu0
      %v834 = vsub.f32 %v733, %v829
      %v835 = vld [vmem:[%s645] sm:$0xff]
      %837 = vset.pattern.permute.xlu0 0
      %838 = vperm.xlu0 %837, %v835
      %v839 = vpop.permute.xlu0 %838
      %v841 = vadd.f32 %v834, %v839
      %v842 = vmax.f32 %v841, 0.0
      %v843 = vadd.f32 %v733, %v781
      %v844 = vld [vmem:[%s649] sm:$0xff]
      %846 = vset.pattern.permute.xlu0 0
      %847 = vperm.xlu0 %846, %v844
      %v848 = vpop.permute.xlu0 %847
      %v850 = vadd.f32 %v843, %v848
      %v851 = vmax.f32 %v850, 0.0
      %v852 = vld [vmem:[%s653] sm:$0xf]
      %v853 = vadd.f32 %v842, %v851
      %v854 = vpack.c.bf16 %v853, %v853
      %v856 = vsel %vm690, %v852, 0
      %v859 = vsel %vm694, %v854, 0
      %861 = vmatprep.subr.bf16.mxu0 0
      %862 = vmatpush1.bf16.msra.mxu0 %v859
      %863 = vmatprep.subr.bf16.mxu0 0
      %864 = vmatpush1.bf16.msra.mxu0 0
      %865 = vmatprep.subr.bf16.mxu0 0
      %866 = vmatpush1.bf16.msra.mxu0 0
      %867 = vmatprep.subr.bf16.mxu0 0
      %868 = vmatpush1.bf16.msra.mxu0 0
      %869 = vmatprep.subr.bf16.mxu0 0
      %870 = vmatpush1.bf16.msra.mxu0 0
      %871 = vmatprep.subr.bf16.mxu0 0
      %872 = vmatpush1.bf16.msra.mxu0 0
      %873 = vmatprep.subr.bf16.mxu0 0
      %874 = vmatpush1.bf16.msra.mxu0 0
      %875 = vmatprep.subr.bf16.mxu0 0
      %876 = vmatpush1.bf16.msra.mxu0 0
      %877 = vmatprep.subr.bf16.mxu0 0
      %878 = vmatpush1.bf16.msra.mxu0 0
      %879 = vmatprep.subr.bf16.mxu0 0
      %880 = vmatpush1.bf16.msra.mxu0 0
      %881 = vmatprep.subr.bf16.mxu0 0
      %882 = vmatpush1.bf16.msra.mxu0 0
      %883 = vmatprep.subr.bf16.mxu0 0
      %884 = vmatpush1.bf16.msra.mxu0 0
      %885 = vmatprep.subr.bf16.mxu0 0
      %886 = vmatpush1.bf16.msra.mxu0 0
      %887 = vmatprep.subr.bf16.mxu0 0
      %888 = vmatpush1.bf16.msra.mxu0 0
      %889 = vmatprep.subr.bf16.mxu0 0
      %890 = vmatpush1.bf16.msra.mxu0 0
      %891 = vmatprep.subr.bf16.mxu0 0
      %892 = vmatpush1.bf16.msra.mxu0 0
      %893 = vmatprep.mubr.bf16.mxu0 0
      %894 = vmatmul.mubr.bf16.gmra.mrb[0].mxu0 %v856
      %v895 = vpop.f32.mrb[0].mxu0
      %v896 = vadd.f32 0.0, %v895
      %v897 = vpop.f32.mrb[0].mxu0
      %v898 = vpop.f32.mrb[0].mxu0
      %v899 = vpop.f32.mrb[0].mxu0
      %900 = vdwg.mxu0
      %v901 = vld [vmem:[%s657] sm:$0xf]
      %v902 = vpack.c.bf16 %v842, %v842
      %v904 = vsel %vm690, %v901, 0
      %v907 = vsel %vm694, %v902, 0
      %909 = vmatprep.subr.bf16.mxu0 0
      %910 = vmatpush1.bf16.msra.mxu0 %v907
      %911 = vmatprep.subr.bf16.mxu0 0
      %912 = vmatpush1.bf16.msra.mxu0 0
      %913 = vmatprep.subr.bf16.mxu0 0
      %914 = vmatpush1.bf16.msra.mxu0 0
      %915 = vmatprep.subr.bf16.mxu0 0
      %916 = vmatpush1.bf16.msra.mxu0 0
      %917 = vmatprep.subr.bf16.mxu0 0
      %918 = vmatpush1.bf16.msra.mxu0 0
      %919 = vmatprep.subr.bf16.mxu0 0
      %920 = vmatpush1.bf16.msra.mxu0 0
      %921 = vmatprep.subr.bf16.mxu0 0
      %922 = vmatpush1.bf16.msra.mxu0 0
      %923 = vmatprep.subr.bf16.mxu0 0
      %924 = vmatpush1.bf16.msra.mxu0 0
      %925 = vmatprep.subr.bf16.mxu0 0
      %926 = vmatpush1.bf16.msra.mxu0 0
      %927 = vmatprep.subr.bf16.mxu0 0
      %928 = vmatpush1.bf16.msra.mxu0 0
      %929 = vmatprep.subr.bf16.mxu0 0
      %930 = vmatpush1.bf16.msra.mxu0 0
      %931 = vmatprep.subr.bf16.mxu0 0
      %932 = vmatpush1.bf16.msra.mxu0 0
      %933 = vmatprep.subr.bf16.mxu0 0
      %934 = vmatpush1.bf16.msra.mxu0 0
      %935 = vmatprep.subr.bf16.mxu0 0
      %936 = vmatpush1.bf16.msra.mxu0 0
      %937 = vmatprep.subr.bf16.mxu0 0
      %938 = vmatpush1.bf16.msra.mxu0 0
      %939 = vmatprep.subr.bf16.mxu0 0
      %940 = vmatpush1.bf16.msra.mxu0 0
      %941 = vmatprep.mubr.bf16.mxu0 0
      %942 = vmatmul.mubr.bf16.gmra.mrb[0].mxu0 %v904
      %v943 = vpop.f32.mrb[0].mxu0
      %v944 = vadd.f32 0.0, %v943
      %v945 = vpop.f32.mrb[0].mxu0
      %v946 = vpop.f32.mrb[0].mxu0
      %v947 = vpop.f32.mrb[0].mxu0
      %948 = vdwg.mxu0
      %v949 = vld [vmem:[%s661] sm:$0xf]
      %v950 = vpack.c.bf16 %v851, %v851
      %v952 = vsel %vm690, %v949, 0
      %v955 = vsel %vm694, %v950, 0
      %957 = vmatprep.subr.bf16.mxu0 0
      %958 = vmatpush1.bf16.msra.mxu0 %v955
      %959 = vmatprep.subr.bf16.mxu0 0
      %960 = vmatpush1.bf16.msra.mxu0 0
      %961 = vmatprep.subr.bf16.mxu0 0
      %962 = vmatpush1.bf16.msra.mxu0 0
      %963 = vmatprep.subr.bf16.mxu0 0
      %964 = vmatpush1.bf16.msra.mxu0 0
      %965 = vmatprep.subr.bf16.mxu0 0
      %966 = vmatpush1.bf16.msra.mxu0 0
      %967 = vmatprep.subr.bf16.mxu0 0
      %968 = vmatpush1.bf16.msra.mxu0 0
      %969 = vmatprep.subr.bf16.mxu0 0
      %970 = vmatpush1.bf16.msra.mxu0 0
      %971 = vmatprep.subr.bf16.mxu0 0
      %972 = vmatpush1.bf16.msra.mxu0 0
      %973 = vmatprep.subr.bf16.mxu0 0
      %974 = vmatpush1.bf16.msra.mxu0 0
      %975 = vmatprep.subr.bf16.mxu0 0
      %976 = vmatpush1.bf16.msra.mxu0 0
      %977 = vmatprep.subr.bf16.mxu0 0
      %978 = vmatpush1.bf16.msra.mxu0 0
      %979 = vmatprep.subr.bf16.mxu0 0
      %980 = vmatpush1.bf16.msra.mxu0 0
      %981 = vmatprep.subr.bf16.mxu0 0
      %982 = vmatpush1.bf16.msra.mxu0 0
      %983 = vmatprep.subr.bf16.mxu0 0
      %984 = vmatpush1.bf16.msra.mxu0 0
      %985 = vmatprep.subr.bf16.mxu0 0
      %986 = vmatpush1.bf16.msra.mxu0 0
      %987 = vmatprep.subr.bf16.mxu0 0
      %988 = vmatpush1.bf16.msra.mxu0 0
      %989 = vmatprep.mubr.bf16.mxu0 0
      %990 = vmatmul.mubr.bf16.gmra.mrb[0].mxu0 %v952
      %v991 = vpop.f32.mrb[0].mxu0
      %v992 = vadd.f32 0.0, %v991
      %v993 = vpop.f32.mrb[0].mxu0
      %v994 = vpop.f32.mrb[0].mxu0
      %v995 = vpop.f32.mrb[0].mxu0
      %996 = vdwg.mxu0
      %v997 = vsub.f32 %v896, %v992
      %v998 = vld [vmem:[%s665] sm:$0xff]
      %1000 = vset.pattern.permute.xlu0 0
      %1001 = vperm.xlu0 %1000, %v998
      %v1002 = vpop.permute.xlu0 %1001
      %v1004 = vadd.f32 %v997, %v1002
      %v1005 = vadd.f32 %v896, %v944
      %v1006 = vld [vmem:[%s669] sm:$0xff]
      %1008 = vset.pattern.permute.xlu0 0
      %1009 = vperm.xlu0 %1008, %v1006
      %v1010 = vpop.permute.xlu0 %1009
      %v1012 = vadd.f32 %v1005, %v1010
      %vm1013 = vcmp.gt.f32.partialorder %v1004, 0.01
      %v1014 = vsub.f32 %v1004, 0.01
      %vm1015 = vcmp.lt.f32.partialorder %v1004, -0.01
      %v1016 = vadd.f32 %v1004, 0.01
      %v1017 = vsel %vm1015, %v1016, 0.0
      %v1018 = vsel %vm1013, %v1014, %v1017
      %vm1019 = vcmask 654336
      %1020 = vst.msk [vmem:[%s676] sm:$0xff] %vm1019, %v1018
      %vm1021 = vcmp.gt.f32.partialorder %v1012, 0.01
      %v1022 = vsub.f32 %v1012, 0.01
      %vm1023 = vcmp.lt.f32.partialorder %v1012, -0.01
      %v1024 = vadd.f32 %v1012, 0.01
      %v1025 = vsel %vm1023, %v1024, 0.0
      %v1026 = vsel %vm1021, %v1022, %v1025
      %1027 = vst.msk [vmem:[%s683] sm:$0xff] %vm1019, %v1026
      %p1028 = scmp.lt.s32.totalorder %s29, 3
      %s1029 = scalar_select %p1028, %s29, 3
      %p1030 = scmp.lt.s32.totalorder %s30, 0
      %s1031 = scalar_select %p1030, %s30, 0
      %s1032 = sadd.s32 %s1031, %s1029
      %s1033 = smul.addr %s1032, 8
      %s1034 = scalar_lea.vmem %s12, %s1033
      %p1035 = scmp.lt.s32.totalorder %s29, 3
      %s1036 = scalar_select %p1035, %s29, 3
      %p1037 = scmp.lt.s32.totalorder %s30, 0
      %s1038 = scalar_select %p1037, %s30, 0
      %s1039 = sadd.s32 %s1038, %s1036
      %s1040 = smul.addr %s1039, 8
      %s1041 = scalar_lea.vmem %s13, %s1040
      // Predicated region
      $region69: #{afnonet_forward.12} parent=67 // pred_check
        %p1042 = pneg %p373
      $region70: #{afnonet_forward.12} parent=67 // pred_check_branch
        %1044 = sbr.rel (%p1042) target = $region72
      $region71: #{afnonet_forward.12} parent=67 // pred_region
        _
      $region72: #{afnonet_forward.12} parent=67 // pred_fallthru
        _
      // Predicated region
      $region73: #{afnonet_forward.12} parent=67 // pred_check
        %p1045 = pneg %p401
      $region74: #{afnonet_forward.12} parent=67 // pred_check_branch
        %1047 = sbr.rel (%p1045) target = $region76
      $region75: #{afnonet_forward.12} parent=67 // pred_region
        _
      $region76: #{afnonet_forward.12} parent=67 // pred_fallthru
        _
    $region68: #{afnonet_forward.12} parent=5 // pred_fallthru
      _
    %p1048 = scmp.le.s32.totalorder 2, %s20
    // Predicated region
    $region77: #{afnonet_forward.12} parent=5 // pred_check
      %p1049 = pneg %p1048
    $region78: #{afnonet_forward.12} parent=5 // pred_check_branch
      %1051 = sbr.rel (%p1049) target = $region80
    $region79: #{afnonet_forward.12} parent=5 // pred_region
      %s1052 = ssub.s32 %s20, 2
      // Predicated region
      $region81: #{afnonet_forward.12} parent=79 // pred_check
        %p1053 = pneg %p379
      $region82: #{afnonet_forward.12} parent=79 // pred_check_branch
        %1055 = sbr.rel (%p1053) target = $region84
      $region83: #{afnonet_forward.12} parent=79 // pred_region
        %p1056 = scmp.lt.s32.totalorder %s31, 3
        %s1057 = scalar_select %p1056, %s31, 3
        %p1058 = scmp.lt.s32.totalorder %s32, 0
        %s1059 = scalar_select %p1058, %s32, 0
        %s1060 = sadd.s32 %s1059, %s1057
        %s1061 = smul.addr %s1060, 8
        %s1062 = scalar_lea.vmem %s12, %s1061
      $region84: #{afnonet_forward.12} parent=79 // pred_fallthru
        _
      // Predicated region
      $region85: #{afnonet_forward.12} parent=79 // pred_check
        %p1063 = pneg %p407
      $region86: #{afnonet_forward.12} parent=79 // pred_check_branch
        %1065 = sbr.rel (%p1063) target = $region88
      $region87: #{afnonet_forward.12} parent=79 // pred_region
        %p1066 = scmp.lt.s32.totalorder %s31, 3
        %s1067 = scalar_select %p1066, %s31, 3
        %p1068 = scmp.lt.s32.totalorder %s32, 0
        %s1069 = scalar_select %p1068, %s32, 0
        %s1070 = sadd.s32 %s1069, %s1067
        %s1071 = smul.addr %s1070, 8
        %s1072 = scalar_lea.vmem %s13, %s1071
      $region88: #{afnonet_forward.12} parent=79 // pred_fallthru
        _
    $region80: #{afnonet_forward.12} parent=5 // pred_fallthru
      _
  $region6: #{afnonet_forward.12} parent=0 // loop_footer
    %s24 = sadd.s32 1, %s20
  $region7: #{afnonet_forward.12} parent=0 // loop_footer_branch
    %19 = sbr.rel target = $region3
  $region8: #{afnonet_forward.12} parent=0 // loop_exit
    _

// kernel: afnonet_forward.19
$region0: #{afnonet_forward.19}
  #allocation0 [shape = 'u32[]', space=smem, size = 0x4, offset = 0x4, fixed_abs, tag = 'smem constant byte address 0x4 - core index']
  #allocation1 [shape = 'u32[144,128]{1,0:T(1,128)}', space=vmem, size = 0x12000, scoped, tag = 'internal scratch']
  #allocation2 [shape = 'f32[128,32]{1,0:T(8,128)}', space=vmem, size = 0x10000, scoped, tag = 'scratch operand']
  %s0 = inlined_call_operand.vmem [shape: f32[128,32], index: 0, kind: input, shape index: {}]
  %s1 = inlined_call_operand.vmem [shape: bf16[32,32], index: 1, kind: input, shape index: {}]
  %s2 = inlined_call_operand.vmem [shape: f32[128,32], index: 2, kind: output, shape index: {}]
  %s3 = sld [smem:[#allocation0]]
  $region26: #{afnonet_forward.19} parent=0
    _
  %s5 = ssub.s32 1, %s3
  %s6 = scalar_select 0, %s5, %s3
  // Predicated region
  $region2: #{afnonet_forward.19} parent=0 // pred_check
    _
  $region3: #{afnonet_forward.19} parent=0 // pred_check_branch
    %8 = sbr.rel (0) target = $region5
  $region4: #{afnonet_forward.19} parent=0 // pred_region
    _
  $region5: #{afnonet_forward.19} parent=0 // pred_fallthru
    _
  // Predicated region
  $region6: #{afnonet_forward.19} parent=0 // pred_check
    _
  $region7: #{afnonet_forward.19} parent=0 // pred_check_branch
    %10 = sbr.rel (0) target = $region9
  $region8: #{afnonet_forward.19} parent=0 // pred_region
    _
  $region9: #{afnonet_forward.19} parent=0 // pred_fallthru
    _
  %p12 = scmp.eq.s32.totalorder 0, 0
  // Predicated region
  $region10: #{afnonet_forward.19} parent=0 // pred_check
    %p13 = pneg %p12
  $region11: #{afnonet_forward.19} parent=0 // pred_check_branch
    %15 = sbr.rel (%p13) target = $region13
  $region12: #{afnonet_forward.19} parent=0 // pred_region
    %vm16 = vcmask 261120
    %17 = vst.msk [vmem:[#allocation2] sm:$0xff] %vm16, 0.0
    %18 = vst.msk [vmem:[#allocation2 + $0x8] sm:$0xff] %vm16, 0.0
    %19 = vst.msk [vmem:[#allocation2 + $0x10] sm:$0xff] %vm16, 0.0
    %20 = vst.msk [vmem:[#allocation2 + $0x18] sm:$0xff] %vm16, 0.0
    %21 = vst.msk [vmem:[#allocation2 + $0x20] sm:$0xff] %vm16, 0.0
    %22 = vst.msk [vmem:[#allocation2 + $0x28] sm:$0xff] %vm16, 0.0
    %23 = vst.msk [vmem:[#allocation2 + $0x30] sm:$0xff] %vm16, 0.0
    %24 = vst.msk [vmem:[#allocation2 + $0x38] sm:$0xff] %vm16, 0.0
    %25 = vst.msk [vmem:[#allocation2 + $0x40] sm:$0xff] %vm16, 0.0
    %26 = vst.msk [vmem:[#allocation2 + $0x48] sm:$0xff] %vm16, 0.0
    %27 = vst.msk [vmem:[#allocation2 + $0x50] sm:$0xff] %vm16, 0.0
    %28 = vst.msk [vmem:[#allocation2 + $0x58] sm:$0xff] %vm16, 0.0
    %29 = vst.msk [vmem:[#allocation2 + $0x60] sm:$0xff] %vm16, 0.0
    %30 = vst.msk [vmem:[#allocation2 + $0x68] sm:$0xff] %vm16, 0.0
    %31 = vst.msk [vmem:[#allocation2 + $0x70] sm:$0xff] %vm16, 0.0
    %32 = vst.msk [vmem:[#allocation2 + $0x78] sm:$0xff] %vm16, 0.0
  $region13: #{afnonet_forward.19} parent=0 // pred_fallthru
    _
  %v33 = vld [vmem:[#allocation2] sm:$0xff]
  %v34 = vld [vmem:[#allocation2 + $0x8] sm:$0xff]
  %v35 = vld [vmem:[#allocation2 + $0x10] sm:$0xff]
  %v36 = vld [vmem:[#allocation2 + $0x18] sm:$0xff]
  %v37 = vld [vmem:[#allocation2 + $0x20] sm:$0xff]
  %v38 = vld [vmem:[#allocation2 + $0x28] sm:$0xff]
  %v39 = vld [vmem:[#allocation2 + $0x30] sm:$0xff]
  %v40 = vld [vmem:[#allocation2 + $0x38] sm:$0xff]
  %v41 = vld [vmem:[#allocation2 + $0x40] sm:$0xff]
  %v42 = vld [vmem:[#allocation2 + $0x48] sm:$0xff]
  %v43 = vld [vmem:[#allocation2 + $0x50] sm:$0xff]
  %v44 = vld [vmem:[#allocation2 + $0x58] sm:$0xff]
  %v45 = vld [vmem:[#allocation2 + $0x60] sm:$0xff]
  %v46 = vld [vmem:[#allocation2 + $0x68] sm:$0xff]
  %v47 = vld [vmem:[#allocation2 + $0x70] sm:$0xff]
  %v48 = vld [vmem:[#allocation2 + $0x78] sm:$0xff]
  %v49 = vld [vmem:[%s0] sm:$0xff]
  %v50 = vld [vmem:[%s0 + $0x8] sm:$0xff]
  %v51 = vld [vmem:[%s0 + $0x10] sm:$0xff]
  %v52 = vld [vmem:[%s0 + $0x18] sm:$0xff]
  %v53 = vld [vmem:[%s0 + $0x20] sm:$0xff]
  %v54 = vld [vmem:[%s0 + $0x28] sm:$0xff]
  %v55 = vld [vmem:[%s0 + $0x30] sm:$0xff]
  %v56 = vld [vmem:[%s0 + $0x38] sm:$0xff]
  %v57 = vld [vmem:[%s0 + $0x40] sm:$0xff]
  %v58 = vld [vmem:[%s0 + $0x48] sm:$0xff]
  %v59 = vld [vmem:[%s0 + $0x50] sm:$0xff]
  %v60 = vld [vmem:[%s0 + $0x58] sm:$0xff]
  %v61 = vld [vmem:[%s0 + $0x60] sm:$0xff]
  %v62 = vld [vmem:[%s0 + $0x68] sm:$0xff]
  %v63 = vld [vmem:[%s0 + $0x70] sm:$0xff]
  %v64 = vld [vmem:[%s0 + $0x78] sm:$0xff]
  %v65 = vpack.c.bf16 %v50, %v49
  %v66 = vpack.c.bf16 %v52, %v51
  %v67 = vpack.c.bf16 %v54, %v53
  %v68 = vpack.c.bf16 %v56, %v55
  %v69 = vpack.c.bf16 %v58, %v57
  %v70 = vpack.c.bf16 %v60, %v59
  %v71 = vpack.c.bf16 %v62, %v61
  %v72 = vpack.c.bf16 %v64, %v63
  %v73 = vld [vmem:[%s1] sm:$0xf]
  %v74 = vld [vmem:[%s1 + $0x4] sm:$0xf]
  %v75 = vld [vmem:[%s1 + $0x8] sm:$0xf]
  %v76 = vld [vmem:[%s1 + $0xc] sm:$0xf]
  %v81 = vunpack.c.l.b16 %v73
  %v82 = vunpack.c.l.b16 %v74
  %v83 = vunpack.c.l.b16 %v75
  %v84 = vunpack.c.l.b16 %v76
  %v85 = vpack.c.b16 %v82, %v81
  %v86 = vpack.c.b16 %v84, %v83
  %vm89 = vcmask 261120
  %v91 = vsel %vm89, %v65, 0
  %v94 = vsel %vm89, %v66, 0
  %v97 = vsel %vm89, %v67, 0
  %v100 = vsel %vm89, %v68, 0
  %v103 = vsel %vm89, %v69, 0
  %v106 = vsel %vm89, %v70, 0
  %v109 = vsel %vm89, %v71, 0
  %v112 = vsel %vm89, %v72, 0
  %114 = vmatprep.subr.bf16.mxu0 0
  %115 = vmatpush1.bf16.msra.mxu0 %v85
  %116 = vmatprep.subr.bf16.mxu0 0
  %117 = vmatpush1.bf16.msra.mxu0 %v86
  %118 = vmatprep.subr.bf16.mxu0 0
  %119 = vmatpush1.bf16.msra.mxu0 0
  %120 = vmatprep.subr.bf16.mxu0 0
  %121 = vmatpush1.bf16.msra.mxu0 0
  %122 = vmatprep.subr.bf16.mxu0 0
  %123 = vmatpush1.bf16.msra.mxu0 0
  %124 = vmatprep.subr.bf16.mxu0 0
  %125 = vmatpush1.bf16.msra.mxu0 0
  %126 = vmatprep.subr.bf16.mxu0 0
  %127 = vmatpush1.bf16.msra.mxu0 0
  %128 = vmatprep.subr.bf16.mxu0 0
  %129 = vmatpush1.bf16.msra.mxu0 0
  %130 = vmatprep.subr.bf16.mxu0 0
  %131 = vmatpush1.bf16.msra.mxu0 0
  %132 = vmatprep.subr.bf16.mxu0 0
  %133 = vmatpush1.bf16.msra.mxu0 0
  %134 = vmatprep.subr.bf16.mxu0 0
  %135 = vmatpush1.bf16.msra.mxu0 0
  %136 = vmatprep.subr.bf16.mxu0 0
  %137 = vmatpush1.bf16.msra.mxu0 0
  %138 = vmatprep.subr.bf16.mxu0 0
  %139 = vmatpush1.bf16.msra.mxu0 0
  %140 = vmatprep.subr.bf16.mxu0 0
  %141 = vmatpush1.bf16.msra.mxu0 0
  %142 = vmatprep.subr.bf16.mxu0 0
  %143 = vmatpush1.bf16.msra.mxu0 0
  %144 = vmatprep.subr.bf16.mxu0 0
  %145 = vmatpush1.bf16.msra.mxu0 0
  %146 = vmatprep.mubr.bf16.mxu0 0
  %147 = vmatmul.mubr.bf16.gmra.mrb[0].mxu0 %v91
  %v148 = vpop.f32.mrb[0].mxu0
  %v149 = vadd.f32 0.0, %v148
  %v150 = vpop.f32.mrb[0].mxu0
  %v151 = vpop.f32.mrb[0].mxu0
  %v152 = vadd.f32 0.0, %v151
  %v153 = vpop.f32.mrb[0].mxu0
  %154 = vmatprep.mubr.bf16.mxu0 0
  %155 = vmatmul.mubr.bf16.gmra.mrb[0].mxu0 %v94
  %v156 = vpop.f32.mrb[0].mxu0
  %v157 = vadd.f32 0.0, %v156
  %v158 = vpop.f32.mrb[0].mxu0
  %v159 = vpop.f32.mrb[0].mxu0
  %v160 = vadd.f32 0.0, %v159
  %v161 = vpop.f32.mrb[0].mxu0
  %162 = vmatprep.mubr.bf16.mxu0 0
  %163 = vmatmul.mubr.bf16.gmra.mrb[0].mxu0 %v97
  %v164 = vpop.f32.mrb[0].mxu0
  %v165 = vadd.f32 0.0, %v164
  %v166 = vpop.f32.mrb[0].mxu0
  %v167 = vpop.f32.mrb[0].mxu0
  %v168 = vadd.f32 0.0, %v167
  %v169 = vpop.f32.mrb[0].mxu0
  %170 = vmatprep.mubr.bf16.mxu0 0
  %171 = vmatmul.mubr.bf16.gmra.mrb[0].mxu0 %v100
  %v172 = vpop.f32.mrb[0].mxu0
  %v173 = vadd.f32 0.0, %v172
  %v174 = vpop.f32.mrb[0].mxu0
  %v175 = vpop.f32.mrb[0].mxu0
  %v176 = vadd.f32 0.0, %v175
  %v177 = vpop.f32.mrb[0].mxu0
  %178 = vmatprep.mubr.bf16.mxu0 0
  %179 = vmatmul.mubr.bf16.gmra.mrb[0].mxu0 %v103
  %v180 = vpop.f32.mrb[0].mxu0
  %v181 = vadd.f32 0.0, %v180
  %v182 = vpop.f32.mrb[0].mxu0
  %v183 = vpop.f32.mrb[0].mxu0
  %v184 = vadd.f32 0.0, %v183
  %v185 = vpop.f32.mrb[0].mxu0
  %186 = vmatprep.mubr.bf16.mxu0 0
  %187 = vmatmul.mubr.bf16.gmra.mrb[0].mxu0 %v106
  %v188 = vpop.f32.mrb[0].mxu0
  %v189 = vadd.f32 0.0, %v188
  %v190 = vpop.f32.mrb[0].mxu0
  %v191 = vpop.f32.mrb[0].mxu0
  %v192 = vadd.f32 0.0, %v191
  %v193 = vpop.f32.mrb[0].mxu0
  %194 = vmatprep.mubr.bf16.mxu0 0
  %195 = vmatmul.mubr.bf16.gmra.mrb[0].mxu0 %v109
  %v196 = vpop.f32.mrb[0].mxu0
  %v197 = vadd.f32 0.0, %v196
  %v198 = vpop.f32.mrb[0].mxu0
  %v199 = vpop.f32.mrb[0].mxu0
  %v200 = vadd.f32 0.0, %v199
  %v201 = vpop.f32.mrb[0].mxu0
  %202 = vmatprep.mubr.bf16.mxu0 0
  %203 = vmatmul.mubr.bf16.gmra.mrb[0].mxu0 %v112
  %v204 = vpop.f32.mrb[0].mxu0
  %v205 = vadd.f32 0.0, %v204
  %v206 = vpop.f32.mrb[0].mxu0
  %v207 = vpop.f32.mrb[0].mxu0
  %v208 = vadd.f32 0.0, %v207
  %v209 = vpop.f32.mrb[0].mxu0
  %210 = vdwg.mxu0
  %v211 = vadd.f32 %v33, %v149
  %v212 = vadd.f32 %v34, %v152
  %v213 = vadd.f32 %v35, %v157
  %v214 = vadd.f32 %v36, %v160
  %v215 = vadd.f32 %v37, %v165
  %v216 = vadd.f32 %v38, %v168
  %v217 = vadd.f32 %v39, %v173
  %v218 = vadd.f32 %v40, %v176
  %v219 = vadd.f32 %v41, %v181
  %v220 = vadd.f32 %v42, %v184
  %v221 = vadd.f32 %v43, %v189
  %v222 = vadd.f32 %v44, %v192
  %v223 = vadd.f32 %v45, %v197
  %v224 = vadd.f32 %v46, %v200
  %v225 = vadd.f32 %v47, %v205
  %v226 = vadd.f32 %v48, %v208
  %227 = vst.msk [vmem:[#allocation2] sm:$0xff] %vm89, %v211
  %228 = vst.msk [vmem:[#allocation2 + $0x8] sm:$0xff] %vm89, %v212
  %229 = vst.msk [vmem:[#allocation2 + $0x10] sm:$0xff] %vm89, %v213
  %230 = vst.msk [vmem:[#allocation2 + $0x18] sm:$0xff] %vm89, %v214
  %231 = vst.msk [vmem:[#allocation2 + $0x20] sm:$0xff] %vm89, %v215
  %232 = vst.msk [vmem:[#allocation2 + $0x28] sm:$0xff] %vm89, %v216
  %233 = vst.msk [vmem:[#allocation2 + $0x30] sm:$0xff] %vm89, %v217
  %234 = vst.msk [vmem:[#allocation2 + $0x38] sm:$0xff] %vm89, %v218
  %235 = vst.msk [vmem:[#allocation2 + $0x40] sm:$0xff] %vm89, %v219
  %236 = vst.msk [vmem:[#allocation2 + $0x48] sm:$0xff] %vm89, %v220
  %237 = vst.msk [vmem:[#allocation2 + $0x50] sm:$0xff] %vm89, %v221
  %238 = vst.msk [vmem:[#allocation2 + $0x58] sm:$0xff] %vm89, %v222
  %239 = vst.msk [vmem:[#allocation2 + $0x60] sm:$0xff] %vm89, %v223
  %240 = vst.msk [vmem:[#allocation2 + $0x68] sm:$0xff] %vm89, %v224
  %241 = vst.msk [vmem:[#allocation2 + $0x70] sm:$0xff] %vm89, %v225
  %242 = vst.msk [vmem:[#allocation2 + $0x78] sm:$0xff] %vm89, %v226
  // Predicated region
  $region14: #{afnonet_forward.19} parent=0 // pred_check
    %p243 = pneg %p12
  $region15: #{afnonet_forward.19} parent=0 // pred_check_branch
    %245 = sbr.rel (%p243) target = $region17
  $region16: #{afnonet_forward.19} parent=0 // pred_region
    %v246 = vld [vmem:[#allocation2] sm:$0xff]
    %v247 = vld [vmem:[#allocation2 + $0x8] sm:$0xff]
    %v248 = vld [vmem:[#allocation2 + $0x10] sm:$0xff]
    %v249 = vld [vmem:[#allocation2 + $0x18] sm:$0xff]
    %v250 = vld [vmem:[#allocation2 + $0x20] sm:$0xff]
    %v251 = vld [vmem:[#allocation2 + $0x28] sm:$0xff]
    %v252 = vld [vmem:[#allocation2 + $0x30] sm:$0xff]
    %v253 = vld [vmem:[#allocation2 + $0x38] sm:$0xff]
    %v254 = vld [vmem:[#allocation2 + $0x40] sm:$0xff]
    %v255 = vld [vmem:[#allocation2 + $0x48] sm:$0xff]
    %v256 = vld [vmem:[#allocation2 + $0x50] sm:$0xff]
    %v257 = vld [vmem:[#allocation2 + $0x58] sm:$0xff]
    %v258 = vld [vmem:[#allocation2 + $0x60] sm:$0xff]
    %v259 = vld [vmem:[#allocation2 + $0x68] sm:$0xff]
    %v260 = vld [vmem:[#allocation2 + $0x70] sm:$0xff]
    %v261 = vld [vmem:[#allocation2 + $0x78] sm:$0xff]
    %262 = vst.msk [vmem:[%s2] sm:$0xff] %vm89, %v246
    %263 = vst.msk [vmem:[%s2 + $0x8] sm:$0xff] %vm89, %v247
    %264 = vst.msk [vmem:[%s2 + $0x10] sm:$0xff] %vm89, %v248
    %265 = vst.msk [vmem:[%s2 + $0x18] sm:$0xff] %vm89, %v249
    %266 = vst.msk [vmem:[%s2 + $0x20] sm:$0xff] %vm89, %v250
    %267 = vst.msk [vmem:[%s2 + $0x28] sm:$0xff] %vm89, %v251
    %268 = vst.msk [vmem:[%s2 + $0x30] sm:$0xff] %vm89, %v252
    %269 = vst.msk [vmem:[%s2 + $0x38] sm:$0xff] %vm89, %v253
    %270 = vst.msk [vmem:[%s2 + $0x40] sm:$0xff] %vm89, %v254
    %271 = vst.msk [vmem:[%s2 + $0x48] sm:$0xff] %vm89, %v255
    %272 = vst.msk [vmem:[%s2 + $0x50] sm:$0xff] %vm89, %v256
    %273 = vst.msk [vmem:[%s2 + $0x58] sm:$0xff] %vm89, %v257
    %274 = vst.msk [vmem:[%s2 + $0x60] sm:$0xff] %vm89, %v258
    %275 = vst.msk [vmem:[%s2 + $0x68] sm:$0xff] %vm89, %v259
    %276 = vst.msk [vmem:[%s2 + $0x70] sm:$0xff] %vm89, %v260
    %277 = vst.msk [vmem:[%s2 + $0x78] sm:$0xff] %vm89, %v261
  $region17: #{afnonet_forward.19} parent=0 // pred_fallthru
    _
  // Predicated region
  $region18: #{afnonet_forward.19} parent=0 // pred_check
    _
  $region19: #{afnonet_forward.19} parent=0 // pred_check_branch
    %279 = sbr.rel (0) target = $region21
  $region20: #{afnonet_forward.19} parent=0 // pred_region
    _
  $region21: #{afnonet_forward.19} parent=0 // pred_fallthru
    _
  // Predicated region
  $region22: #{afnonet_forward.19} parent=0 // pred_check
    _
  $region23: #{afnonet_forward.19} parent=0 // pred_check_branch
    %281 = sbr.rel (0) target = $region25
  $region24: #{afnonet_forward.19} parent=0 // pred_region
    _
  $region25: #{afnonet_forward.19} parent=0 // pred_fallthru
    _

// kernel: afnonet_forward.14
$region0: #{afnonet_forward.14}
  #allocation0 [shape = 'u32[]', space=smem, size = 0x4, offset = 0x4, fixed_abs, tag = 'smem constant byte address 0x4 - core index']
  #allocation1 [shape = 'u32[144,128]{1,0:T(1,128)}', space=vmem, size = 0x12000, scoped, tag = 'internal scratch']
  %s0 = inlined_call_operand.vmem [shape: f32[128,32], index: 0, kind: input, shape index: {}]
  %s1 = inlined_call_operand.vmem [shape: bf16[32,128], index: 1, kind: input, shape index: {}]
  %s2 = inlined_call_operand.vmem [shape: f32[1,128], index: 2, kind: input, shape index: {}]
  %s3 = inlined_call_operand.vmem [shape: bf16[128,32], index: 3, kind: input, shape index: {}]
  %s4 = inlined_call_operand.vmem [shape: f32[1,32], index: 4, kind: input, shape index: {}]
  %s5 = inlined_call_operand.vmem [shape: f32[128,32], index: 5, kind: input, shape index: {}]
  %s6 = inlined_call_operand.vmem [shape: f32[128,32], index: 6, kind: output, shape index: {}]
  %s7 = sld [smem:[#allocation0]]
  $region34: #{afnonet_forward.14} parent=0
    _
  %s9 = ssub.s32 1, %s7
  %s10 = scalar_select 0, %s9, %s7
  // Predicated region
  $region2: #{afnonet_forward.14} parent=0 // pred_check
    _
  $region3: #{afnonet_forward.14} parent=0 // pred_check_branch
    %12 = sbr.rel (0) target = $region5
  $region4: #{afnonet_forward.14} parent=0 // pred_region
    _
  $region5: #{afnonet_forward.14} parent=0 // pred_fallthru
    _
  // Predicated region
  $region6: #{afnonet_forward.14} parent=0 // pred_check
    _
  $region7: #{afnonet_forward.14} parent=0 // pred_check_branch
    %14 = sbr.rel (0) target = $region9
  $region8: #{afnonet_forward.14} parent=0 // pred_region
    _
  $region9: #{afnonet_forward.14} parent=0 // pred_fallthru
    _
  // Predicated region
  $region10: #{afnonet_forward.14} parent=0 // pred_check
    _
  $region11: #{afnonet_forward.14} parent=0 // pred_check_branch
    %16 = sbr.rel (0) target = $region13
  $region12: #{afnonet_forward.14} parent=0 // pred_region
    _
  $region13: #{afnonet_forward.14} parent=0 // pred_fallthru
    _
  // Predicated region
  $region14: #{afnonet_forward.14} parent=0 // pred_check
    _
  $region15: #{afnonet_forward.14} parent=0 // pred_check_branch
    %18 = sbr.rel (0) target = $region17
  $region16: #{afnonet_forward.14} parent=0 // pred_region
    _
  $region17: #{afnonet_forward.14} parent=0 // pred_fallthru
    _
  // Predicated region
  $region18: #{afnonet_forward.14} parent=0 // pred_check
    _
  $region19: #{afnonet_forward.14} parent=0 // pred_check_branch
    %20 = sbr.rel (0) target = $region21
  $region20: #{afnonet_forward.14} parent=0 // pred_region
    _
  $region21: #{afnonet_forward.14} parent=0 // pred_fallthru
    _
  // Predicated region
  $region22: #{afnonet_forward.14} parent=0 // pred_check
    _
  $region23: #{afnonet_forward.14} parent=0 // pred_check_branch
    %22 = sbr.rel (0) target = $region25
  $region24: #{afnonet_forward.14} parent=0 // pred_region
    _
  $region25: #{afnonet_forward.14} parent=0 // pred_fallthru
    _
  %v24 = vld [vmem:[%s0] sm:$0xff]
  %v25 = vld [vmem:[%s0 + $0x8] sm:$0xff]
  %v26 = vld [vmem:[%s0 + $0x10] sm:$0xff]
  %v27 = vld [vmem:[%s0 + $0x18] sm:$0xff]
  %v28 = vld [vmem:[%s0 + $0x20] sm:$0xff]
  %v29 = vld [vmem:[%s0 + $0x28] sm:$0xff]
  %v30 = vld [vmem:[%s0 + $0x30] sm:$0xff]
  %v31 = vld [vmem:[%s0 + $0x38] sm:$0xff]
  %v32 = vld [vmem:[%s0 + $0x40] sm:$0xff]
  %v33 = vld [vmem:[%s0 + $0x48] sm:$0xff]
  %v34 = vld [vmem:[%s0 + $0x50] sm:$0xff]
  %v35 = vld [vmem:[%s0 + $0x58] sm:$0xff]
  %v36 = vld [vmem:[%s0 + $0x60] sm:$0xff]
  %v37 = vld [vmem:[%s0 + $0x68] sm:$0xff]
  %v38 = vld [vmem:[%s0 + $0x70] sm:$0xff]
  %v39 = vld [vmem:[%s0 + $0x78] sm:$0xff]
  %v40 = vpack.c.bf16 %v25, %v24
  %v41 = vpack.c.bf16 %v27, %v26
  %v42 = vpack.c.bf16 %v29, %v28
  %v43 = vpack.c.bf16 %v31, %v30
  %v44 = vpack.c.bf16 %v33, %v32
  %v45 = vpack.c.bf16 %v35, %v34
  %v46 = vpack.c.bf16 %v37, %v36
  %v47 = vpack.c.bf16 %v39, %v38
  %v48 = vld [vmem:[%s1] sm:$0xf]
  %v49 = vld [vmem:[%s1 + $0x4] sm:$0xf]
  %v50 = vld [vmem:[%s1 + $0x8] sm:$0xf]
  %v51 = vld [vmem:[%s1 + $0xc] sm:$0xf]
  %v52 = vld [vmem:[%s2] sm:$0x1]
  %v54 = vlaneseq
  %v55 = vshrl.u32 %v54, 7
  %v56 = vsub.s32 0, %v55
  %v57 = vrot.slane %v52, %v56
  %v63 = vunpack.c.l.b16 %v48
  %v64 = vunpack.c.l.b16 %v49
  %v65 = vunpack.c.l.b16 %v50
  %v66 = vunpack.c.l.b16 %v51
  %v67 = vpack.c.b16 %v64, %v63
  %v68 = vpack.c.b16 %v66, %v65
  %vm71 = vcmask 261120
  %v73 = vsel %vm71, %v40, 0
  %v76 = vsel %vm71, %v41, 0
  %v79 = vsel %vm71, %v42, 0
  %v82 = vsel %vm71, %v43, 0
  %v85 = vsel %vm71, %v44, 0
  %v88 = vsel %vm71, %v45, 0
  %v91 = vsel %vm71, %v46, 0
  %v94 = vsel %vm71, %v47, 0
  %96 = vmatprep.subr.bf16.mxu0 0
  %97 = vmatpush1.bf16.msra.mxu0 %v67
  %98 = vmatprep.subr.bf16.mxu0 0
  %99 = vmatpush1.bf16.msra.mxu0 %v68
  %100 = vmatprep.subr.bf16.mxu0 0
  %101 = vmatpush1.bf16.msra.mxu0 0
  %102 = vmatprep.subr.bf16.mxu0 0
  %103 = vmatpush1.bf16.msra.mxu0 0
  %104 = vmatprep.subr.bf16.mxu0 0
  %105 = vmatpush1.bf16.msra.mxu0 0
  %106 = vmatprep.subr.bf16.mxu0 0
  %107 = vmatpush1.bf16.msra.mxu0 0
  %108 = vmatprep.subr.bf16.mxu0 0
  %109 = vmatpush1.bf16.msra.mxu0 0
  %110 = vmatprep.subr.bf16.mxu0 0
  %111 = vmatpush1.bf16.msra.mxu0 0
  %112 = vmatprep.subr.bf16.mxu0 0
  %113 = vmatpush1.bf16.msra.mxu0 0
  %114 = vmatprep.subr.bf16.mxu0 0
  %115 = vmatpush1.bf16.msra.mxu0 0
  %116 = vmatprep.subr.bf16.mxu0 0
  %117 = vmatpush1.bf16.msra.mxu0 0
  %118 = vmatprep.subr.bf16.mxu0 0
  %119 = vmatpush1.bf16.msra.mxu0 0
  %120 = vmatprep.subr.bf16.mxu0 0
  %121 = vmatpush1.bf16.msra.mxu0 0
  %122 = vmatprep.subr.bf16.mxu0 0
  %123 = vmatpush1.bf16.msra.mxu0 0
  %124 = vmatprep.subr.bf16.mxu0 0
  %125 = vmatpush1.bf16.msra.mxu0 0
  %126 = vmatprep.subr.bf16.mxu0 0
  %127 = vmatpush1.bf16.msra.mxu0 0
  %128 = vmatprep.mubr.bf16.mxu0 0
  %129 = vmatmul.mubr.bf16.gmra.mrb[0].mxu0 %v73
  %v130 = vpop.f32.mrb[0].mxu0
  %v131 = vadd.f32 %v57, %v130
  %v132 = vpop.f32.mrb[0].mxu0
  %v133 = vpop.f32.mrb[0].mxu0
  %v134 = vadd.f32 %v57, %v133
  %v135 = vpop.f32.mrb[0].mxu0
  %136 = vmatprep.mubr.bf16.mxu0 0
  %137 = vmatmul.mubr.bf16.gmra.mrb[0].mxu0 %v76
  %v138 = vpop.f32.mrb[0].mxu0
  %v139 = vadd.f32 %v57, %v138
  %v140 = vpop.f32.mrb[0].mxu0
  %v141 = vpop.f32.mrb[0].mxu0
  %v142 = vadd.f32 %v57, %v141
  %v143 = vpop.f32.mrb[0].mxu0
  %144 = vmatprep.mubr.bf16.mxu0 0
  %145 = vmatmul.mubr.bf16.gmra.mrb[0].mxu0 %v79
  %v146 = vpop.f32.mrb[0].mxu0
  %v147 = vadd.f32 %v57, %v146
  %v148 = vpop.f32.mrb[0].mxu0
  %v149 = vpop.f32.mrb[0].mxu0
  %v150 = vadd.f32 %v57, %v149
  %v151 = vpop.f32.mrb[0].mxu0
  %152 = vmatprep.mubr.bf16.mxu0 0
  %153 = vmatmul.mubr.bf16.gmra.mrb[0].mxu0 %v82
  %v154 = vpop.f32.mrb[0].mxu0
  %v155 = vadd.f32 %v57, %v154
  %v156 = vpop.f32.mrb[0].mxu0
  %v157 = vpop.f32.mrb[0].mxu0
  %v158 = vadd.f32 %v57, %v157
  %v159 = vpop.f32.mrb[0].mxu0
  %160 = vmatprep.mubr.bf16.mxu0 0
  %161 = vmatmul.mubr.bf16.gmra.mrb[0].mxu0 %v85
  %v162 = vpop.f32.mrb[0].mxu0
  %v163 = vadd.f32 %v57, %v162
  %v164 = vpop.f32.mrb[0].mxu0
  %v165 = vpop.f32.mrb[0].mxu0
  %v166 = vadd.f32 %v57, %v165
  %v167 = vpop.f32.mrb[0].mxu0
  %168 = vmatprep.mubr.bf16.mxu0 0
  %169 = vmatmul.mubr.bf16.gmra.mrb[0].mxu0 %v88
  %v170 = vpop.f32.mrb[0].mxu0
  %v171 = vadd.f32 %v57, %v170
  %v172 = vpop.f32.mrb[0].mxu0
  %v173 = vpop.f32.mrb[0].mxu0
  %v174 = vadd.f32 %v57, %v173
  %v175 = vpop.f32.mrb[0].mxu0
  %176 = vmatprep.mubr.bf16.mxu0 0
  %177 = vmatmul.mubr.bf16.gmra.mrb[0].mxu0 %v91
  %v178 = vpop.f32.mrb[0].mxu0
  %v179 = vadd.f32 %v57, %v178
  %v180 = vpop.f32.mrb[0].mxu0
  %v181 = vpop.f32.mrb[0].mxu0
  %v182 = vadd.f32 %v57, %v181
  %v183 = vpop.f32.mrb[0].mxu0
  %184 = vmatprep.mubr.bf16.mxu0 0
  %185 = vmatmul.mubr.bf16.gmra.mrb[0].mxu0 %v94
  %v186 = vpop.f32.mrb[0].mxu0
  %v187 = vadd.f32 %v57, %v186
  %v188 = vpop.f32.mrb[0].mxu0
  %v189 = vpop.f32.mrb[0].mxu0
  %v190 = vadd.f32 %v57, %v189
  %v191 = vpop.f32.mrb[0].mxu0
  %192 = vdwg.mxu0
  %v193 = vmul.f32 %v131, 0.5
  %v194 = vmul.f32 %v134, 0.5
  %v195 = vmul.f32 %v139, 0.5
  %v196 = vmul.f32 %v142, 0.5
  %v197 = vmul.f32 %v147, 0.5
  %v198 = vmul.f32 %v150, 0.5
  %v199 = vmul.f32 %v155, 0.5
  %v200 = vmul.f32 %v158, 0.5
  %v201 = vmul.f32 %v163, 0.5
  %v202 = vmul.f32 %v166, 0.5
  %v203 = vmul.f32 %v171, 0.5
  %v204 = vmul.f32 %v174, 0.5
  %v205 = vmul.f32 %v179, 0.5
  %v206 = vmul.f32 %v182, 0.5
  %v207 = vmul.f32 %v187, 0.5
  %v208 = vmul.f32 %v190, 0.5
  %v209 = vmul.f32 %v131, 0.70710677
  %v210 = vmul.f32 %v134, 0.70710677
  %v211 = vmul.f32 %v139, 0.70710677
  %v212 = vmul.f32 %v142, 0.70710677
  %v213 = vmul.f32 %v147, 0.70710677
  %v214 = vmul.f32 %v150, 0.70710677
  %v215 = vmul.f32 %v155, 0.70710677
  %v216 = vmul.f32 %v158, 0.70710677
  %v217 = vmul.f32 %v163, 0.70710677
  %v218 = vmul.f32 %v166, 0.70710677
  %v219 = vmul.f32 %v171, 0.70710677
  %v220 = vmul.f32 %v174, 0.70710677
  %v221 = vmul.f32 %v179, 0.70710677
  %v222 = vmul.f32 %v182, 0.70710677
  %v223 = vmul.f32 %v187, 0.70710677
  %v224 = vmul.f32 %v190, 0.70710677
  %vm225 = vcmp.ge.f32.partialorder %v209, 0.0
  %vm226 = vcmp.ge.f32.partialorder %v210, 0.0
  %vm227 = vcmp.ge.f32.partialorder %v211, 0.0
  %vm228 = vcmp.ge.f32.partialorder %v212, 0.0
  %vm229 = vcmp.ge.f32.partialorder %v213, 0.0
  %vm230 = vcmp.ge.f32.partialorder %v214, 0.0
  %vm231 = vcmp.ge.f32.partialorder %v215, 0.0
  %vm232 = vcmp.ge.f32.partialorder %v216, 0.0
  %vm233 = vcmp.ge.f32.partialorder %v217, 0.0
  %vm234 = vcmp.ge.f32.partialorder %v218, 0.0
  %vm235 = vcmp.ge.f32.partialorder %v219, 0.0
  %vm236 = vcmp.ge.f32.partialorder %v220, 0.0
  %vm237 = vcmp.ge.f32.partialorder %v221, 0.0
  %vm238 = vcmp.ge.f32.partialorder %v222, 0.0
  %vm239 = vcmp.ge.f32.partialorder %v223, 0.0
  %vm240 = vcmp.ge.f32.partialorder %v224, 0.0
  %v241 = vsel %vm225, 1.0, -1.0
  %v242 = vsel %vm226, 1.0, -1.0
  %v243 = vsel %vm227, 1.0, -1.0
  %v244 = vsel %vm228, 1.0, -1.0
  %v245 = vsel %vm229, 1.0, -1.0
  %v246 = vsel %vm230, 1.0, -1.0
  %v247 = vsel %vm231, 1.0, -1.0
  %v248 = vsel %vm232, 1.0, -1.0
  %v249 = vsel %vm233, 1.0, -1.0
  %v250 = vsel %vm234, 1.0, -1.0
  %v251 = vsel %vm235, 1.0, -1.0
  %v252 = vsel %vm236, 1.0, -1.0
  %v253 = vsel %vm237, 1.0, -1.0
  %v254 = vsel %vm238, 1.0, -1.0
  %v255 = vsel %vm239, 1.0, -1.0
  %v256 = vsel %vm240, 1.0, -1.0
  %v257 = vand.u32 2147483647, %v209
  %v258 = vand.u32 2147483647, %v210
  %v259 = vand.u32 2147483647, %v211
  %v260 = vand.u32 2147483647, %v212
  %v261 = vand.u32 2147483647, %v213
  %v262 = vand.u32 2147483647, %v214
  %v263 = vand.u32 2147483647, %v215
  %v264 = vand.u32 2147483647, %v216
  %v265 = vand.u32 2147483647, %v217
  %v266 = vand.u32 2147483647, %v218
  %v267 = vand.u32 2147483647, %v219
  %v268 = vand.u32 2147483647, %v220
  %v269 = vand.u32 2147483647, %v221
  %v270 = vand.u32 2147483647, %v222
  %v271 = vand.u32 2147483647, %v223
  %v272 = vand.u32 2147483647, %v224
  %v273 = vmul.f32 %v257, 0.3275911
  %v274 = vmul.f32 %v258, 0.3275911
  %v275 = vmul.f32 %v259, 0.3275911
  %v276 = vmul.f32 %v260, 0.3275911
  %v277 = vmul.f32 %v261, 0.3275911
  %v278 = vmul.f32 %v262, 0.3275911
  %v279 = vmul.f32 %v263, 0.3275911
  %v280 = vmul.f32 %v264, 0.3275911
  %v281 = vmul.f32 %v265, 0.3275911
  %v282 = vmul.f32 %v266, 0.3275911
  %v283 = vmul.f32 %v267, 0.3275911
  %v284 = vmul.f32 %v268, 0.3275911
  %v285 = vmul.f32 %v269, 0.3275911
  %v286 = vmul.f32 %v270, 0.3275911
  %v287 = vmul.f32 %v271, 0.3275911
  %v288 = vmul.f32 %v272, 0.3275911
  %v289 = vadd.f32 %v273, 1.0
  %v290 = vadd.f32 %v274, 1.0
  %v291 = vadd.f32 %v275, 1.0
  %v292 = vadd.f32 %v276, 1.0
  %v293 = vadd.f32 %v277, 1.0
  %v294 = vadd.f32 %v278, 1.0
  %v295 = vadd.f32 %v279, 1.0
  %v296 = vadd.f32 %v280, 1.0
  %v297 = vadd.f32 %v281, 1.0
  %v298 = vadd.f32 %v282, 1.0
  %v299 = vadd.f32 %v283, 1.0
  %v300 = vadd.f32 %v284, 1.0
  %v301 = vadd.f32 %v285, 1.0
  %v302 = vadd.f32 %v286, 1.0
  %v303 = vadd.f32 %v287, 1.0
  %v304 = vadd.f32 %v288, 1.0
  %v305 = vrcp.pop %v289
  %v306 = vmul.f32 1.0, %v305
  %v307 = vrcp.pop %v290
  %v308 = vmul.f32 1.0, %v307
  %v309 = vrcp.pop %v291
  %v310 = vmul.f32 1.0, %v309
  %v311 = vrcp.pop %v292
  %v312 = vmul.f32 1.0, %v311
  %v313 = vrcp.pop %v293
  %v314 = vmul.f32 1.0, %v313
  %v315 = vrcp.pop %v294
  %v316 = vmul.f32 1.0, %v315
  %v317 = vrcp.pop %v295
  %v318 = vmul.f32 1.0, %v317
  %v319 = vrcp.pop %v296
  %v320 = vmul.f32 1.0, %v319
  %v321 = vrcp.pop %v297
  %v322 = vmul.f32 1.0, %v321
  %v323 = vrcp.pop %v298
  %v324 = vmul.f32 1.0, %v323
  %v325 = vrcp.pop %v299
  %v326 = vmul.f32 1.0, %v325
  %v327 = vrcp.pop %v300
  %v328 = vmul.f32 1.0, %v327
  %v329 = vrcp.pop %v301
  %v330 = vmul.f32 1.0, %v329
  %v331 = vrcp.pop %v302
  %v332 = vmul.f32 1.0, %v331
  %v333 = vrcp.pop %v303
  %v334 = vmul.f32 1.0, %v333
  %v335 = vrcp.pop %v304
  %v336 = vmul.f32 1.0, %v335
  %v337 = vmul.f32 %v306, 1.0614054
  %v338 = vmul.f32 %v308, 1.0614054
  %v339 = vmul.f32 %v310, 1.0614054
  %v340 = vmul.f32 %v312, 1.0614054
  %v341 = vmul.f32 %v314, 1.0614054
  %v342 = vmul.f32 %v316, 1.0614054
  %v343 = vmul.f32 %v318, 1.0614054
  %v344 = vmul.f32 %v320, 1.0614054
  %v345 = vmul.f32 %v322, 1.0614054
  %v346 = vmul.f32 %v324, 1.0614054
  %v347 = vmul.f32 %v326, 1.0614054
  %v348 = vmul.f32 %v328, 1.0614054
  %v349 = vmul.f32 %v330, 1.0614054
  %v350 = vmul.f32 %v332, 1.0614054
  %v351 = vmul.f32 %v334, 1.0614054
  %v352 = vmul.f32 %v336, 1.0614054
  %v353 = vadd.f32 %v337, -1.4531521
  %v354 = vadd.f32 %v338, -1.4531521
  %v355 = vadd.f32 %v339, -1.4531521
  %v356 = vadd.f32 %v340, -1.4531521
  %v357 = vadd.f32 %v341, -1.4531521
  %v358 = vadd.f32 %v342, -1.4531521
  %v359 = vadd.f32 %v343, -1.4531521
  %v360 = vadd.f32 %v344, -1.4531521
  %v361 = vadd.f32 %v345, -1.4531521
  %v362 = vadd.f32 %v346, -1.4531521
  %v363 = vadd.f32 %v347, -1.4531521
  %v364 = vadd.f32 %v348, -1.4531521
  %v365 = vadd.f32 %v349, -1.4531521
  %v366 = vadd.f32 %v350, -1.4531521
  %v367 = vadd.f32 %v351, -1.4531521
  %v368 = vadd.f32 %v352, -1.4531521
  %v369 = vmul.f32 %v353, %v306
  %v370 = vmul.f32 %v354, %v308
  %v371 = vmul.f32 %v355, %v310
  %v372 = vmul.f32 %v356, %v312
  %v373 = vmul.f32 %v357, %v314
  %v374 = vmul.f32 %v358, %v316
  %v375 = vmul.f32 %v359, %v318
  %v376 = vmul.f32 %v360, %v320
  %v377 = vmul.f32 %v361, %v322
  %v378 = vmul.f32 %v362, %v324
  %v379 = vmul.f32 %v363, %v326
  %v380 = vmul.f32 %v364, %v328
  %v381 = vmul.f32 %v365, %v330
  %v382 = vmul.f32 %v366, %v332
  %v383 = vmul.f32 %v367, %v334
  %v384 = vmul.f32 %v368, %v336
  %v385 = vadd.f32 %v369, 1.4214138
  %v386 = vadd.f32 %v370, 1.4214138
  %v387 = vadd.f32 %v371, 1.4214138
  %v388 = vadd.f32 %v372, 1.4214138
  %v389 = vadd.f32 %v373, 1.4214138
  %v390 = vadd.f32 %v374, 1.4214138
  %v391 = vadd.f32 %v375, 1.4214138
  %v392 = vadd.f32 %v376, 1.4214138
  %v393 = vadd.f32 %v377, 1.4214138
  %v394 = vadd.f32 %v378, 1.4214138
  %v395 = vadd.f32 %v379, 1.4214138
  %v396 = vadd.f32 %v380, 1.4214138
  %v397 = vadd.f32 %v381, 1.4214138
  %v398 = vadd.f32 %v382, 1.4214138
  %v399 = vadd.f32 %v383, 1.4214138
  %v400 = vadd.f32 %v384, 1.4214138
  %v401 = vmul.f32 %v385, %v306
  %v402 = vmul.f32 %v386, %v308
  %v403 = vmul.f32 %v387, %v310
  %v404 = vmul.f32 %v388, %v312
  %v405 = vmul.f32 %v389, %v314
  %v406 = vmul.f32 %v390, %v316
  %v407 = vmul.f32 %v391, %v318
  %v408 = vmul.f32 %v392, %v320
  %v409 = vmul.f32 %v393, %v322
  %v410 = vmul.f32 %v394, %v324
  %v411 = vmul.f32 %v395, %v326
  %v412 = vmul.f32 %v396, %v328
  %v413 = vmul.f32 %v397, %v330
  %v414 = vmul.f32 %v398, %v332
  %v415 = vmul.f32 %v399, %v334
  %v416 = vmul.f32 %v400, %v336
  %v417 = vadd.f32 %v401, -0.28449672
  %v418 = vadd.f32 %v402, -0.28449672
  %v419 = vadd.f32 %v403, -0.28449672
  %v420 = vadd.f32 %v404, -0.28449672
  %v421 = vadd.f32 %v405, -0.28449672
  %v422 = vadd.f32 %v406, -0.28449672
  %v423 = vadd.f32 %v407, -0.28449672
  %v424 = vadd.f32 %v408, -0.28449672
  %v425 = vadd.f32 %v409, -0.28449672
  %v426 = vadd.f32 %v410, -0.28449672
  %v427 = vadd.f32 %v411, -0.28449672
  %v428 = vadd.f32 %v412, -0.28449672
  %v429 = vadd.f32 %v413, -0.28449672
  %v430 = vadd.f32 %v414, -0.28449672
  %v431 = vadd.f32 %v415, -0.28449672
  %v432 = vadd.f32 %v416, -0.28449672
  %v433 = vmul.f32 %v417, %v306
  %v434 = vmul.f32 %v418, %v308
  %v435 = vmul.f32 %v419, %v310
  %v436 = vmul.f32 %v420, %v312
  %v437 = vmul.f32 %v421, %v314
  %v438 = vmul.f32 %v422, %v316
  %v439 = vmul.f32 %v423, %v318
  %v440 = vmul.f32 %v424, %v320
  %v441 = vmul.f32 %v425, %v322
  %v442 = vmul.f32 %v426, %v324
  %v443 = vmul.f32 %v427, %v326
  %v444 = vmul.f32 %v428, %v328
  %v445 = vmul.f32 %v429, %v330
  %v446 = vmul.f32 %v430, %v332
  %v447 = vmul.f32 %v431, %v334
  %v448 = vmul.f32 %v432, %v336
  %v449 = vadd.f32 %v433, 0.2548296
  %v450 = vadd.f32 %v434, 0.2548296
  %v451 = vadd.f32 %v435, 0.2548296
  %v452 = vadd.f32 %v436, 0.2548296
  %v453 = vadd.f32 %v437, 0.2548296
  %v454 = vadd.f32 %v438, 0.2548296
  %v455 = vadd.f32 %v439, 0.2548296
  %v456 = vadd.f32 %v440, 0.2548296
  %v457 = vadd.f32 %v441, 0.2548296
  %v458 = vadd.f32 %v442, 0.2548296
  %v459 = vadd.f32 %v443, 0.2548296
  %v460 = vadd.f32 %v444, 0.2548296
  %v461 = vadd.f32 %v445, 0.2548296
  %v462 = vadd.f32 %v446, 0.2548296
  %v463 = vadd.f32 %v447, 0.2548296
  %v464 = vadd.f32 %v448, 0.2548296
  %v465 = vmul.f32 %v449, %v306
  %v466 = vmul.f32 %v450, %v308
  %v467 = vmul.f32 %v451, %v310
  %v468 = vmul.f32 %v452, %v312
  %v469 = vmul.f32 %v453, %v314
  %v470 = vmul.f32 %v454, %v316
  %v471 = vmul.f32 %v455, %v318
  %v472 = vmul.f32 %v456, %v320
  %v473 = vmul.f32 %v457, %v322
  %v474 = vmul.f32 %v458, %v324
  %v475 = vmul.f32 %v459, %v326
  %v476 = vmul.f32 %v460, %v328
  %v477 = vmul.f32 %v461, %v330
  %v478 = vmul.f32 %v462, %v332
  %v479 = vmul.f32 %v463, %v334
  %v480 = vmul.f32 %v464, %v336
  %v481 = vsub.f32 0.0, %v257
  %v482 = vsub.f32 0.0, %v258
  %v483 = vsub.f32 0.0, %v259
  %v484 = vsub.f32 0.0, %v260
  %v485 = vsub.f32 0.0, %v261
  %v486 = vsub.f32 0.0, %v262
  %v487 = vsub.f32 0.0, %v263
  %v488 = vsub.f32 0.0, %v264
  %v489 = vsub.f32 0.0, %v265
  %v490 = vsub.f32 0.0, %v266
  %v491 = vsub.f32 0.0, %v267
  %v492 = vsub.f32 0.0, %v268
  %v493 = vsub.f32 0.0, %v269
  %v494 = vsub.f32 0.0, %v270
  %v495 = vsub.f32 0.0, %v271
  %v496 = vsub.f32 0.0, %v272
  %v497 = vmul.f32 %v481, %v257
  %v498 = vmul.f32 %v482, %v258
  %v499 = vmul.f32 %v483, %v259
  %v500 = vmul.f32 %v484, %v260
  %v501 = vmul.f32 %v485, %v261
  %v502 = vmul.f32 %v486, %v262
  %v503 = vmul.f32 %v487, %v263
  %v504 = vmul.f32 %v488, %v264
  %v505 = vmul.f32 %v489, %v265
  %v506 = vmul.f32 %v490, %v266
  %v507 = vmul.f32 %v491, %v267
  %v508 = vmul.f32 %v492, %v268
  %v509 = vmul.f32 %v493, %v269
  %v510 = vmul.f32 %v494, %v270
  %v511 = vmul.f32 %v495, %v271
  %v512 = vmul.f32 %v496, %v272
  %v513 = vmul.f32 %v497, 1.442695
  %v514 = vpow.pop %v513
  %v515 = vmul.f32 %v498, 1.442695
  %v516 = vpow.pop %v515
  %v517 = vmul.f32 %v499, 1.442695
  %v518 = vpow.pop %v517
  %v519 = vmul.f32 %v500, 1.442695
  %v520 = vpow.pop %v519
  %v521 = vmul.f32 %v501, 1.442695
  %v522 = vpow.pop %v521
  %v523 = vmul.f32 %v502, 1.442695
  %v524 = vpow.pop %v523
  %v525 = vmul.f32 %v503, 1.442695
  %v526 = vpow.pop %v525
  %v527 = vmul.f32 %v504, 1.442695
  %v528 = vpow.pop %v527
  %v529 = vmul.f32 %v505, 1.442695
  %v530 = vpow.pop %v529
  %v531 = vmul.f32 %v506, 1.442695
  %v532 = vpow.pop %v531
  %v533 = vmul.f32 %v507, 1.442695
  %v534 = vpow.pop %v533
  %v535 = vmul.f32 %v508, 1.442695
  %v536 = vpow.pop %v535
  %v537 = vmul.f32 %v509, 1.442695
  %v538 = vpow.pop %v537
  %v539 = vmul.f32 %v510, 1.442695
  %v540 = vpow.pop %v539
  %v541 = vmul.f32 %v511, 1.442695
  %v542 = vpow.pop %v541
  %v543 = vmul.f32 %v512, 1.442695
  %v544 = vpow.pop %v543
  %v545 = vmul.f32 %v465, %v514
  %v546 = vmul.f32 %v466, %v516
  %v547 = vmul.f32 %v467, %v518
  %v548 = vmul.f32 %v468, %v520
  %v549 = vmul.f32 %v469, %v522
  %v550 = vmul.f32 %v470, %v524
  %v551 = vmul.f32 %v471, %v526
  %v552 = vmul.f32 %v472, %v528
  %v553 = vmul.f32 %v473, %v530
  %v554 = vmul.f32 %v474, %v532
  %v555 = vmul.f32 %v475, %v534
  %v556 = vmul.f32 %v476, %v536
  %v557 = vmul.f32 %v477, %v538
  %v558 = vmul.f32 %v478, %v540
  %v559 = vmul.f32 %v479, %v542
  %v560 = vmul.f32 %v480, %v544
  %v561 = vsub.f32 1.0, %v545
  %v562 = vsub.f32 1.0, %v546
  %v563 = vsub.f32 1.0, %v547
  %v564 = vsub.f32 1.0, %v548
  %v565 = vsub.f32 1.0, %v549
  %v566 = vsub.f32 1.0, %v550
  %v567 = vsub.f32 1.0, %v551
  %v568 = vsub.f32 1.0, %v552
  %v569 = vsub.f32 1.0, %v553
  %v570 = vsub.f32 1.0, %v554
  %v571 = vsub.f32 1.0, %v555
  %v572 = vsub.f32 1.0, %v556
  %v573 = vsub.f32 1.0, %v557
  %v574 = vsub.f32 1.0, %v558
  %v575 = vsub.f32 1.0, %v559
  %v576 = vsub.f32 1.0, %v560
  %v577 = vmul.f32 %v241, %v561
  %v578 = vmul.f32 %v242, %v562
  %v579 = vmul.f32 %v243, %v563
  %v580 = vmul.f32 %v244, %v564
  %v581 = vmul.f32 %v245, %v565
  %v582 = vmul.f32 %v246, %v566
  %v583 = vmul.f32 %v247, %v567
  %v584 = vmul.f32 %v248, %v568
  %v585 = vmul.f32 %v249, %v569
  %v586 = vmul.f32 %v250, %v570
  %v587 = vmul.f32 %v251, %v571
  %v588 = vmul.f32 %v252, %v572
  %v589 = vmul.f32 %v253, %v573
  %v590 = vmul.f32 %v254, %v574
  %v591 = vmul.f32 %v255, %v575
  %v592 = vmul.f32 %v256, %v576
  %v593 = vadd.f32 %v577, 1.0
  %v594 = vadd.f32 %v578, 1.0
  %v595 = vadd.f32 %v579, 1.0
  %v596 = vadd.f32 %v580, 1.0
  %v597 = vadd.f32 %v581, 1.0
  %v598 = vadd.f32 %v582, 1.0
  %v599 = vadd.f32 %v583, 1.0
  %v600 = vadd.f32 %v584, 1.0
  %v601 = vadd.f32 %v585, 1.0
  %v602 = vadd.f32 %v586, 1.0
  %v603 = vadd.f32 %v587, 1.0
  %v604 = vadd.f32 %v588, 1.0
  %v605 = vadd.f32 %v589, 1.0
  %v606 = vadd.f32 %v590, 1.0
  %v607 = vadd.f32 %v591, 1.0
  %v608 = vadd.f32 %v592, 1.0
  %v609 = vmul.f32 %v193, %v593
  %v610 = vmul.f32 %v194, %v594
  %v611 = vmul.f32 %v195, %v595
  %v612 = vmul.f32 %v196, %v596
  %v613 = vmul.f32 %v197, %v597
  %v614 = vmul.f32 %v198, %v598
  %v615 = vmul.f32 %v199, %v599
  %v616 = vmul.f32 %v200, %v600
  %v617 = vmul.f32 %v201, %v601
  %v618 = vmul.f32 %v202, %v602
  %v619 = vmul.f32 %v203, %v603
  %v620 = vmul.f32 %v204, %v604
  %v621 = vmul.f32 %v205, %v605
  %v622 = vmul.f32 %v206, %v606
  %v623 = vmul.f32 %v207, %v607
  %v624 = vmul.f32 %v208, %v608
  %v625 = vpack.c.bf16 %v610, %v609
  %v626 = vpack.c.bf16 %v612, %v611
  %v627 = vpack.c.bf16 %v614, %v613
  %v628 = vpack.c.bf16 %v616, %v615
  %v629 = vpack.c.bf16 %v618, %v617
  %v630 = vpack.c.bf16 %v620, %v619
  %v631 = vpack.c.bf16 %v622, %v621
  %v632 = vpack.c.bf16 %v624, %v623
  %v633 = vld [vmem:[%s3] sm:$0xf]
  %v634 = vld [vmem:[%s3 + $0x4] sm:$0xf]
  %v635 = vld [vmem:[%s3 + $0x8] sm:$0xf]
  %v636 = vld [vmem:[%s3 + $0xc] sm:$0xf]
  %v637 = vld [vmem:[%s3 + $0x10] sm:$0xf]
  %v638 = vld [vmem:[%s3 + $0x14] sm:$0xf]
  %v639 = vld [vmem:[%s3 + $0x18] sm:$0xf]
  %v640 = vld [vmem:[%s3 + $0x1c] sm:$0xf]
  %v641 = vld [vmem:[%s3 + $0x20] sm:$0xf]
  %v642 = vld [vmem:[%s3 + $0x24] sm:$0xf]
  %v643 = vld [vmem:[%s3 + $0x28] sm:$0xf]
  %v644 = vld [vmem:[%s3 + $0x2c] sm:$0xf]
  %v645 = vld [vmem:[%s3 + $0x30] sm:$0xf]
  %v646 = vld [vmem:[%s3 + $0x34] sm:$0xf]
  %v647 = vld [vmem:[%s3 + $0x38] sm:$0xf]
  %v648 = vld [vmem:[%s3 + $0x3c] sm:$0xf]
  %v649 = vld [vmem:[%s4] sm:$0x1]
  %v651 = vlaneseq
  %v652 = vshrl.u32 %v651, 7
  %v653 = vsub.s32 0, %v652
  %v654 = vrot.slane %v649, %v653
  %v672 = vunpack.c.l.b16 %v633
  %v673 = vunpack.c.l.b16 %v634
  %v674 = vunpack.c.l.b16 %v635
  %v675 = vunpack.c.l.b16 %v636
  %v676 = vunpack.c.l.b16 %v637
  %v677 = vunpack.c.l.b16 %v638
  %v678 = vunpack.c.l.b16 %v639
  %v679 = vunpack.c.l.b16 %v640
  %v680 = vunpack.c.l.b16 %v641
  %v681 = vunpack.c.l.b16 %v642
  %v682 = vunpack.c.l.b16 %v643
  %v683 = vunpack.c.l.b16 %v644
  %v684 = vunpack.c.l.b16 %v645
  %v685 = vunpack.c.l.b16 %v646
  %v686 = vunpack.c.l.b16 %v647
  %v687 = vunpack.c.l.b16 %v648
  %v688 = vpack.c.b16 %v673, %v672
  %v689 = vpack.c.b16 %v675, %v674
  %v690 = vpack.c.b16 %v677, %v676
  %v691 = vpack.c.b16 %v679, %v678
  %v692 = vpack.c.b16 %v681, %v680
  %v693 = vpack.c.b16 %v683, %v682
  %v694 = vpack.c.b16 %v685, %v684
  %v695 = vpack.c.b16 %v687, %v686
  %704 = vmatprep.subr.bf16.mxu0 0
  %705 = vmatpush1.bf16.msra.mxu0 %v688
  %706 = vmatprep.subr.bf16.mxu0 0
  %707 = vmatpush1.bf16.msra.mxu0 %v689
  %708 = vmatprep.subr.bf16.mxu0 0
  %709 = vmatpush1.bf16.msra.mxu0 %v690
  %710 = vmatprep.subr.bf16.mxu0 0
  %711 = vmatpush1.bf16.msra.mxu0 %v691
  %712 = vmatprep.subr.bf16.mxu0 0
  %713 = vmatpush1.bf16.msra.mxu0 %v692
  %714 = vmatprep.subr.bf16.mxu0 0
  %715 = vmatpush1.bf16.msra.mxu0 %v693
  %716 = vmatprep.subr.bf16.mxu0 0
  %717 = vmatpush1.bf16.msra.mxu0 %v694
  %718 = vmatprep.subr.bf16.mxu0 0
  %719 = vmatpush1.bf16.msra.mxu0 %v695
  %720 = vmatprep.subr.bf16.mxu0 0
  %721 = vmatpush1.bf16.msra.mxu0 0
  %722 = vmatprep.subr.bf16.mxu0 0
  %723 = vmatpush1.bf16.msra.mxu0 0
  %724 = vmatprep.subr.bf16.mxu0 0
  %725 = vmatpush1.bf16.msra.mxu0 0
  %726 = vmatprep.subr.bf16.mxu0 0
  %727 = vmatpush1.bf16.msra.mxu0 0
  %728 = vmatprep.subr.bf16.mxu0 0
  %729 = vmatpush1.bf16.msra.mxu0 0
  %730 = vmatprep.subr.bf16.mxu0 0
  %731 = vmatpush1.bf16.msra.mxu0 0
  %732 = vmatprep.subr.bf16.mxu0 0
  %733 = vmatpush1.bf16.msra.mxu0 0
  %734 = vmatprep.subr.bf16.mxu0 0
  %735 = vmatpush1.bf16.msra.mxu0 0
  %736 = vmatprep.mubr.bf16.mxu0 0
  %737 = vmatmul.mubr.bf16.gmra.mrb[0].mxu0 %v625
  %v738 = vpop.f32.mrb[0].mxu0
  %v739 = vadd.f32 %v654, %v738
  %v740 = vpop.f32.mrb[0].mxu0
  %v741 = vpop.f32.mrb[0].mxu0
  %v742 = vadd.f32 %v654, %v741
  %v743 = vpop.f32.mrb[0].mxu0
  %744 = vmatprep.mubr.bf16.mxu0 0
  %745 = vmatmul.mubr.bf16.gmra.mrb[0].mxu0 %v626
  %v746 = vpop.f32.mrb[0].mxu0
  %v747 = vadd.f32 %v654, %v746
  %v748 = vpop.f32.mrb[0].mxu0
  %v749 = vpop.f32.mrb[0].mxu0
  %v750 = vadd.f32 %v654, %v749
  %v751 = vpop.f32.mrb[0].mxu0
  %752 = vmatprep.mubr.bf16.mxu0 0
  %753 = vmatmul.mubr.bf16.gmra.mrb[0].mxu0 %v627
  %v754 = vpop.f32.mrb[0].mxu0
  %v755 = vadd.f32 %v654, %v754
  %v756 = vpop.f32.mrb[0].mxu0
  %v757 = vpop.f32.mrb[0].mxu0
  %v758 = vadd.f32 %v654, %v757
  %v759 = vpop.f32.mrb[0].mxu0
  %760 = vmatprep.mubr.bf16.mxu0 0
  %761 = vmatmul.mubr.bf16.gmra.mrb[0].mxu0 %v628
  %v762 = vpop.f32.mrb[0].mxu0
  %v763 = vadd.f32 %v654, %v762
  %v764 = vpop.f32.mrb[0].mxu0
  %v765 = vpop.f32.mrb[0].mxu0
  %v766 = vadd.f32 %v654, %v765
  %v767 = vpop.f32.mrb[0].mxu0
  %768 = vmatprep.mubr.bf16.mxu0 0
  %769 = vmatmul.mubr.bf16.gmra.mrb[0].mxu0 %v629
  %v770 = vpop.f32.mrb[0].mxu0
  %v771 = vadd.f32 %v654, %v770
  %v772 = vpop.f32.mrb[0].mxu0
  %v773 = vpop.f32.mrb[0].mxu0
  %v774 = vadd.f32 %v654, %v773
  %v775 = vpop.f32.mrb[0].mxu0
  %776 = vmatprep.mubr.bf16.mxu0 0
  %777 = vmatmul.mubr.bf16.gmra.mrb[0].mxu0 %v630
  %v778 = vpop.f32.mrb[0].mxu0
  %v779 = vadd.f32 %v654, %v778
  %v780 = vpop.f32.mrb[0].mxu0
  %v781 = vpop.f32.mrb[0].mxu0
  %v782 = vadd.f32 %v654, %v781
  %v783 = vpop.f32.mrb[0].mxu0
  %784 = vmatprep.mubr.bf16.mxu0 0
  %785 = vmatmul.mubr.bf16.gmra.mrb[0].mxu0 %v631
  %v786 = vpop.f32.mrb[0].mxu0
  %v787 = vadd.f32 %v654, %v786
  %v788 = vpop.f32.mrb[0].mxu0
  %v789 = vpop.f32.mrb[0].mxu0
  %v790 = vadd.f32 %v654, %v789
  %v791 = vpop.f32.mrb[0].mxu0
  %792 = vmatprep.mubr.bf16.mxu0 0
  %793 = vmatmul.mubr.bf16.gmra.mrb[0].mxu0 %v632
  %v794 = vpop.f32.mrb[0].mxu0
  %v795 = vadd.f32 %v654, %v794
  %v796 = vpop.f32.mrb[0].mxu0
  %v797 = vpop.f32.mrb[0].mxu0
  %v798 = vadd.f32 %v654, %v797
  %v799 = vpop.f32.mrb[0].mxu0
  %800 = vdwg.mxu0
  %v801 = vld [vmem:[%s5] sm:$0xff]
  %v802 = vld [vmem:[%s5 + $0x8] sm:$0xff]
  %v803 = vld [vmem:[%s5 + $0x10] sm:$0xff]
  %v804 = vld [vmem:[%s5 + $0x18] sm:$0xff]
  %v805 = vld [vmem:[%s5 + $0x20] sm:$0xff]
  %v806 = vld [vmem:[%s5 + $0x28] sm:$0xff]
  %v807 = vld [vmem:[%s5 + $0x30] sm:$0xff]
  %v808 = vld [vmem:[%s5 + $0x38] sm:$0xff]
  %v809 = vld [vmem:[%s5 + $0x40] sm:$0xff]
  %v810 = vld [vmem:[%s5 + $0x48] sm:$0xff]
  %v811 = vld [vmem:[%s5 + $0x50] sm:$0xff]
  %v812 = vld [vmem:[%s5 + $0x58] sm:$0xff]
  %v813 = vld [vmem:[%s5 + $0x60] sm:$0xff]
  %v814 = vld [vmem:[%s5 + $0x68] sm:$0xff]
  %v815 = vld [vmem:[%s5 + $0x70] sm:$0xff]
  %v816 = vld [vmem:[%s5 + $0x78] sm:$0xff]
  %v817 = vadd.f32 %v739, %v801
  %v818 = vadd.f32 %v742, %v802
  %v819 = vadd.f32 %v747, %v803
  %v820 = vadd.f32 %v750, %v804
  %v821 = vadd.f32 %v755, %v805
  %v822 = vadd.f32 %v758, %v806
  %v823 = vadd.f32 %v763, %v807
  %v824 = vadd.f32 %v766, %v808
  %v825 = vadd.f32 %v771, %v809
  %v826 = vadd.f32 %v774, %v810
  %v827 = vadd.f32 %v779, %v811
  %v828 = vadd.f32 %v782, %v812
  %v829 = vadd.f32 %v787, %v813
  %v830 = vadd.f32 %v790, %v814
  %v831 = vadd.f32 %v795, %v815
  %v832 = vadd.f32 %v798, %v816
  %833 = vst.msk [vmem:[%s6] sm:$0xff] %vm71, %v817
  %834 = vst.msk [vmem:[%s6 + $0x8] sm:$0xff] %vm71, %v818
  %835 = vst.msk [vmem:[%s6 + $0x10] sm:$0xff] %vm71, %v819
  %836 = vst.msk [vmem:[%s6 + $0x18] sm:$0xff] %vm71, %v820
  %837 = vst.msk [vmem:[%s6 + $0x20] sm:$0xff] %vm71, %v821
  %838 = vst.msk [vmem:[%s6 + $0x28] sm:$0xff] %vm71, %v822
  %839 = vst.msk [vmem:[%s6 + $0x30] sm:$0xff] %vm71, %v823
  %840 = vst.msk [vmem:[%s6 + $0x38] sm:$0xff] %vm71, %v824
  %841 = vst.msk [vmem:[%s6 + $0x40] sm:$0xff] %vm71, %v825
  %842 = vst.msk [vmem:[%s6 + $0x48] sm:$0xff] %vm71, %v826
  %843 = vst.msk [vmem:[%s6 + $0x50] sm:$0xff] %vm71, %v827
  %844 = vst.msk [vmem:[%s6 + $0x58] sm:$0xff] %vm71, %v828
  %845 = vst.msk [vmem:[%s6 + $0x60] sm:$0xff] %vm71, %v829
  %846 = vst.msk [vmem:[%s6 + $0x68] sm:$0xff] %vm71, %v830
  %847 = vst.msk [vmem:[%s6 + $0x70] sm:$0xff] %vm71, %v831
  %848 = vst.msk [vmem:[%s6 + $0x78] sm:$0xff] %vm71, %v832
  // Predicated region
  $region26: #{afnonet_forward.14} parent=0 // pred_check
    _
  $region27: #{afnonet_forward.14} parent=0 // pred_check_branch
    %850 = sbr.rel (0) target = $region29
  $region28: #{afnonet_forward.14} parent=0 // pred_region
    _
  $region29: #{afnonet_forward.14} parent=0 // pred_fallthru
    _
  // Predicated region
  $region30: #{afnonet_forward.14} parent=0 // pred_check
    _
  $region31: #{afnonet_forward.14} parent=0 // pred_check_branch
    %852 = sbr.rel (0) target = $region33
  $region32: #{afnonet_forward.14} parent=0 // pred_region
    _
  $region33: #{afnonet_forward.14} parent=0 // pred_fallthru
    _

</llo_original>
